<compile_context>
chip_gen: v6e
topology: v6e:2x2x1
jax: 0.10.0
libtpu: 0.0.40
codegen_flags: <defaults>
</compile_context>

<pallas_src>
import functools

import jax
import jax.numpy as jnp
from jax.experimental import pallas as pl
from jax.experimental.pallas import tpu as pltpu


def _silu(x):
    return x * jax.nn.sigmoid(x)


@functools.lru_cache(maxsize=None)
def _vmem_limit_bytes():
    """~75% of physical VMEM (v7x: ~48 MiB, v5e/v6e: ~96 MiB); safe fallback."""
    try:
        info = pltpu.get_tpu_info()
        cap = int(getattr(info, "vmem_capacity_bytes", 128 * 1024 * 1024))
    except Exception:
        cap = 64 * 1024 * 1024  # unknown device -> assume the smallest (v7x)
    return max(16 * 1024 * 1024, (cap * 3) // 4)


def _cparams(grid_rank):
    return pltpu.CompilerParams(
        dimension_semantics=("parallel",) * grid_rank,
        vmem_limit_bytes=_vmem_limit_bytes(),
    )


def _round_up(x, m):
    return (x + m - 1) // m * m


def _pick_m_tile(m, target=1024):
    """Row tile for the pointwise kernels; ragged last tile handled by cdiv grid."""
    return min(_round_up(m, 8), _round_up(target, 8))


def _pick_row_tile(h, w, c, budget_bytes):
    """Largest divisor of H whose in-flight bytes fit the VMEM budget.

    Divisor (not ragged) because the 1-row halo logic needs tile boundaries to
    coincide with real image rows.
    """
    per_row = max(1, 48 * w * c)  # bf16 blocks + bf16 im2col values + f32 acc
    max_rows = max(1, min(h, budget_bytes // per_row))
    best = 1
    for t in range(1, max_rows + 1):
        if h % t == 0:
            best = t
    return best


# ---------------- fused stem: conv1 + conv2 (1x1, folded BN, SiLU) ----------------
def stem_kernel(x_ref, w1_ref, w2_ref, b1_ref, b2_ref, o1_ref, o2_ref):
    # x_ref: (tm, Cin) f32 ; w*: (Cin, h) bf16 ; b*: (1, h) f32 ; o*: (tm, h) bf16
    x = x_ref[...].astype(jnp.bfloat16)
    y1 = jnp.dot(x, w1_ref[...], preferred_element_type=jnp.float32)
    y2 = jnp.dot(x, w2_ref[...], preferred_element_type=jnp.float32)
    o1_ref[...] = _silu(y1 + b1_ref[...]).astype(o1_ref.dtype)   # conv1 output (x_1)
    o2_ref[...] = _silu(y2 + b2_ref[...]).astype(o2_ref.dtype)   # conv2 output (x_2)


def fused_stem(x_nhwc, w1, w2, b1, b2):
    N, H, W, Cin = x_nhwc.shape
    hidden = w1.shape[1]
    M = N * H * W
    tm = _pick_m_tile(M)
    x2d = x_nhwc.reshape(M, Cin)
    x1, x2 = pl.pallas_call(
        stem_kernel,
        out_shape=(jax.ShapeDtypeStruct((M, hidden), jnp.bfloat16),
                   jax.ShapeDtypeStruct((M, hidden), jnp.bfloat16)),
        grid=(pl.cdiv(M, tm),),
        in_specs=[
            pl.BlockSpec((tm, Cin), lambda i: (i, 0)),
            pl.BlockSpec((Cin, hidden), lambda i: (0, 0)),
            pl.BlockSpec((Cin, hidden), lambda i: (0, 0)),
            pl.BlockSpec((1, hidden), lambda i: (0, 0)),
            pl.BlockSpec((1, hidden), lambda i: (0, 0)),
        ],
        out_specs=(
            pl.BlockSpec((tm, hidden), lambda i: (i, 0)),
            pl.BlockSpec((tm, hidden), lambda i: (i, 0)),
        ),
        compiler_params=_cparams(1),
    )(x2d, w1, w2, b1, b2)
    return x1.reshape(N, H, W, hidden), x2.reshape(N, H, W, hidden)


# ------- fused Bottleneck: 1x1 conv+SiLU -> 3x3 conv+SiLU -> (+residual) -------
def bottleneck_kernel(x1c_ref, x1t_ref, x1b_ref, wp_ref, bp_ref, w3_ref, b3_ref,
                      o_ref, *, shortcut):
    # x1c_ref: (1, th, W, C) bf16 current row tile
    # x1t_ref / x1b_ref: (1, 1, W, C) bf16 halo rows (clamped at image edges)
    # wp_ref: (C, C) bf16 ; bp_ref: (1, C) f32       (bottleneck 1x1 conv)
    # w3_ref: (9*C, C) bf16 ; b3_ref: (1, C) f32     (bottleneck 3x3 conv, HWIO flat)
    r = pl.program_id(1)
    R = pl.num_programs(1)
    _, th, W, C = x1c_ref.shape

    # --- 1x1 conv + SiLU over tile rows AND the two halo rows in ONE matmul ---
    xin = jnp.concatenate([x1t_ref[0], x1c_ref[0], x1b_ref[0]], axis=0)  # (th+2, W, C)
    y = jnp.dot(xin.reshape((th + 2) * W, C), wp_ref[...],
                preferred_element_type=jnp.float32)
    y = _silu(y + bp_ref[...]).reshape(th + 2, W, C)

    # conv2 zero-pads conv1's OUTPUT, so halo rows outside the image are zeros.
    top = jnp.where(r > 0, y[0:1], 0.0)
    bot = jnp.where(r < R - 1, y[th + 1:th + 2], 0.0)
    rows = jnp.concatenate([top, y[1:th + 1], bot], axis=0).astype(jnp.bfloat16)

    # --- W-axis zero padding + dx shifts, built once in registers ---
    zc = jnp.zeros((th + 2, 1, C), jnp.bfloat16)
    s0 = jnp.concatenate([zc, rows[:, :W - 1, :]], axis=1)     # padded[:, 0:W]
    s2 = jnp.concatenate([rows[:, 1:, :], zc], axis=1)         # padded[:, 2:W+2]
    sc = jnp.concatenate([s0, rows, s2], axis=-1)              # (th+2, W, 3C) (dx, ci)

    # --- 3x3 conv as ONE fat matmul, K = 9*C (im2col order: dy, dx, ci) ---
    patch = jnp.concatenate([sc[0:th], sc[1:th + 1], sc[2:th + 2]], axis=-1)
    acc = jnp.dot(patch.reshape(th * W, 9 * C), w3_ref[...],
                  preferred_element_type=jnp.float32)
    z = _silu(acc + b3_ref[...]).reshape(th, W, C)

    if shortcut:                                   # fused residual (use_add: in==out)
        z = z + x1c_ref[0].astype(jnp.float32)
    o_ref[0] = z.astype(o_ref.dtype)


def fused_bottleneck(x1, wp, bp, w3, b3, shortcut):
    N, H, W, C = x1.shape
    th = _pick_row_tile(H, W, C, _vmem_limit_bytes() // 3)
    R = H // th
    kernel = functools.partial(bottleneck_kernel, shortcut=shortcut)
    return pl.pallas_call(
        kernel,
        out_shape=jax.ShapeDtypeStruct((N, H, W, C), jnp.bfloat16),
        grid=(N, R),
        in_specs=[
            pl.BlockSpec((1, th, W, C), lambda n, r: (n, r, 0, 0)),
            # 1-row halos: block size 1 along H => block index == row index.
            pl.BlockSpec((1, 1, W, C),
                         lambda n, r: (n, jnp.maximum(r * th - 1, 0), 0, 0)),
            pl.BlockSpec((1, 1, W, C),
                         lambda n, r: (n, jnp.minimum((r + 1) * th, H - 1), 0, 0)),
            pl.BlockSpec((C, C), lambda n, r: (0, 0)),
            pl.BlockSpec((1, C), lambda n, r: (0, 0)),
            pl.BlockSpec((9 * C, C), lambda n, r: (0, 0)),
            pl.BlockSpec((1, C), lambda n, r: (0, 0)),
        ],
        out_specs=pl.BlockSpec((1, th, W, C), lambda n, r: (n, r, 0, 0)),
        compiler_params=_cparams(2),
    )(x1, x1, x1, wp, bp, w3, b3)


# ------- fused head: concat(x_1, x_2) + conv3 as a single K=2h matmul -------
def head_kernel(x1_ref, x2_ref, w_ref, b_ref, o_ref):
    xin = jnp.concatenate([x1_ref[...], x2_ref[...]], axis=-1)   # (tm, 2h) bf16
    y = jnp.dot(xin, w_ref[...], preferred_element_type=jnp.float32)
    o_ref[...] = _silu(y + b_ref[...]).astype(o_ref.dtype)


def fused_head(x1, x2, w, b, out_dtype):
    N, H, W, h = x1.shape
    Cout = w.shape[1]
    M = N * H * W
    tm = _pick_m_tile(M)
    out = pl.pallas_call(
        head_kernel,
        out_shape=jax.ShapeDtypeStruct((M, Cout), out_dtype),
        grid=(pl.cdiv(M, tm),),
        in_specs=[
            pl.BlockSpec((tm, h), lambda i: (i, 0)),
            pl.BlockSpec((tm, h), lambda i: (i, 0)),
            pl.BlockSpec((2 * h, Cout), lambda i: (0, 0)),
            pl.BlockSpec((1, Cout), lambda i: (0, 0)),
        ],
        out_specs=pl.BlockSpec((tm, Cout), lambda i: (i, 0)),
        compiler_params=_cparams(1),
    )(x1.reshape(M, h), x2.reshape(M, h), w, b)
    return out.reshape(N, H, W, Cout)


# ---------------- parameter construction (deterministic, BN folded) ----------------
def init_baseconv(key, cin, cout, ksize, eps=1e-5):
    k1, k2, k3, k4, k5 = jax.random.split(key, 5)
    w = jax.random.normal(k1, (ksize, ksize, cin, cout), jnp.float32) * 0.1
    gamma = 1.0 + 0.1 * jax.random.normal(k2, (cout,), jnp.float32)
    beta = 0.1 * jax.random.normal(k3, (cout,), jnp.float32)
    run_mean = 0.1 * jax.random.normal(k4, (cout,), jnp.float32)
    run_var = jnp.abs(jax.random.normal(k5, (cout,), jnp.float32)) + 1.0
    scale = gamma / jnp.sqrt(run_var + eps)          # per-output-channel
    w_fold = (w * scale).astype(jnp.bfloat16)        # bf16 MXU operand
    b_fold = beta - run_mean * scale                 # conv has bias=False; f32
    # (ky, kx, ci, co) row-major -> (ky*k + kx)*ci + ci flat K ordering.
    w_fold = w_fold.reshape(ksize * ksize * cin, cout)
    return w_fold, b_fold


def init_csp_params(key, in_channels, out_channels, n=1, expansion=0.5):
    hidden = int(out_channels * expansion)
    keys = jax.random.split(key, 3 + 2 * n)
    w1, b1 = init_baseconv(keys[0], in_channels, hidden, 1)
    w2, b2 = init_baseconv(keys[1], in_channels, hidden, 1)
    w3, b3 = init_baseconv(keys[2], 2 * hidden, out_channels, 1)
    params = {
        "stem_w1": w1, "stem_b1": b1.reshape(1, hidden),
        "stem_w2": w2, "stem_b2": b2.reshape(1, hidden),
        "head_w": w3,                                   # (2h, Cout) bf16, full K=2h
        "head_b": b3.reshape(1, out_channels),          # f32
        "m": [],
    }
    for i in range(n):
        # Bottleneck(hidden, hidden, expansion=1.0): 1x1 then 3x3
        wp, bp = init_baseconv(keys[3 + 2 * i], hidden, hidden, 1)
        w33, b33 = init_baseconv(keys[4 + 2 * i], hidden, hidden, 3)
        params["m"].append({"wp": wp, "bp": bp.reshape(1, hidden),
                            "w3": w33, "b3": b33.reshape(1, hidden)})
    return params


# ---------------- CSPLayer forward ----------------
def csp_layer_forward(x_nchw, params, shortcut=True):
    x = jnp.transpose(x_nchw, (0, 2, 3, 1))               # NCHW -> NHWC
    x_1, x_2 = fused_stem(x, params["stem_w1"], params["stem_w2"],
                          params["stem_b1"], params["stem_b2"])
    for blk in params["m"]:                                # self.m (Bottlenecks)
        x_1 = fused_bottleneck(x_1, blk["wp"], blk["bp"],
                               blk["w3"], blk["b3"], shortcut)
    out = fused_head(x_1, x_2, params["head_w"], params["head_b"],
                     out_dtype=x_nchw.dtype)
    return jnp.transpose(out, (0, 3, 1, 2))                # back to NCHW


if __name__ == "__main__":
    key = jax.random.PRNGKey(0)
    k_x, k_p = jax.random.split(key)

    # CSPLayer(in_channels=4, out_channels=8, n=1, shortcut=True, expansion=0.5)
    N, Cin, H, W = 2, 4, 16, 16
    Cout = 8
    x = jax.random.normal(k_x, (N, Cin, H, W), jnp.float32)
    params = init_csp_params(k_p, Cin, Cout, n=1, expansion=0.5)

    fwd = jax.jit(lambda xx, pp: csp_layer_forward(xx, pp, shortcut=True))
    out = jax.block_until_ready(fwd(x, params))

    assert out.shape == (N, Cout, H, W), out.shape
    assert bool(jnp.all(jnp.isfinite(out)))
    print("KERNEL_OK")
</pallas_src>

<mosaic_0001>
module attributes {stable_mosaic.version = 11 : i64} {
  func.func @stem_kernel(%arg0: i32, %arg1: memref<512x4xf32, #tpu.memory_space<vmem>>, %arg2: memref<4x4xbf16, #tpu.memory_space<vmem>>, %arg3: memref<4x4xbf16, #tpu.memory_space<vmem>>, %arg4: memref<1x4xf32, #tpu.memory_space<vmem>>, %arg5: memref<1x4xf32, #tpu.memory_space<vmem>>, %arg6: memref<512x4xbf16, #tpu.memory_space<vmem>>, %arg7: memref<512x4xbf16, #tpu.memory_space<vmem>>) attributes {dimension_semantics = [#tpu.dimension_semantics<parallel>], iteration_bounds = array<i64: 1>, scalar_prefetch = 0 : i64, scratch_operands = 0 : i64, tpu.core_type = #tpu.core_type<tc>, window_params = [{transform_indices = @transform_0, window_bounds = array<i64: 512, 4>}, {pipeline_mode = #tpu.pipeline_mode<synchronous>, transform_indices = @transform_1, window_bounds = array<i64: 4, 4>}, {pipeline_mode = #tpu.pipeline_mode<synchronous>, transform_indices = @transform_2, window_bounds = array<i64: 4, 4>}, {pipeline_mode = #tpu.pipeline_mode<synchronous>, transform_indices = @transform_3, window_bounds = array<i64: 1, 4>}, {pipeline_mode = #tpu.pipeline_mode<synchronous>, transform_indices = @transform_4, window_bounds = array<i64: 1, 4>}, {transform_indices = @transform_5, window_bounds = array<i64: 512, 4>}, {transform_indices = @transform_6, window_bounds = array<i64: 512, 4>}]} {
    %c0 = arith.constant 0 : index
    %c0_0 = arith.constant 0 : index
    %0 = vector.load %arg1[%c0, %c0_0] : memref<512x4xf32, #tpu.memory_space<vmem>>, vector<512x4xf32>
    %1 = arith.truncf %0 : vector<512x4xf32> to vector<512x4xbf16>
    %c0_1 = arith.constant 0 : index
    %c0_2 = arith.constant 0 : index
    %2 = vector.load %arg2[%c0_1, %c0_2] : memref<4x4xbf16, #tpu.memory_space<vmem>>, vector<4x4xbf16>
    %cst = arith.constant dense<0.000000e+00> : vector<512x4xf32>
    %3 = tpu.matmul %1, %2, %cst {dimension_numbers = #tpu.dot_dimension_numbers<[1], [0], [0], [1], [0, 0, 1, 1], [], []>} : vector<512x4xbf16>, vector<4x4xbf16>, vector<512x4xf32> -> vector<512x4xf32>
    %c0_3 = arith.constant 0 : index
    %c0_4 = arith.constant 0 : index
    %4 = vector.load %arg3[%c0_3, %c0_4] : memref<4x4xbf16, #tpu.memory_space<vmem>>, vector<4x4xbf16>
    %cst_5 = arith.constant dense<0.000000e+00> : vector<512x4xf32>
    %5 = tpu.matmul %1, %4, %cst_5 {dimension_numbers = #tpu.dot_dimension_numbers<[1], [0], [0], [1], [0, 0, 1, 1], [], []>} : vector<512x4xbf16>, vector<4x4xbf16>, vector<512x4xf32> -> vector<512x4xf32>
    %c0_6 = arith.constant 0 : index
    %c0_7 = arith.constant 0 : index
    %6 = vector.load %arg4[%c0_6, %c0_7] : memref<1x4xf32, #tpu.memory_space<vmem>>, vector<1x4xf32>
    %7 = vector.broadcast %6 : vector<1x4xf32> to vector<512x4xf32>
    %8 = arith.addf %3, %7 : vector<512x4xf32>
    %9 = arith.negf %8 : vector<512x4xf32>
    %10 = math.exp %9 : vector<512x4xf32>
    %cst_8 = arith.constant 1.000000e+00 : f32
    %11 = vector.broadcast %cst_8 : f32 to vector<512x4xf32>
    %12 = arith.addf %11, %10 : vector<512x4xf32>
    %13 = arith.divf %11, %12 : vector<512x4xf32>
    %14 = arith.mulf %8, %13 : vector<512x4xf32>
    %15 = arith.truncf %14 : vector<512x4xf32> to vector<512x4xbf16>
    %c0_9 = arith.constant 0 : index
    %c0_10 = arith.constant 0 : index
    %16 = vector.load %arg6[%c0_9, %c0_10] : memref<512x4xbf16, #tpu.memory_space<vmem>>, vector<512x4xbf16>
    tpu.vector_store %arg6[%c0_9, %c0_10], %15 {strides = array<i32>} : memref<512x4xbf16, #tpu.memory_space<vmem>>, vector<512x4xbf16>,
    %c0_11 = arith.constant 0 : index
    %c0_12 = arith.constant 0 : index
    %17 = vector.load %arg5[%c0_11, %c0_12] : memref<1x4xf32, #tpu.memory_space<vmem>>, vector<1x4xf32>
    %18 = vector.broadcast %17 : vector<1x4xf32> to vector<512x4xf32>
    %19 = arith.addf %5, %18 : vector<512x4xf32>
    %20 = arith.negf %19 : vector<512x4xf32>
    %21 = math.exp %20 : vector<512x4xf32>
    %cst_13 = arith.constant 1.000000e+00 : f32
    %22 = vector.broadcast %cst_13 : f32 to vector<512x4xf32>
    %23 = arith.addf %22, %21 : vector<512x4xf32>
    %24 = arith.divf %22, %23 : vector<512x4xf32>
    %25 = arith.mulf %19, %24 : vector<512x4xf32>
    %26 = arith.truncf %25 : vector<512x4xf32> to vector<512x4xbf16>
    %c0_14 = arith.constant 0 : index
    %c0_15 = arith.constant 0 : index
    %27 = vector.load %arg7[%c0_14, %c0_15] : memref<512x4xbf16, #tpu.memory_space<vmem>>, vector<512x4xbf16>
    tpu.vector_store %arg7[%c0_14, %c0_15], %26 {strides = array<i32>} : memref<512x4xbf16, #tpu.memory_space<vmem>>, vector<512x4xbf16>,
    return
  }
  func.func @transform_0(%arg0: i32) -> (i32, i32) {
    %c0_i32 = arith.constant 0 : i32
    %c0_i32_0 = arith.constant 0 : i32
    return %arg0, %c0_i32 : i32, i32
  }
  func.func @transform_1(%arg0: i32) -> (i32, i32) {
    %c0_i32 = arith.constant 0 : i32
    %c0_i32_0 = arith.constant 0 : i32
    %c0_i32_1 = arith.constant 0 : i32
    return %c0_i32, %c0_i32_0 : i32, i32
  }
  func.func @transform_2(%arg0: i32) -> (i32, i32) {
    %c0_i32 = arith.constant 0 : i32
    %c0_i32_0 = arith.constant 0 : i32
    %c0_i32_1 = arith.constant 0 : i32
    return %c0_i32, %c0_i32_0 : i32, i32
  }
  func.func @transform_3(%arg0: i32) -> (i32, i32) {
    %c0_i32 = arith.constant 0 : i32
    %c0_i32_0 = arith.constant 0 : i32
    %c0_i32_1 = arith.constant 0 : i32
    return %c0_i32, %c0_i32_0 : i32, i32
  }
  func.func @transform_4(%arg0: i32) -> (i32, i32) {
    %c0_i32 = arith.constant 0 : i32
    %c0_i32_0 = arith.constant 0 : i32
    %c0_i32_1 = arith.constant 0 : i32
    return %c0_i32, %c0_i32_0 : i32, i32
  }
  func.func @transform_5(%arg0: i32) -> (i32, i32) {
    %c0_i32 = arith.constant 0 : i32
    %c0_i32_0 = arith.constant 0 : i32
    return %arg0, %c0_i32 : i32, i32
  }
  func.func @transform_6(%arg0: i32) -> (i32, i32) {
    %c0_i32 = arith.constant 0 : i32
    %c0_i32_0 = arith.constant 0 : i32
    return %arg0, %c0_i32 : i32, i32
  }
}

module attributes {stable_mosaic.version = 11 : i64} {
  func.func @bottleneck_kernel(%arg0: i32, %arg1: i32, %arg2: memref<1x16x16x4xbf16, #tpu.memory_space<vmem>>, %arg3: memref<1x1x16x4xbf16, #tpu.memory_space<vmem>>, %arg4: memref<1x1x16x4xbf16, #tpu.memory_space<vmem>>, %arg5: memref<4x4xbf16, #tpu.memory_space<vmem>>, %arg6: memref<1x4xf32, #tpu.memory_space<vmem>>, %arg7: memref<36x4xbf16, #tpu.memory_space<vmem>>, %arg8: memref<1x4xf32, #tpu.memory_space<vmem>>, %arg9: memref<1x16x16x4xbf16, #tpu.memory_space<vmem>>) attributes {dimension_semantics = [#tpu.dimension_semantics<parallel>, #tpu.dimension_semantics<parallel>], iteration_bounds = array<i64: 2, 1>, scalar_prefetch = 0 : i64, scratch_operands = 0 : i64, tpu.core_type = #tpu.core_type<tc>, window_params = [{transform_indices = @transform_0, window_bounds = array<i64: 1, 16, 16, 4>}, {transform_indices = @transform_1, window_bounds = array<i64: 1, 1, 16, 4>}, {transform_indices = @transform_2, window_bounds = array<i64: 1, 1, 16, 4>}, {pipeline_mode = #tpu.pipeline_mode<synchronous>, transform_indices = @transform_3, window_bounds = array<i64: 4, 4>}, {pipeline_mode = #tpu.pipeline_mode<synchronous>, transform_indices = @transform_4, window_bounds = array<i64: 1, 4>}, {pipeline_mode = #tpu.pipeline_mode<synchronous>, transform_indices = @transform_5, window_bounds = array<i64: 36, 4>}, {pipeline_mode = #tpu.pipeline_mode<synchronous>, transform_indices = @transform_6, window_bounds = array<i64: 1, 4>}, {transform_indices = @transform_7, window_bounds = array<i64: 1, 16, 16, 4>}]} {
    %c0 = arith.constant 0 : index
    %c0_0 = arith.constant 0 : index
    %c0_1 = arith.constant 0 : index
    %c0_2 = arith.constant 0 : index
    %0 = vector.load %arg3[%c0, %c0_0, %c0_1, %c0_2] : memref<1x1x16x4xbf16, #tpu.memory_space<vmem>>, vector<1x1x16x4xbf16>
    %1 = vector.shape_cast %0 : vector<1x1x16x4xbf16> to vector<1x16x4xbf16>
    %c0_3 = arith.constant 0 : index
    %c0_4 = arith.constant 0 : index
    %c0_5 = arith.constant 0 : index
    %c0_6 = arith.constant 0 : index
    %2 = vector.load %arg2[%c0_3, %c0_4, %c0_5, %c0_6] : memref<1x16x16x4xbf16, #tpu.memory_space<vmem>>, vector<1x16x16x4xbf16>
    %3 = vector.shape_cast %2 : vector<1x16x16x4xbf16> to vector<16x16x4xbf16>
    %c0_7 = arith.constant 0 : index
    %c0_8 = arith.constant 0 : index
    %c0_9 = arith.constant 0 : index
    %c0_10 = arith.constant 0 : index
    %4 = vector.load %arg4[%c0_7, %c0_8, %c0_9, %c0_10] : memref<1x1x16x4xbf16, #tpu.memory_space<vmem>>, vector<1x1x16x4xbf16>
    %5 = vector.shape_cast %4 : vector<1x1x16x4xbf16> to vector<1x16x4xbf16>
    %6 = tpu.concatenate %1, %3, %5 in 0 : vector<1x16x4xbf16>, vector<16x16x4xbf16>, vector<1x16x4xbf16> -> vector<18x16x4xbf16>
    %7 = vector.shape_cast %6 : vector<18x16x4xbf16> to vector<288x4xbf16>
    %c0_11 = arith.constant 0 : index
    %c0_12 = arith.constant 0 : index
    %8 = vector.load %arg5[%c0_11, %c0_12] : memref<4x4xbf16, #tpu.memory_space<vmem>>, vector<4x4xbf16>
    %cst = arith.constant dense<0.000000e+00> : vector<288x4xf32>
    %9 = tpu.matmul %7, %8, %cst {dimension_numbers = #tpu.dot_dimension_numbers<[1], [0], [0], [1], [0, 0, 1, 1], [], []>} : vector<288x4xbf16>, vector<4x4xbf16>, vector<288x4xf32> -> vector<288x4xf32>
    %c0_13 = arith.constant 0 : index
    %c0_14 = arith.constant 0 : index
    %10 = vector.load %arg6[%c0_13, %c0_14] : memref<1x4xf32, #tpu.memory_space<vmem>>, vector<1x4xf32>
    %11 = vector.broadcast %10 : vector<1x4xf32> to vector<288x4xf32>
    %12 = arith.addf %9, %11 : vector<288x4xf32>
    %13 = arith.negf %12 : vector<288x4xf32>
    %14 = math.exp %13 : vector<288x4xf32>
    %cst_15 = arith.constant 1.000000e+00 : f32
    %15 = vector.broadcast %cst_15 : f32 to vector<288x4xf32>
    %16 = arith.addf %15, %14 : vector<288x4xf32>
    %17 = arith.divf %15, %16 : vector<288x4xf32>
    %18 = arith.mulf %12, %17 : vector<288x4xf32>
    %19 = vector.shape_cast %18 : vector<288x4xf32> to vector<18x16x4xf32>
    %c0_i32 = arith.constant 0 : i32
    %20 = arith.cmpi sgt, %arg1, %c0_i32 : i32
    %21 = vector.extract_strided_slice %19 {offsets = [0, 0, 0], sizes = [1, 16, 4], strides = [1, 1, 1]} : vector<18x16x4xf32> to vector<1x16x4xf32>
    %cst_16 = arith.constant 0.000000e+00 : f32
    %22 = vector.broadcast %cst_16 : f32 to vector<1x16x4xf32>
    %23 = arith.select %20, %21, %22 : vector<1x16x4xf32>
    %c0_i32_17 = arith.constant 0 : i32
    %24 = arith.cmpi slt, %arg1, %c0_i32_17 : i32
    %25 = vector.extract_strided_slice %19 {offsets = [17, 0, 0], sizes = [1, 16, 4], strides = [1, 1, 1]} : vector<18x16x4xf32> to vector<1x16x4xf32>
    %cst_18 = arith.constant 0.000000e+00 : f32
    %26 = vector.broadcast %cst_18 : f32 to vector<1x16x4xf32>
    %27 = arith.select %24, %25, %26 : vector<1x16x4xf32>
    %28 = vector.extract_strided_slice %19 {offsets = [1, 0, 0], sizes = [16, 16, 4], strides = [1, 1, 1]} : vector<18x16x4xf32> to vector<16x16x4xf32>
    %29 = tpu.concatenate %23, %28, %27 in 0 : vector<1x16x4xf32>, vector<16x16x4xf32>, vector<1x16x4xf32> -> vector<18x16x4xf32>
    %30 = arith.truncf %29 : vector<18x16x4xf32> to vector<18x16x4xbf16>
    %cst_19 = arith.constant 0.000000e+00 : bf16
    %31 = vector.broadcast %cst_19 : bf16 to vector<18x1x4xbf16>
    %32 = vector.extract_strided_slice %30 {offsets = [0, 0, 0], sizes = [18, 15, 4], strides = [1, 1, 1]} : vector<18x16x4xbf16> to vector<18x15x4xbf16>
    %33 = tpu.concatenate %31, %32 in 1 : vector<18x1x4xbf16>, vector<18x15x4xbf16> -> vector<18x16x4xbf16>
    %34 = vector.extract_strided_slice %30 {offsets = [0, 1, 0], sizes = [18, 15, 4], strides = [1, 1, 1]} : vector<18x16x4xbf16> to vector<18x15x4xbf16>
    %35 = tpu.concatenate %34, %31 in 1 : vector<18x15x4xbf16>, vector<18x1x4xbf16> -> vector<18x16x4xbf16>
    %36 = tpu.concatenate %33, %30, %35 in 2 : vector<18x16x4xbf16>, vector<18x16x4xbf16>, vector<18x16x4xbf16> -> vector<18x16x12xbf16>
    %37 = vector.extract_strided_slice %36 {offsets = [0, 0, 0], sizes = [16, 16, 12], strides = [1, 1, 1]} : vector<18x16x12xbf16> to vector<16x16x12xbf16>
    %38 = vector.extract_strided_slice %36 {offsets = [1, 0, 0], sizes = [16, 16, 12], strides = [1, 1, 1]} : vector<18x16x12xbf16> to vector<16x16x12xbf16>
    %39 = vector.extract_strided_slice %36 {offsets = [2, 0, 0], sizes = [16, 16, 12], strides = [1, 1, 1]} : vector<18x16x12xbf16> to vector<16x16x12xbf16>
    %40 = tpu.concatenate %37, %38, %39 in 2 : vector<16x16x12xbf16>, vector<16x16x12xbf16>, vector<16x16x12xbf16> -> vector<16x16x36xbf16>
    %41 = vector.shape_cast %40 : vector<16x16x36xbf16> to vector<256x36xbf16>
    %c0_20 = arith.constant 0 : index
    %c0_21 = arith.constant 0 : index
    %42 = vector.load %arg7[%c0_20, %c0_21] : memref<36x4xbf16, #tpu.memory_space<vmem>>, vector<36x4xbf16>
    %cst_22 = arith.constant dense<0.000000e+00> : vector<256x4xf32>
    %43 = tpu.matmul %41, %42, %cst_22 {dimension_numbers = #tpu.dot_dimension_numbers<[1], [0], [0], [1], [0, 0, 1, 1], [], []>} : vector<256x36xbf16>, vector<36x4xbf16>, vector<256x4xf32> -> vector<256x4xf32>
    %c0_23 = arith.constant 0 : index
    %c0_24 = arith.constant 0 : index
    %44 = vector.load %arg8[%c0_23, %c0_24] : memref<1x4xf32, #tpu.memory_space<vmem>>, vector<1x4xf32>
    %45 = vector.broadcast %44 : vector<1x4xf32> to vector<256x4xf32>
    %46 = arith.addf %43, %45 : vector<256x4xf32>
    %47 = arith.negf %46 : vector<256x4xf32>
    %48 = math.exp %47 : vector<256x4xf32>
    %cst_25 = arith.constant 1.000000e+00 : f32
    %49 = vector.broadcast %cst_25 : f32 to vector<256x4xf32>
    %50 = arith.addf %49, %48 : vector<256x4xf32>
    %51 = arith.divf %49, %50 : vector<256x4xf32>
    %52 = arith.mulf %46, %51 : vector<256x4xf32>
    %53 = vector.shape_cast %52 : vector<256x4xf32> to vector<16x16x4xf32>
    %c0_26 = arith.constant 0 : index
    %c0_27 = arith.constant 0 : index
    %c0_28 = arith.constant 0 : index
    %c0_29 = arith.constant 0 : index
    %54 = vector.load %arg2[%c0_26, %c0_27, %c0_28, %c0_29] : memref<1x16x16x4xbf16, #tpu.memory_space<vmem>>, vector<1x16x16x4xbf16>
    %55 = vector.shape_cast %54 : vector<1x16x16x4xbf16> to vector<16x16x4xbf16>
    %56 = arith.extf %55 : vector<16x16x4xbf16> to vector<16x16x4xf32>
    %57 = arith.addf %53, %56 : vector<16x16x4xf32>
    %58 = arith.truncf %57 : vector<16x16x4xf32> to vector<16x16x4xbf16>
    %c0_30 = arith.constant 0 : index
    %c0_31 = arith.constant 0 : index
    %c0_32 = arith.constant 0 : index
    %c0_33 = arith.constant 0 : index
    %59 = vector.load %arg9[%c0_30, %c0_31, %c0_32, %c0_33] : memref<1x16x16x4xbf16, #tpu.memory_space<vmem>>, vector<1x16x16x4xbf16>
    %60 = vector.shape_cast %59 : vector<1x16x16x4xbf16> to vector<16x16x4xbf16>
    %61 = vector.shape_cast %58 : vector<16x16x4xbf16> to vector<1x16x16x4xbf16>
    tpu.vector_store %arg9[%c0_30, %c0_31, %c0_32, %c0_33], %61 {strides = array<i32>} : memref<1x16x16x4xbf16, #tpu.memory_space<vmem>>, vector<1x16x16x4xbf16>,
    return
  }
  func.func @transform_0(%arg0: i32, %arg1: i32) -> (i32, i32, i32, i32) {
    %c0_i32 = arith.constant 0 : i32
    %c0_i32_0 = arith.constant 0 : i32
    %c0_i32_1 = arith.constant 0 : i32
    return %arg0, %arg1, %c0_i32, %c0_i32_0 : i32, i32, i32, i32
  }
  func.func @transform_1(%arg0: i32, %arg1: i32) -> (i32, i32, i32, i32) {
    %c16_i32 = arith.constant 16 : i32
    %0 = arith.muli %arg1, %c16_i32 : i32
    %c1_i32 = arith.constant 1 : i32
    %1 = arith.subi %0, %c1_i32 : i32
    %c0_i32 = arith.constant 0 : i32
    %2 = arith.maxsi %1, %c0_i32 : i32
    %c0_i32_0 = arith.constant 0 : i32
    %c0_i32_1 = arith.constant 0 : i32
    %c0_i32_2 = arith.constant 0 : i32
    return %arg0, %2, %c0_i32_0, %c0_i32_1 : i32, i32, i32, i32
  }
  func.func @transform_2(%arg0: i32, %arg1: i32) -> (i32, i32, i32, i32) {
    %c1_i32 = arith.constant 1 : i32
    %0 = arith.addi %arg1, %c1_i32 : i32
    %c16_i32 = arith.constant 16 : i32
    %1 = arith.muli %0, %c16_i32 : i32
    %c15_i32 = arith.constant 15 : i32
    %2 = arith.minsi %1, %c15_i32 : i32
    %c0_i32 = arith.constant 0 : i32
    %c0_i32_0 = arith.constant 0 : i32
    %c0_i32_1 = arith.constant 0 : i32
    return %arg0, %2, %c0_i32, %c0_i32_0 : i32, i32, i32, i32
  }
  func.func @transform_3(%arg0: i32, %arg1: i32) -> (i32, i32) {
    %c0_i32 = arith.constant 0 : i32
    %c0_i32_0 = arith.constant 0 : i32
    %c0_i32_1 = arith.constant 0 : i32
    return %c0_i32, %c0_i32_0 : i32, i32
  }
  func.func @transform_4(%arg0: i32, %arg1: i32) -> (i32, i32) {
    %c0_i32 = arith.constant 0 : i32
    %c0_i32_0 = arith.constant 0 : i32
    %c0_i32_1 = arith.constant 0 : i32
    return %c0_i32, %c0_i32_0 : i32, i32
  }
  func.func @transform_5(%arg0: i32, %arg1: i32) -> (i32, i32) {
    %c0_i32 = arith.constant 0 : i32
    %c0_i32_0 = arith.constant 0 : i32
    %c0_i32_1 = arith.constant 0 : i32
    return %c0_i32, %c0_i32_0 : i32, i32
  }
  func.func @transform_6(%arg0: i32, %arg1: i32) -> (i32, i32) {
    %c0_i32 = arith.constant 0 : i32
    %c0_i32_0 = arith.constant 0 : i32
    %c0_i32_1 = arith.constant 0 : i32
    return %c0_i32, %c0_i32_0 : i32, i32
  }
  func.func @transform_7(%arg0: i32, %arg1: i32) -> (i32, i32, i32, i32) {
    %c0_i32 = arith.constant 0 : i32
    %c0_i32_0 = arith.constant 0 : i32
    %c0_i32_1 = arith.constant 0 : i32
    return %arg0, %arg1, %c0_i32, %c0_i32_0 : i32, i32, i32, i32
  }
}

module attributes {stable_mosaic.version = 11 : i64} {
  func.func @head_kernel(%arg0: i32, %arg1: memref<512x4xbf16, #tpu.memory_space<vmem>>, %arg2: memref<512x4xbf16, #tpu.memory_space<vmem>>, %arg3: memref<8x8xbf16, #tpu.memory_space<vmem>>, %arg4: memref<1x8xf32, #tpu.memory_space<vmem>>, %arg5: memref<512x8xf32, #tpu.memory_space<vmem>>) attributes {dimension_semantics = [#tpu.dimension_semantics<parallel>], iteration_bounds = array<i64: 1>, scalar_prefetch = 0 : i64, scratch_operands = 0 : i64, tpu.core_type = #tpu.core_type<tc>, window_params = [{transform_indices = @transform_0, window_bounds = array<i64: 512, 4>}, {transform_indices = @transform_1, window_bounds = array<i64: 512, 4>}, {pipeline_mode = #tpu.pipeline_mode<synchronous>, transform_indices = @transform_2, window_bounds = array<i64: 8, 8>}, {pipeline_mode = #tpu.pipeline_mode<synchronous>, transform_indices = @transform_3, window_bounds = array<i64: 1, 8>}, {transform_indices = @transform_4, window_bounds = array<i64: 512, 8>}]} {
    %c0 = arith.constant 0 : index
    %c0_0 = arith.constant 0 : index
    %0 = vector.load %arg1[%c0, %c0_0] : memref<512x4xbf16, #tpu.memory_space<vmem>>, vector<512x4xbf16>
    %c0_1 = arith.constant 0 : index
    %c0_2 = arith.constant 0 : index
    %1 = vector.load %arg2[%c0_1, %c0_2] : memref<512x4xbf16, #tpu.memory_space<vmem>>, vector<512x4xbf16>
    %2 = tpu.concatenate %0, %1 in 1 : vector<512x4xbf16>, vector<512x4xbf16> -> vector<512x8xbf16>
    %c0_3 = arith.constant 0 : index
    %c0_4 = arith.constant 0 : index
    %3 = vector.load %arg3[%c0_3, %c0_4] : memref<8x8xbf16, #tpu.memory_space<vmem>>, vector<8x8xbf16>
    %cst = arith.constant dense<0.000000e+00> : vector<512x8xf32>
    %4 = tpu.matmul %2, %3, %cst {dimension_numbers = #tpu.dot_dimension_numbers<[1], [0], [0], [1], [0, 0, 1, 1], [], []>} : vector<512x8xbf16>, vector<8x8xbf16>, vector<512x8xf32> -> vector<512x8xf32>
    %c0_5 = arith.constant 0 : index
    %c0_6 = arith.constant 0 : index
    %5 = vector.load %arg4[%c0_5, %c0_6] : memref<1x8xf32, #tpu.memory_space<vmem>>, vector<1x8xf32>
    %6 = vector.broadcast %5 : vector<1x8xf32> to vector<512x8xf32>
    %7 = arith.addf %4, %6 : vector<512x8xf32>
    %8 = arith.negf %7 : vector<512x8xf32>
    %9 = math.exp %8 : vector<512x8xf32>
    %cst_7 = arith.constant 1.000000e+00 : f32
    %10 = vector.broadcast %cst_7 : f32 to vector<512x8xf32>
    %11 = arith.addf %10, %9 : vector<512x8xf32>
    %12 = arith.divf %10, %11 : vector<512x8xf32>
    %13 = arith.mulf %7, %12 : vector<512x8xf32>
    %c0_8 = arith.constant 0 : index
    %c0_9 = arith.constant 0 : index
    %14 = vector.load %arg5[%c0_8, %c0_9] : memref<512x8xf32, #tpu.memory_space<vmem>>, vector<512x8xf32>
    tpu.vector_store %arg5[%c0_8, %c0_9], %13 {strides = array<i32>} : memref<512x8xf32, #tpu.memory_space<vmem>>, vector<512x8xf32>,
    return
  }
  func.func @transform_0(%arg0: i32) -> (i32, i32) {
    %c0_i32 = arith.constant 0 : i32
    %c0_i32_0 = arith.constant 0 : i32
    return %arg0, %c0_i32 : i32, i32
  }
  func.func @transform_1(%arg0: i32) -> (i32, i32) {
    %c0_i32 = arith.constant 0 : i32
    %c0_i32_0 = arith.constant 0 : i32
    return %arg0, %c0_i32 : i32, i32
  }
  func.func @transform_2(%arg0: i32) -> (i32, i32) {
    %c0_i32 = arith.constant 0 : i32
    %c0_i32_0 = arith.constant 0 : i32
    %c0_i32_1 = arith.constant 0 : i32
    return %c0_i32, %c0_i32_0 : i32, i32
  }
  func.func @transform_3(%arg0: i32) -> (i32, i32) {
    %c0_i32 = arith.constant 0 : i32
    %c0_i32_0 = arith.constant 0 : i32
    %c0_i32_1 = arith.constant 0 : i32
    return %c0_i32, %c0_i32_0 : i32, i32
  }
  func.func @transform_4(%arg0: i32) -> (i32, i32) {
    %c0_i32 = arith.constant 0 : i32
    %c0_i32_0 = arith.constant 0 : i32
    return %arg0, %c0_i32 : i32, i32
  }
}

</mosaic_0001>

<llo_original>
// kernel: _lambda_.4
$region0: #{_lambda_.4}
  #allocation0 [shape = 'u32[]', space=smem, size = 0x4, offset = 0x4, fixed_abs, tag = 'smem constant byte address 0x4 - core index']
  #allocation1 [shape = 'u32[144,128]{1,0:T(1,128)}', space=vmem, size = 0x12000, scoped, tag = 'internal scratch']
  %s0 = inlined_call_operand.vmem [shape: bf16[2,16,16,4], index: 0, kind: input, shape index: {}, may-alias: {0,1,2}]
  %s1 = inlined_call_operand.vmem [shape: bf16[2,16,16,4], index: 1, kind: input, shape index: {}, may-alias: {0,1,2}]
  %s2 = inlined_call_operand.vmem [shape: bf16[2,16,16,4], index: 2, kind: input, shape index: {}, may-alias: {0,1,2}]
  %s3 = inlined_call_operand.vmem [shape: bf16[4,4], index: 3, kind: input, shape index: {}]
  %s4 = inlined_call_operand.vmem [shape: f32[1,4], index: 4, kind: input, shape index: {}]
  %s5 = inlined_call_operand.vmem [shape: bf16[36,4], index: 5, kind: input, shape index: {}]
  %s6 = inlined_call_operand.vmem [shape: f32[1,4], index: 6, kind: input, shape index: {}]
  %s7 = inlined_call_operand.vmem [shape: bf16[2,16,16,4], index: 7, kind: output, shape index: {}]
  %s8 = sld [smem:[#allocation0]]
  $region61: #{_lambda_.4} parent=0
    _
  %s10 = ssub.s32 1, %s8
  %s11 = scalar_select 0, %s10, %s8
  loop: start=0, step=1, limit=4
  $region2: #{_lambda_.4} parent=0 // loop_pre_header
    _
  $region3: #{_lambda_.4} parent=0 // loop_header
    %s13 = sphi 0, %s17
    %p14 = scmp.ge.s32.totalorder %s13, 4
    %s20 = sphi 0, %s32
    %s21 = sphi 0, %s28
    %s22 = sphi 0, %s20
    %s23 = sphi 0, %s21
    %s24 = sphi 0, %s22
    %s25 = sphi 0, %s23
    %s37 = sphi 0, %s39
    %s40 = sphi 0, %s37
    %s41 = sphi 0, %s40
    %s57 = sphi 0, %s41
    %s73 = sphi 0, %s75
    %s76 = sphi 0, %s73
    %s77 = sphi 0, %s76
    %s93 = sphi 0, %s77
    %s109 = sphi 0, %s111
    %s112 = sphi 0, %s109
    %s113 = sphi 0, %s112
    %s129 = sphi 0, %s113
    %s133 = sphi 0, %s133
    %s135 = sphi 0, %s133
    %s136 = sphi 0, %s135
    %s150 = sphi 0, %s136
    %s154 = sphi 0, %s154
    %s156 = sphi 0, %s154
    %s157 = sphi 0, %s156
    %s171 = sphi 0, %s157
    %s175 = sphi 0, %s175
    %s177 = sphi 0, %s175
    %s178 = sphi 0, %s177
    %s192 = sphi 0, %s178
    %s196 = sphi 0, %s196
    %s198 = sphi 0, %s196
    %s199 = sphi 0, %s198
    %s213 = sphi 0, %s199
    %s221 = sphi 0, %s223
    %s224 = sphi 0, %s221
    %s225 = sphi 0, %s224
    %s241 = sphi 0, %s225
  $region4: #{_lambda_.4} parent=0 // loop_header_branch
    %16 = sbr.rel (%p14) target = $region8
  $region5: #{_lambda_.4} parent=0 // loop_body
    %s18 = ssub.s32 %s13, 1
    %s19 = ssub.s32 %s13, 2
    %s26 = sadd.s32 1, %s21
    %p27 = scmp.ge.s32.totalorder %s26, 1
    %s28 = scalar_select %p27, 0, %s26
    %s29 = sadd.s32 1, %s20
    %s30 = scalar_select %p27, %s29, %s20
    %p31 = scmp.ge.s32.totalorder %s30, 2
    %s32 = scalar_select %p31, 0, %s30
    %s33 = ssub.s32 %s20, %s32
    %s34 = ssub.s32 %s21, %s28
    %s35 = sor.u32 %s33, %s34
    %p36 = scmp.eq.s32.totalorder %s35, 0
    %s38 = sadd.s32 %s37, 1
    %s39 = scalar_select %p36, %s37, %s38
    %p42 = pneg %p36
    %p43 = scmp.eq.s32.totalorder %s13, 1
    %p44 = por %p42, %p43
    %p45 = scmp.ne.s32.totalorder %s37, %s40
    %p46 = scmp.eq.s32.totalorder %s13, 0
    %p47 = por %p45, %p46
    %p48 = scmp.ne.s32.totalorder %s37, %s40
    %p49 = scmp.eq.s32.totalorder %s18, 1
    %p50 = por %p48, %p49
    %p51 = scmp.ne.s32.totalorder %s40, %s41
    %p52 = scmp.eq.s32.totalorder %s18, 0
    %p53 = por %p51, %p52
    %p54 = scmp.ne.s32.totalorder %s40, %s41
    %p55 = scmp.eq.s32.totalorder %s19, 1
    %p56 = por %p54, %p55
    %p58 = scmp.ne.s32.totalorder %s41, %s57
    %p59 = scmp.eq.s32.totalorder %s19, 0
    %p60 = por %p58, %p59
    %s61 = smul.u32 %s21, 16
    %s62 = ssub.s32 %s61, 1
    %p63 = scmp.gt.s32.totalorder %s62, 0
    %s64 = scalar_select %p63, %s62, 0
    %s65 = smul.u32 %s28, 16
    %s66 = ssub.s32 %s65, 1
    %p67 = scmp.gt.s32.totalorder %s66, 0
    %s68 = scalar_select %p67, %s66, 0
    %s69 = ssub.s32 %s20, %s32
    %s70 = ssub.s32 %s64, %s68
    %s71 = sor.u32 %s69, %s70
    %p72 = scmp.eq.s32.totalorder %s71, 0
    %s74 = sadd.s32 %s73, 1
    %s75 = scalar_select %p72, %s73, %s74
    %p78 = pneg %p72
    %p79 = scmp.eq.s32.totalorder %s13, 1
    %p80 = por %p78, %p79
    %p81 = scmp.ne.s32.totalorder %s73, %s76
    %p82 = scmp.eq.s32.totalorder %s13, 0
    %p83 = por %p81, %p82
    %p84 = scmp.ne.s32.totalorder %s73, %s76
    %p85 = scmp.eq.s32.totalorder %s18, 1
    %p86 = por %p84, %p85
    %p87 = scmp.ne.s32.totalorder %s76, %s77
    %p88 = scmp.eq.s32.totalorder %s18, 0
    %p89 = por %p87, %p88
    %p90 = scmp.ne.s32.totalorder %s76, %s77
    %p91 = scmp.eq.s32.totalorder %s19, 1
    %p92 = por %p90, %p91
    %p94 = scmp.ne.s32.totalorder %s77, %s93
    %p95 = scmp.eq.s32.totalorder %s19, 0
    %p96 = por %p94, %p95
    %s97 = sadd.s32 %s21, 1
    %s98 = smul.u32 %s97, 16
    %p99 = scmp.lt.s32.totalorder %s98, 15
    %s100 = scalar_select %p99, %s98, 15
    %s101 = sadd.s32 %s28, 1
    %s102 = smul.u32 %s101, 16
    %p103 = scmp.lt.s32.totalorder %s102, 15
    %s104 = scalar_select %p103, %s102, 15
    %s105 = ssub.s32 %s20, %s32
    %s106 = ssub.s32 %s100, %s104
    %s107 = sor.u32 %s105, %s106
    %p108 = scmp.eq.s32.totalorder %s107, 0
    %s110 = sadd.s32 %s109, 1
    %s111 = scalar_select %p108, %s109, %s110
    %p114 = pneg %p108
    %p115 = scmp.eq.s32.totalorder %s13, 1
    %p116 = por %p114, %p115
    %p117 = scmp.ne.s32.totalorder %s109, %s112
    %p118 = scmp.eq.s32.totalorder %s13, 0
    %p119 = por %p117, %p118
    %p120 = scmp.ne.s32.totalorder %s109, %s112
    %p121 = scmp.eq.s32.totalorder %s18, 1
    %p122 = por %p120, %p121
    %p123 = scmp.ne.s32.totalorder %s112, %s113
    %p124 = scmp.eq.s32.totalorder %s18, 0
    %p125 = por %p123, %p124
    %p126 = scmp.ne.s32.totalorder %s112, %s113
    %p127 = scmp.eq.s32.totalorder %s19, 1
    %p128 = por %p126, %p127
    %p130 = scmp.ne.s32.totalorder %s113, %s129
    %p131 = scmp.eq.s32.totalorder %s19, 0
    %p132 = por %p130, %p131
    %s134 = sadd.s32 %s133, 1
    %p137 = scmp.eq.s32.totalorder %s13, 1
    %p138 = scmp.ne.s32.totalorder %s133, %s135
    %p139 = scmp.eq.s32.totalorder %s13, 0
    %p140 = por %p138, %p139
    %p141 = scmp.ne.s32.totalorder %s133, %s135
    %p142 = scmp.eq.s32.totalorder %s18, 1
    %p143 = por %p141, %p142
    %p144 = scmp.ne.s32.totalorder %s135, %s136
    %p145 = scmp.eq.s32.totalorder %s18, 0
    %p146 = por %p144, %p145
    %p147 = scmp.ne.s32.totalorder %s135, %s136
    %p148 = scmp.eq.s32.totalorder %s19, 1
    %p149 = por %p147, %p148
    %p151 = scmp.ne.s32.totalorder %s136, %s150
    %p152 = scmp.eq.s32.totalorder %s19, 0
    %p153 = por %p151, %p152
    %s155 = sadd.s32 %s154, 1
    %p158 = scmp.eq.s32.totalorder %s13, 1
    %p159 = scmp.ne.s32.totalorder %s154, %s156
    %p160 = scmp.eq.s32.totalorder %s13, 0
    %p161 = por %p159, %p160
    %p162 = scmp.ne.s32.totalorder %s154, %s156
    %p163 = scmp.eq.s32.totalorder %s18, 1
    %p164 = por %p162, %p163
    %p165 = scmp.ne.s32.totalorder %s156, %s157
    %p166 = scmp.eq.s32.totalorder %s18, 0
    %p167 = por %p165, %p166
    %p168 = scmp.ne.s32.totalorder %s156, %s157
    %p169 = scmp.eq.s32.totalorder %s19, 1
    %p170 = por %p168, %p169
    %p172 = scmp.ne.s32.totalorder %s157, %s171
    %p173 = scmp.eq.s32.totalorder %s19, 0
    %p174 = por %p172, %p173
    %s176 = sadd.s32 %s175, 1
    %p179 = scmp.eq.s32.totalorder %s13, 1
    %p180 = scmp.ne.s32.totalorder %s175, %s177
    %p181 = scmp.eq.s32.totalorder %s13, 0
    %p182 = por %p180, %p181
    %p183 = scmp.ne.s32.totalorder %s175, %s177
    %p184 = scmp.eq.s32.totalorder %s18, 1
    %p185 = por %p183, %p184
    %p186 = scmp.ne.s32.totalorder %s177, %s178
    %p187 = scmp.eq.s32.totalorder %s18, 0
    %p188 = por %p186, %p187
    %p189 = scmp.ne.s32.totalorder %s177, %s178
    %p190 = scmp.eq.s32.totalorder %s19, 1
    %p191 = por %p189, %p190
    %p193 = scmp.ne.s32.totalorder %s178, %s192
    %p194 = scmp.eq.s32.totalorder %s19, 0
    %p195 = por %p193, %p194
    %s197 = sadd.s32 %s196, 1
    %p200 = scmp.eq.s32.totalorder %s13, 1
    %p201 = scmp.ne.s32.totalorder %s196, %s198
    %p202 = scmp.eq.s32.totalorder %s13, 0
    %p203 = por %p201, %p202
    %p204 = scmp.ne.s32.totalorder %s196, %s198
    %p205 = scmp.eq.s32.totalorder %s18, 1
    %p206 = por %p204, %p205
    %p207 = scmp.ne.s32.totalorder %s198, %s199
    %p208 = scmp.eq.s32.totalorder %s18, 0
    %p209 = por %p207, %p208
    %p210 = scmp.ne.s32.totalorder %s198, %s199
    %p211 = scmp.eq.s32.totalorder %s19, 1
    %p212 = por %p210, %p211
    %p214 = scmp.ne.s32.totalorder %s199, %s213
    %p215 = scmp.eq.s32.totalorder %s19, 0
    %p216 = por %p214, %p215
    %s217 = ssub.s32 %s20, %s32
    %s218 = ssub.s32 %s21, %s28
    %s219 = sor.u32 %s217, %s218
    %p220 = scmp.eq.s32.totalorder %s219, 0
    %s222 = sadd.s32 %s221, 1
    %s223 = scalar_select %p220, %s221, %s222
    %p226 = pneg %p220
    %p227 = scmp.eq.s32.totalorder %s13, 1
    %p228 = por %p226, %p227
    %p229 = scmp.ne.s32.totalorder %s221, %s224
    %p230 = scmp.eq.s32.totalorder %s13, 0
    %p231 = por %p229, %p230
    %p232 = scmp.ne.s32.totalorder %s221, %s224
    %p233 = scmp.eq.s32.totalorder %s18, 1
    %p234 = por %p232, %p233
    %p235 = scmp.ne.s32.totalorder %s224, %s225
    %p236 = scmp.eq.s32.totalorder %s18, 0
    %p237 = por %p235, %p236
    %p238 = scmp.ne.s32.totalorder %s224, %s225
    %p239 = scmp.eq.s32.totalorder %s19, 1
    %p240 = por %p238, %p239
    %p242 = scmp.ne.s32.totalorder %s225, %s241
    %p243 = scmp.eq.s32.totalorder %s19, 0
    %p244 = por %p242, %p243
    %p245 = scmp.le.s32.totalorder 1, %s13
    %p246 = scmp.lt.s32.totalorder %s13, 3
    %p247 = pnand %p245, %p246
    %p248 = pneg %p247
    // Predicated region
    $region9: #{_lambda_.4} parent=5 // pred_check
      _
    $region10: #{_lambda_.4} parent=5 // pred_check_branch
      %250 = sbr.rel (%p247) target = $region12
    $region11: #{_lambda_.4} parent=5 // pred_region
      %s251 = ssub.s32 %s13, 1
      // Predicated region
      $region13: #{_lambda_.4} parent=11 // pred_check
        %p252 = pneg %p146
      $region14: #{_lambda_.4} parent=11 // pred_check_branch
        %254 = sbr.rel (%p252) target = $region16
      $region15: #{_lambda_.4} parent=11 // pred_region
        _
      $region16: #{_lambda_.4} parent=11 // pred_fallthru
        _
      // Predicated region
      $region17: #{_lambda_.4} parent=11 // pred_check
        %p255 = pneg %p167
      $region18: #{_lambda_.4} parent=11 // pred_check_branch
        %257 = sbr.rel (%p255) target = $region20
      $region19: #{_lambda_.4} parent=11 // pred_region
        _
      $region20: #{_lambda_.4} parent=11 // pred_fallthru
        _
      // Predicated region
      $region21: #{_lambda_.4} parent=11 // pred_check
        %p258 = pneg %p188
      $region22: #{_lambda_.4} parent=11 // pred_check_branch
        %260 = sbr.rel (%p258) target = $region24
      $region23: #{_lambda_.4} parent=11 // pred_region
        _
      $region24: #{_lambda_.4} parent=11 // pred_fallthru
        _
      // Predicated region
      $region25: #{_lambda_.4} parent=11 // pred_check
        %p261 = pneg %p209
      $region26: #{_lambda_.4} parent=11 // pred_check_branch
        %263 = sbr.rel (%p261) target = $region28
      $region27: #{_lambda_.4} parent=11 // pred_region
        _
      $region28: #{_lambda_.4} parent=11 // pred_fallthru
        _
    $region12: #{_lambda_.4} parent=5 // pred_fallthru
      _
    %p264 = scmp.lt.s32.totalorder %s13, 2
    // Predicated region
    $region29: #{_lambda_.4} parent=5 // pred_check
      %p265 = pneg %p264
    $region30: #{_lambda_.4} parent=5 // pred_check_branch
      %267 = sbr.rel (%p265) target = $region32
    $region31: #{_lambda_.4} parent=5 // pred_region
      // Predicated region
      $region33: #{_lambda_.4} parent=31 // pred_check
        %p268 = pneg %p47
      $region34: #{_lambda_.4} parent=31 // pred_check_branch
        %270 = sbr.rel (%p268) target = $region36
      $region35: #{_lambda_.4} parent=31 // pred_region
        %s271 = smul.u32 16, %s21
        %p272 = scmp.lt.s32.totalorder %s20, 1
        %s273 = scalar_select %p272, %s20, 1
        %p274 = scmp.lt.s32.totalorder %s271, 15
        %s275 = scalar_select %p274, %s271, 15
        %s276 = smul.addr %s275, 2
        %s277 = smul.addr %s273, 32
        %s278 = sadd.s32 %s276, %s277
        %s279 = smul.addr %s278, 4
        %s280 = scalar_lea.vmem %s0, %s279
        %s281 = smul.u32 16, %s21
      $region36: #{_lambda_.4} parent=31 // pred_fallthru
        _
      // Predicated region
      $region37: #{_lambda_.4} parent=31 // pred_check
        %p282 = pneg %p83
      $region38: #{_lambda_.4} parent=31 // pred_check_branch
        %284 = sbr.rel (%p282) target = $region40
      $region39: #{_lambda_.4} parent=31 // pred_region
        %s285 = smul.u32 %s21, 16
        %s286 = ssub.s32 %s285, 1
        %p287 = scmp.gt.s32.totalorder %s286, 0
        %s288 = scalar_select %p287, %s286, 0
        %p289 = scmp.lt.s32.totalorder %s20, 1
        %s290 = scalar_select %p289, %s20, 1
        %p291 = scmp.lt.s32.totalorder %s288, 15
        %s292 = scalar_select %p291, %s288, 15
        %s293 = smul.addr %s292, 2
        %s294 = smul.addr %s290, 32
        %s295 = sadd.s32 %s293, %s294
        %s296 = smul.addr %s295, 4
        %s297 = scalar_lea.vmem %s1, %s296
        %s298 = smul.u32 %s21, 16
        %s299 = ssub.s32 %s298, 1
        %p300 = scmp.gt.s32.totalorder %s299, 0
        %s301 = scalar_select %p300, %s299, 0
      $region40: #{_lambda_.4} parent=31 // pred_fallthru
        _
      // Predicated region
      $region41: #{_lambda_.4} parent=31 // pred_check
        %p302 = pneg %p119
      $region42: #{_lambda_.4} parent=31 // pred_check_branch
        %304 = sbr.rel (%p302) target = $region44
      $region43: #{_lambda_.4} parent=31 // pred_region
        %s305 = sadd.s32 %s21, 1
        %s306 = smul.u32 %s305, 16
        %p307 = scmp.lt.s32.totalorder %s306, 15
        %s308 = scalar_select %p307, %s306, 15
        %p309 = scmp.lt.s32.totalorder %s20, 1
        %s310 = scalar_select %p309, %s20, 1
        %p311 = scmp.lt.s32.totalorder %s308, 15
        %s312 = scalar_select %p311, %s308, 15
        %s313 = smul.addr %s312, 2
        %s314 = smul.addr %s310, 32
        %s315 = sadd.s32 %s313, %s314
        %s316 = smul.addr %s315, 4
        %s317 = scalar_lea.vmem %s2, %s316
        %s318 = sadd.s32 %s21, 1
        %s319 = smul.u32 %s318, 16
        %p320 = scmp.lt.s32.totalorder %s319, 15
        %s321 = scalar_select %p320, %s319, 15
      $region44: #{_lambda_.4} parent=31 // pred_fallthru
        _
    $region32: #{_lambda_.4} parent=5 // pred_fallthru
      _
    %p322 = scmp.le.s32.totalorder 1, %s13
    %p323 = scmp.lt.s32.totalorder %s13, 3
    %p324 = pnand %p322, %p323
    %p325 = pneg %p324
    // Predicated region
    $region45: #{_lambda_.4} parent=5 // pred_check
      _
    $region46: #{_lambda_.4} parent=5 // pred_check_branch
      %327 = sbr.rel (%p324) target = $region48
    $region47: #{_lambda_.4} parent=5 // pred_region
      %s328 = ssub.s32 %s13, 1
      %s329 = smul.u32 16, %s23
      %p330 = scmp.lt.s32.totalorder %s22, 1
      %s331 = scalar_select %p330, %s22, 1
      %p332 = scmp.lt.s32.totalorder %s329, 15
      %s333 = scalar_select %p332, %s329, 15
      %s334 = smul.addr %s333, 2
      %s335 = smul.addr %s331, 32
      %s336 = sadd.s32 %s334, %s335
      %s337 = smul.addr %s336, 4
      %s338 = scalar_lea.vmem %s0, %s337
      %p339 = pneg %p53
      %p340 = pneg %p50
      %s341 = smul.u32 %s23, 16
      %s342 = ssub.s32 %s341, 1
      %p343 = scmp.gt.s32.totalorder %s342, 0
      %s344 = scalar_select %p343, %s342, 0
      %p345 = scmp.lt.s32.totalorder %s22, 1
      %s346 = scalar_select %p345, %s22, 1
      %p347 = scmp.lt.s32.totalorder %s344, 15
      %s348 = scalar_select %p347, %s344, 15
      %s349 = smul.addr %s348, 2
      %s350 = smul.addr %s346, 32
      %s351 = sadd.s32 %s349, %s350
      %s352 = smul.addr %s351, 4
      %s353 = scalar_lea.vmem %s1, %s352
      %p354 = pneg %p89
      %p355 = pneg %p86
      %s356 = sadd.s32 %s23, 1
      %s357 = smul.u32 %s356, 16
      %p358 = scmp.lt.s32.totalorder %s357, 15
      %s359 = scalar_select %p358, %s357, 15
      %p360 = scmp.lt.s32.totalorder %s22, 1
      %s361 = scalar_select %p360, %s22, 1
      %p362 = scmp.lt.s32.totalorder %s359, 15
      %s363 = scalar_select %p362, %s359, 15
      %s364 = smul.addr %s363, 2
      %s365 = smul.addr %s361, 32
      %s366 = sadd.s32 %s364, %s365
      %s367 = smul.addr %s366, 4
      %s368 = scalar_lea.vmem %s2, %s367
      %p369 = pneg %p125
      %p370 = pneg %p122
      %p371 = pneg %p146
      %p372 = pneg %p143
      %p373 = pneg %p167
      %p374 = pneg %p164
      %p375 = pneg %p188
      %p376 = pneg %p185
      %p377 = pneg %p209
      %p378 = pneg %p206
      %p379 = pneg %p237
      %p380 = pneg %p234
      %s381 = smul.u32 16, %s23
      %p382 = scmp.lt.s32.totalorder %s22, 1
      %s383 = scalar_select %p382, %s22, 1
      %p384 = scmp.lt.s32.totalorder %s381, 15
      %s385 = scalar_select %p384, %s381, 15
      %s386 = smul.addr %s385, 2
      %s387 = smul.addr %s383, 32
      %s388 = sadd.s32 %s386, %s387
      %s389 = smul.addr %s388, 4
      %s390 = scalar_lea.vmem %s7, %s389
      %s391 = smul.u32 16, %s23
      %p392 = scmp.lt.s32.totalorder %s22, 1
      %s393 = scalar_select %p392, %s22, 1
      %p394 = scmp.lt.s32.totalorder %s391, 15
      %s395 = scalar_select %p394, %s391, 15
      %s396 = smul.addr %s395, 2
      %s397 = smul.addr %s393, 32
      %s398 = sadd.s32 %s396, %s397
      %s399 = smul.addr %s398, 4
      %s400 = scalar_lea.vmem %s0, %s399
      %s401 = smul.u32 16, %s23
      %s402 = smul.u32 %s23, 16
      %s403 = ssub.s32 %s402, 1
      %p404 = scmp.gt.s32.totalorder %s403, 0
      %s405 = scalar_select %p404, %s403, 0
      %p406 = scmp.lt.s32.totalorder %s22, 1
      %s407 = scalar_select %p406, %s22, 1
      %p408 = scmp.lt.s32.totalorder %s405, 15
      %s409 = scalar_select %p408, %s405, 15
      %s410 = smul.addr %s409, 2
      %s411 = smul.addr %s407, 32
      %s412 = sadd.s32 %s410, %s411
      %s413 = smul.addr %s412, 4
      %s414 = scalar_lea.vmem %s1, %s413
      %s415 = smul.u32 %s23, 16
      %s416 = ssub.s32 %s415, 1
      %p417 = scmp.gt.s32.totalorder %s416, 0
      %s418 = scalar_select %p417, %s416, 0
      %s419 = sadd.s32 %s23, 1
      %s420 = smul.u32 %s419, 16
      %p421 = scmp.lt.s32.totalorder %s420, 15
      %s422 = scalar_select %p421, %s420, 15
      %p423 = scmp.lt.s32.totalorder %s22, 1
      %s424 = scalar_select %p423, %s22, 1
      %p425 = scmp.lt.s32.totalorder %s422, 15
      %s426 = scalar_select %p425, %s422, 15
      %s427 = smul.addr %s426, 2
      %s428 = smul.addr %s424, 32
      %s429 = sadd.s32 %s427, %s428
      %s430 = smul.addr %s429, 4
      %s431 = scalar_lea.vmem %s2, %s430
      %s432 = sadd.s32 %s23, 1
      %s433 = smul.u32 %s432, 16
      %p434 = scmp.lt.s32.totalorder %s433, 15
      %s435 = scalar_select %p434, %s433, 15
      %s436 = smul.u32 16, %s23
      %p437 = scmp.lt.s32.totalorder %s22, 1
      %s438 = scalar_select %p437, %s22, 1
      %p439 = scmp.lt.s32.totalorder %s436, 15
      %s440 = scalar_select %p439, %s436, 15
      %s441 = smul.addr %s440, 2
      %s442 = smul.addr %s438, 32
      %s443 = sadd.s32 %s441, %s442
      %s444 = smul.addr %s443, 4
      %s445 = scalar_lea.vmem %s7, %s444
      %s446 = smul.u32 16, %s23
      %v448 = vld [vmem:[%s414] sm:$0xf]
      %v449 = vld [vmem:[%s414 + $0x4] sm:$0xf]
      %v450 = vld [vmem:[%s400] sm:$0xf]
      %v451 = vld [vmem:[%s400 + $0x4] sm:$0xf]
      %v452 = vld [vmem:[%s400 + $0x8] sm:$0xf]
      %v453 = vld [vmem:[%s400 + $0xc] sm:$0xf]
      %v454 = vld [vmem:[%s400 + $0x10] sm:$0xf]
      %v455 = vld [vmem:[%s400 + $0x14] sm:$0xf]
      %v456 = vld [vmem:[%s400 + $0x18] sm:$0xf]
      %v457 = vld [vmem:[%s400 + $0x1c] sm:$0xf]
      %v458 = vld [vmem:[%s400 + $0x20] sm:$0xf]
      %v459 = vld [vmem:[%s400 + $0x24] sm:$0xf]
      %v460 = vld [vmem:[%s400 + $0x28] sm:$0xf]
      %v461 = vld [vmem:[%s400 + $0x2c] sm:$0xf]
      %v462 = vld [vmem:[%s400 + $0x30] sm:$0xf]
      %v463 = vld [vmem:[%s400 + $0x34] sm:$0xf]
      %v464 = vld [vmem:[%s400 + $0x38] sm:$0xf]
      %v465 = vld [vmem:[%s400 + $0x3c] sm:$0xf]
      %v466 = vld [vmem:[%s400 + $0x40] sm:$0xf]
      %v467 = vld [vmem:[%s400 + $0x44] sm:$0xf]
      %v468 = vld [vmem:[%s400 + $0x48] sm:$0xf]
      %v469 = vld [vmem:[%s400 + $0x4c] sm:$0xf]
      %v470 = vld [vmem:[%s400 + $0x50] sm:$0xf]
      %v471 = vld [vmem:[%s400 + $0x54] sm:$0xf]
      %v472 = vld [vmem:[%s400 + $0x58] sm:$0xf]
      %v473 = vld [vmem:[%s400 + $0x5c] sm:$0xf]
      %v474 = vld [vmem:[%s400 + $0x60] sm:$0xf]
      %v475 = vld [vmem:[%s400 + $0x64] sm:$0xf]
      %v476 = vld [vmem:[%s400 + $0x68] sm:$0xf]
      %v477 = vld [vmem:[%s400 + $0x6c] sm:$0xf]
      %v478 = vld [vmem:[%s400 + $0x70] sm:$0xf]
      %v479 = vld [vmem:[%s400 + $0x74] sm:$0xf]
      %v480 = vld [vmem:[%s400 + $0x78] sm:$0xf]
      %v481 = vld [vmem:[%s400 + $0x7c] sm:$0xf]
      %v482 = vld [vmem:[%s431] sm:$0xf]
      %v483 = vld [vmem:[%s431 + $0x4] sm:$0xf]
      %v484 = vld [vmem:[%s3] sm:$0x3]
      %v485 = vld [vmem:[%s4] sm:$0x1]
      %v487 = vlaneseq
      %v488 = vshrl.u32 %v487, 7
      %v489 = vsub.s32 0, %v488
      %v490 = vrot.slane %v485, %v489
      %v528 = vunpack.c.l.b16 %v448
      %v529 = vunpack.c.l.b16 %v449
      %v530 = vunpack.c.l.b16 %v450
      %v531 = vunpack.c.l.b16 %v451
      %v532 = vunpack.c.l.b16 %v452
      %v533 = vunpack.c.l.b16 %v453
      %v534 = vunpack.c.l.b16 %v454
      %v535 = vunpack.c.l.b16 %v455
      %v536 = vunpack.c.l.b16 %v456
      %v537 = vunpack.c.l.b16 %v457
      %v538 = vunpack.c.l.b16 %v458
      %v539 = vunpack.c.l.b16 %v459
      %v540 = vunpack.c.l.b16 %v460
      %v541 = vunpack.c.l.b16 %v461
      %v542 = vunpack.c.l.b16 %v462
      %v543 = vunpack.c.l.b16 %v463
      %v544 = vunpack.c.l.b16 %v464
      %v545 = vunpack.c.l.b16 %v465
      %v546 = vunpack.c.l.b16 %v466
      %v547 = vunpack.c.l.b16 %v467
      %v548 = vunpack.c.l.b16 %v468
      %v549 = vunpack.c.l.b16 %v469
      %v550 = vunpack.c.l.b16 %v470
      %v551 = vunpack.c.l.b16 %v471
      %v552 = vunpack.c.l.b16 %v472
      %v553 = vunpack.c.l.b16 %v473
      %v554 = vunpack.c.l.b16 %v474
      %v555 = vunpack.c.l.b16 %v475
      %v556 = vunpack.c.l.b16 %v476
      %v557 = vunpack.c.l.b16 %v477
      %v558 = vunpack.c.l.b16 %v478
      %v559 = vunpack.c.l.b16 %v479
      %v560 = vunpack.c.l.b16 %v480
      %v561 = vunpack.c.l.b16 %v481
      %v562 = vunpack.c.l.b16 %v482
      %v563 = vunpack.c.l.b16 %v483
      %v564 = vpack.c.b16 %v529, %v528
      %v565 = vpack.c.b16 %v531, %v530
      %v566 = vpack.c.b16 %v533, %v532
      %v567 = vpack.c.b16 %v535, %v534
      %v568 = vpack.c.b16 %v537, %v536
      %v569 = vpack.c.b16 %v539, %v538
      %v570 = vpack.c.b16 %v541, %v540
      %v571 = vpack.c.b16 %v543, %v542
      %v572 = vpack.c.b16 %v545, %v544
      %v573 = vpack.c.b16 %v547, %v546
      %v574 = vpack.c.b16 %v549, %v548
      %v575 = vpack.c.b16 %v551, %v550
      %v576 = vpack.c.b16 %v553, %v552
      %v577 = vpack.c.b16 %v555, %v554
      %v578 = vpack.c.b16 %v557, %v556
      %v579 = vpack.c.b16 %v559, %v558
      %v580 = vpack.c.b16 %v561, %v560
      %v581 = vpack.c.b16 %v563, %v562
      %vm582 = vcmask 31744
      %v584 = vsel %vm582, %v564, 0
      %v587 = vsel %vm582, %v565, 0
      %v590 = vsel %vm582, %v566, 0
      %v593 = vsel %vm582, %v567, 0
      %v596 = vsel %vm582, %v568, 0
      %v599 = vsel %vm582, %v569, 0
      %v602 = vsel %vm582, %v570, 0
      %v605 = vsel %vm582, %v571, 0
      %v608 = vsel %vm582, %v572, 0
      %v611 = vsel %vm582, %v573, 0
      %v614 = vsel %vm582, %v574, 0
      %v617 = vsel %vm582, %v575, 0
      %v620 = vsel %vm582, %v576, 0
      %v623 = vsel %vm582, %v577, 0
      %v626 = vsel %vm582, %v578, 0
      %v629 = vsel %vm582, %v579, 0
      %v632 = vsel %vm582, %v580, 0
      %v635 = vsel %vm582, %v581, 0
      %vm637 = vcmask 1041408
      %v639 = vsel %vm637, %v484, 0
      %641 = vmatprep.subr.bf16.mxu0 0
      %642 = vmatpush1.bf16.msra.mxu0 0
      %643 = vmatprep.subr.bf16.mxu0 0
      %644 = vmatpush1.bf16.msra.mxu0 0
      %645 = vmatprep.subr.bf16.mxu0 0
      %646 = vmatpush1.bf16.msra.mxu0 0
      %647 = vmatprep.subr.bf16.mxu0 0
      %648 = vmatpush1.bf16.msra.mxu0 0
      %649 = vmatprep.subr.bf16.mxu0 0
      %650 = vmatpush1.bf16.msra.mxu0 0
      %651 = vmatprep.subr.bf16.mxu0 0
      %652 = vmatpush1.bf16.msra.mxu0 0
      %653 = vmatprep.subr.bf16.mxu0 0
      %654 = vmatpush1.bf16.msra.mxu0 0
      %655 = vmatprep.subr.bf16.mxu0 0
      %656 = vmatpush1.bf16.msra.mxu0 %v639
      %657 = vmatprep.subr.bf16.mxu0 0
      %658 = vmatpush2.bf16.msra.mxu0 0
      %659 = vmatprep.subr.bf16.mxu0 0
      %660 = vmatpush2.bf16.msra.mxu0 0
      %661 = vmatprep.subr.bf16.mxu0 0
      %662 = vmatpush2.bf16.msra.mxu0 0
      %663 = vmatprep.subr.bf16.mxu0 0
      %664 = vmatpush2.bf16.msra.mxu0 0
      %665 = vmatprep.subr.bf16.mxu0 0
      %666 = vmatpush2.bf16.msra.mxu0 0
      %667 = vmatprep.subr.bf16.mxu0 0
      %668 = vmatpush2.bf16.msra.mxu0 0
      %669 = vmatprep.subr.bf16.mxu0 0
      %670 = vmatpush2.bf16.msra.mxu0 0
      %671 = vmatprep.subr.bf16.mxu0 0
      %672 = vmatpush2.bf16.msra.mxu0 0
      %673 = vmatprep.mubr.bf16.mxu0 0
      %674 = vmatmul.mubr.bf16.gmra.mxu0 %v584
      %v675 = vpop.f32.mrf.mxu0
      %v676 = vadd.f32 %v490, %v675
      %v677 = vpop.f32.mrf.mxu0
      %v678 = vpop.f32.mrf.mxu0
      %v679 = vadd.f32 %v490, %v678
      %v680 = vpop.f32.mrf.mxu0
      %681 = vmatprep.mubr.bf16.mxu0 0
      %682 = vmatmul.mubr.bf16.gmra.mxu0 %v587
      %v683 = vpop.f32.mrf.mxu0
      %v684 = vadd.f32 %v490, %v683
      %v685 = vpop.f32.mrf.mxu0
      %v686 = vpop.f32.mrf.mxu0
      %v687 = vadd.f32 %v490, %v686
      %v688 = vpop.f32.mrf.mxu0
      %689 = vmatprep.mubr.bf16.mxu0 0
      %690 = vmatmul.mubr.bf16.gmra.mxu0 %v590
      %v691 = vpop.f32.mrf.mxu0
      %v692 = vadd.f32 %v490, %v691
      %v693 = vpop.f32.mrf.mxu0
      %v694 = vpop.f32.mrf.mxu0
      %v695 = vadd.f32 %v490, %v694
      %v696 = vpop.f32.mrf.mxu0
      %697 = vmatprep.mubr.bf16.mxu0 0
      %698 = vmatmul.mubr.bf16.gmra.mxu0 %v593
      %v699 = vpop.f32.mrf.mxu0
      %v700 = vadd.f32 %v490, %v699
      %v701 = vpop.f32.mrf.mxu0
      %v702 = vpop.f32.mrf.mxu0
      %v703 = vadd.f32 %v490, %v702
      %v704 = vpop.f32.mrf.mxu0
      %705 = vmatprep.mubr.bf16.mxu0 0
      %706 = vmatmul.mubr.bf16.gmra.mxu0 %v596
      %v707 = vpop.f32.mrf.mxu0
      %v708 = vadd.f32 %v490, %v707
      %v709 = vpop.f32.mrf.mxu0
      %v710 = vpop.f32.mrf.mxu0
      %v711 = vadd.f32 %v490, %v710
      %v712 = vpop.f32.mrf.mxu0
      %713 = vmatprep.mubr.bf16.mxu0 0
      %714 = vmatmul.mubr.bf16.gmra.mxu0 %v599
      %v715 = vpop.f32.mrf.mxu0
      %v716 = vadd.f32 %v490, %v715
      %v717 = vpop.f32.mrf.mxu0
      %v718 = vpop.f32.mrf.mxu0
      %v719 = vadd.f32 %v490, %v718
      %v720 = vpop.f32.mrf.mxu0
      %721 = vmatprep.mubr.bf16.mxu0 0
      %722 = vmatmul.mubr.bf16.gmra.mxu0 %v602
      %v723 = vpop.f32.mrf.mxu0
      %v724 = vadd.f32 %v490, %v723
      %v725 = vpop.f32.mrf.mxu0
      %v726 = vpop.f32.mrf.mxu0
      %v727 = vadd.f32 %v490, %v726
      %v728 = vpop.f32.mrf.mxu0
      %729 = vmatprep.mubr.bf16.mxu0 0
      %730 = vmatmul.mubr.bf16.gmra.mxu0 %v605
      %v731 = vpop.f32.mrf.mxu0
      %v732 = vadd.f32 %v490, %v731
      %v733 = vpop.f32.mrf.mxu0
      %v734 = vpop.f32.mrf.mxu0
      %v735 = vadd.f32 %v490, %v734
      %v736 = vpop.f32.mrf.mxu0
      %737 = vmatprep.mubr.bf16.mxu0 0
      %738 = vmatmul.mubr.bf16.gmra.mxu0 %v608
      %v739 = vpop.f32.mrf.mxu0
      %v740 = vadd.f32 %v490, %v739
      %v741 = vpop.f32.mrf.mxu0
      %v742 = vpop.f32.mrf.mxu0
      %v743 = vadd.f32 %v490, %v742
      %v744 = vpop.f32.mrf.mxu0
      %745 = vmatprep.mubr.bf16.mxu0 0
      %746 = vmatmul.mubr.bf16.gmra.mxu0 %v611
      %v747 = vpop.f32.mrf.mxu0
      %v748 = vadd.f32 %v490, %v747
      %v749 = vpop.f32.mrf.mxu0
      %v750 = vpop.f32.mrf.mxu0
      %v751 = vadd.f32 %v490, %v750
      %v752 = vpop.f32.mrf.mxu0
      %753 = vmatprep.mubr.bf16.mxu0 0
      %754 = vmatmul.mubr.bf16.gmra.mxu0 %v614
      %v755 = vpop.f32.mrf.mxu0
      %v756 = vadd.f32 %v490, %v755
      %v757 = vpop.f32.mrf.mxu0
      %v758 = vpop.f32.mrf.mxu0
      %v759 = vadd.f32 %v490, %v758
      %v760 = vpop.f32.mrf.mxu0
      %761 = vmatprep.mubr.bf16.mxu0 0
      %762 = vmatmul.mubr.bf16.gmra.mxu0 %v617
      %v763 = vpop.f32.mrf.mxu0
      %v764 = vadd.f32 %v490, %v763
      %v765 = vpop.f32.mrf.mxu0
      %v766 = vpop.f32.mrf.mxu0
      %v767 = vadd.f32 %v490, %v766
      %v768 = vpop.f32.mrf.mxu0
      %769 = vmatprep.mubr.bf16.mxu0 0
      %770 = vmatmul.mubr.bf16.gmra.mxu0 %v620
      %v771 = vpop.f32.mrf.mxu0
      %v772 = vadd.f32 %v490, %v771
      %v773 = vpop.f32.mrf.mxu0
      %v774 = vpop.f32.mrf.mxu0
      %v775 = vadd.f32 %v490, %v774
      %v776 = vpop.f32.mrf.mxu0
      %777 = vmatprep.mubr.bf16.mxu0 0
      %778 = vmatmul.mubr.bf16.gmra.mxu0 %v623
      %v779 = vpop.f32.mrf.mxu0
      %v780 = vadd.f32 %v490, %v779
      %v781 = vpop.f32.mrf.mxu0
      %v782 = vpop.f32.mrf.mxu0
      %v783 = vadd.f32 %v490, %v782
      %v784 = vpop.f32.mrf.mxu0
      %785 = vmatprep.mubr.bf16.mxu0 0
      %786 = vmatmul.mubr.bf16.gmra.mxu0 %v626
      %v787 = vpop.f32.mrf.mxu0
      %v788 = vadd.f32 %v490, %v787
      %v789 = vpop.f32.mrf.mxu0
      %v790 = vpop.f32.mrf.mxu0
      %v791 = vadd.f32 %v490, %v790
      %v792 = vpop.f32.mrf.mxu0
      %793 = vmatprep.mubr.bf16.mxu0 0
      %794 = vmatmul.mubr.bf16.gmra.mxu0 %v629
      %v795 = vpop.f32.mrf.mxu0
      %v796 = vadd.f32 %v490, %v795
      %v797 = vpop.f32.mrf.mxu0
      %v798 = vpop.f32.mrf.mxu0
      %v799 = vadd.f32 %v490, %v798
      %v800 = vpop.f32.mrf.mxu0
      %801 = vmatprep.mubr.bf16.mxu0 0
      %802 = vmatmul.mubr.bf16.gmra.mxu0 %v632
      %v803 = vpop.f32.mrf.mxu0
      %v804 = vadd.f32 %v490, %v803
      %v805 = vpop.f32.mrf.mxu0
      %v806 = vpop.f32.mrf.mxu0
      %v807 = vadd.f32 %v490, %v806
      %v808 = vpop.f32.mrf.mxu0
      %809 = vmatprep.mubr.bf16.mxu0 0
      %810 = vmatmul.mubr.bf16.gmra.mxu0 %v635
      %v811 = vpop.f32.mrf.mxu0
      %v812 = vadd.f32 %v490, %v811
      %v813 = vpop.f32.mrf.mxu0
      %v814 = vpop.f32.mrf.mxu0
      %v815 = vadd.f32 %v490, %v814
      %v816 = vpop.f32.mrf.mxu0
      %817 = vdwg.mxu0
      %v818 = vxor.u32 %v676, 2147483648
      %v819 = vxor.u32 %v679, 2147483648
      %v820 = vxor.u32 %v684, 2147483648
      %v821 = vxor.u32 %v687, 2147483648
      %v822 = vxor.u32 %v692, 2147483648
      %v823 = vxor.u32 %v695, 2147483648
      %v824 = vxor.u32 %v700, 2147483648
      %v825 = vxor.u32 %v703, 2147483648
      %v826 = vxor.u32 %v708, 2147483648
      %v827 = vxor.u32 %v711, 2147483648
      %v828 = vxor.u32 %v716, 2147483648
      %v829 = vxor.u32 %v719, 2147483648
      %v830 = vxor.u32 %v724, 2147483648
      %v831 = vxor.u32 %v727, 2147483648
      %v832 = vxor.u32 %v732, 2147483648
      %v833 = vxor.u32 %v735, 2147483648
      %v834 = vxor.u32 %v740, 2147483648
      %v835 = vxor.u32 %v743, 2147483648
      %v836 = vxor.u32 %v748, 2147483648
      %v837 = vxor.u32 %v751, 2147483648
      %v838 = vxor.u32 %v756, 2147483648
      %v839 = vxor.u32 %v759, 2147483648
      %v840 = vxor.u32 %v764, 2147483648
      %v841 = vxor.u32 %v767, 2147483648
      %v842 = vxor.u32 %v772, 2147483648
      %v843 = vxor.u32 %v775, 2147483648
      %v844 = vxor.u32 %v780, 2147483648
      %v845 = vxor.u32 %v783, 2147483648
      %v846 = vxor.u32 %v788, 2147483648
      %v847 = vxor.u32 %v791, 2147483648
      %v848 = vxor.u32 %v796, 2147483648
      %v849 = vxor.u32 %v799, 2147483648
      %v850 = vxor.u32 %v804, 2147483648
      %v851 = vxor.u32 %v807, 2147483648
      %v852 = vxor.u32 %v812, 2147483648
      %v853 = vxor.u32 %v815, 2147483648
      %v854 = vmul.f32 %v818, 1.442695
      %v855 = vpow.pop %v854
      %v856 = vmul.f32 %v819, 1.442695
      %v857 = vpow.pop %v856
      %v858 = vmul.f32 %v820, 1.442695
      %v859 = vpow.pop %v858
      %v860 = vmul.f32 %v821, 1.442695
      %v861 = vpow.pop %v860
      %v862 = vmul.f32 %v822, 1.442695
      %v863 = vpow.pop %v862
      %v864 = vmul.f32 %v823, 1.442695
      %v865 = vpow.pop %v864
      %v866 = vmul.f32 %v824, 1.442695
      %v867 = vpow.pop %v866
      %v868 = vmul.f32 %v825, 1.442695
      %v869 = vpow.pop %v868
      %v870 = vmul.f32 %v826, 1.442695
      %v871 = vpow.pop %v870
      %v872 = vmul.f32 %v827, 1.442695
      %v873 = vpow.pop %v872
      %v874 = vmul.f32 %v828, 1.442695
      %v875 = vpow.pop %v874
      %v876 = vmul.f32 %v829, 1.442695
      %v877 = vpow.pop %v876
      %v878 = vmul.f32 %v830, 1.442695
      %v879 = vpow.pop %v878
      %v880 = vmul.f32 %v831, 1.442695
      %v881 = vpow.pop %v880
      %v882 = vmul.f32 %v832, 1.442695
      %v883 = vpow.pop %v882
      %v884 = vmul.f32 %v833, 1.442695
      %v885 = vpow.pop %v884
      %v886 = vmul.f32 %v834, 1.442695
      %v887 = vpow.pop %v886
      %v888 = vmul.f32 %v835, 1.442695
      %v889 = vpow.pop %v888
      %v890 = vmul.f32 %v836, 1.442695
      %v891 = vpow.pop %v890
      %v892 = vmul.f32 %v837, 1.442695
      %v893 = vpow.pop %v892
      %v894 = vmul.f32 %v838, 1.442695
      %v895 = vpow.pop %v894
      %v896 = vmul.f32 %v839, 1.442695
      %v897 = vpow.pop %v896
      %v898 = vmul.f32 %v840, 1.442695
      %v899 = vpow.pop %v898
      %v900 = vmul.f32 %v841, 1.442695
      %v901 = vpow.pop %v900
      %v902 = vmul.f32 %v842, 1.442695
      %v903 = vpow.pop %v902
      %v904 = vmul.f32 %v843, 1.442695
      %v905 = vpow.pop %v904
      %v906 = vmul.f32 %v844, 1.442695
      %v907 = vpow.pop %v906
      %v908 = vmul.f32 %v845, 1.442695
      %v909 = vpow.pop %v908
      %v910 = vmul.f32 %v846, 1.442695
      %v911 = vpow.pop %v910
      %v912 = vmul.f32 %v847, 1.442695
      %v913 = vpow.pop %v912
      %v914 = vmul.f32 %v848, 1.442695
      %v915 = vpow.pop %v914
      %v916 = vmul.f32 %v849, 1.442695
      %v917 = vpow.pop %v916
      %v918 = vmul.f32 %v850, 1.442695
      %v919 = vpow.pop %v918
      %v920 = vmul.f32 %v851, 1.442695
      %v921 = vpow.pop %v920
      %v922 = vmul.f32 %v852, 1.442695
      %v923 = vpow.pop %v922
      %v924 = vmul.f32 %v853, 1.442695
      %v925 = vpow.pop %v924
      %v926 = vadd.f32 %v855, 1.0
      %v927 = vadd.f32 %v857, 1.0
      %v928 = vadd.f32 %v859, 1.0
      %v929 = vadd.f32 %v861, 1.0
      %v930 = vadd.f32 %v863, 1.0
      %v931 = vadd.f32 %v865, 1.0
      %v932 = vadd.f32 %v867, 1.0
      %v933 = vadd.f32 %v869, 1.0
      %v934 = vadd.f32 %v871, 1.0
      %v935 = vadd.f32 %v873, 1.0
      %v936 = vadd.f32 %v875, 1.0
      %v937 = vadd.f32 %v877, 1.0
      %v938 = vadd.f32 %v879, 1.0
      %v939 = vadd.f32 %v881, 1.0
      %v940 = vadd.f32 %v883, 1.0
      %v941 = vadd.f32 %v885, 1.0
      %v942 = vadd.f32 %v887, 1.0
      %v943 = vadd.f32 %v889, 1.0
      %v944 = vadd.f32 %v891, 1.0
      %v945 = vadd.f32 %v893, 1.0
      %v946 = vadd.f32 %v895, 1.0
      %v947 = vadd.f32 %v897, 1.0
      %v948 = vadd.f32 %v899, 1.0
      %v949 = vadd.f32 %v901, 1.0
      %v950 = vadd.f32 %v903, 1.0
      %v951 = vadd.f32 %v905, 1.0
      %v952 = vadd.f32 %v907, 1.0
      %v953 = vadd.f32 %v909, 1.0
      %v954 = vadd.f32 %v911, 1.0
      %v955 = vadd.f32 %v913, 1.0
      %v956 = vadd.f32 %v915, 1.0
      %v957 = vadd.f32 %v917, 1.0
      %v958 = vadd.f32 %v919, 1.0
      %v959 = vadd.f32 %v921, 1.0
      %v960 = vadd.f32 %v923, 1.0
      %v961 = vadd.f32 %v925, 1.0
      %v962 = vrcp.pop %v926
      %v963 = vmul.f32 1.0, %v962
      %v964 = vrcp.pop %v927
      %v965 = vmul.f32 1.0, %v964
      %v966 = vrcp.pop %v928
      %v967 = vmul.f32 1.0, %v966
      %v968 = vrcp.pop %v929
      %v969 = vmul.f32 1.0, %v968
      %v970 = vrcp.pop %v930
      %v971 = vmul.f32 1.0, %v970
      %v972 = vrcp.pop %v931
      %v973 = vmul.f32 1.0, %v972
      %v974 = vrcp.pop %v932
      %v975 = vmul.f32 1.0, %v974
      %v976 = vrcp.pop %v933
      %v977 = vmul.f32 1.0, %v976
      %v978 = vrcp.pop %v934
      %v979 = vmul.f32 1.0, %v978
      %v980 = vrcp.pop %v935
      %v981 = vmul.f32 1.0, %v980
      %v982 = vrcp.pop %v936
      %v983 = vmul.f32 1.0, %v982
      %v984 = vrcp.pop %v937
      %v985 = vmul.f32 1.0, %v984
      %v986 = vrcp.pop %v938
      %v987 = vmul.f32 1.0, %v986
      %v988 = vrcp.pop %v939
      %v989 = vmul.f32 1.0, %v988
      %v990 = vrcp.pop %v940
      %v991 = vmul.f32 1.0, %v990
      %v992 = vrcp.pop %v941
      %v993 = vmul.f32 1.0, %v992
      %v994 = vrcp.pop %v942
      %v995 = vmul.f32 1.0, %v994
      %v996 = vrcp.pop %v943
      %v997 = vmul.f32 1.0, %v996
      %v998 = vrcp.pop %v944
      %v999 = vmul.f32 1.0, %v998
      %v1000 = vrcp.pop %v945
      %v1001 = vmul.f32 1.0, %v1000
      %v1002 = vrcp.pop %v946
      %v1003 = vmul.f32 1.0, %v1002
      %v1004 = vrcp.pop %v947
      %v1005 = vmul.f32 1.0, %v1004
      %v1006 = vrcp.pop %v948
      %v1007 = vmul.f32 1.0, %v1006
      %v1008 = vrcp.pop %v949
      %v1009 = vmul.f32 1.0, %v1008
      %v1010 = vrcp.pop %v950
      %v1011 = vmul.f32 1.0, %v1010
      %v1012 = vrcp.pop %v951
      %v1013 = vmul.f32 1.0, %v1012
      %v1014 = vrcp.pop %v952
      %v1015 = vmul.f32 1.0, %v1014
      %v1016 = vrcp.pop %v953
      %v1017 = vmul.f32 1.0, %v1016
      %v1018 = vrcp.pop %v954
      %v1019 = vmul.f32 1.0, %v1018
      %v1020 = vrcp.pop %v955
      %v1021 = vmul.f32 1.0, %v1020
      %v1022 = vrcp.pop %v956
      %v1023 = vmul.f32 1.0, %v1022
      %v1024 = vrcp.pop %v957
      %v1025 = vmul.f32 1.0, %v1024
      %v1026 = vrcp.pop %v958
      %v1027 = vmul.f32 1.0, %v1026
      %v1028 = vrcp.pop %v959
      %v1029 = vmul.f32 1.0, %v1028
      %v1030 = vrcp.pop %v960
      %v1031 = vmul.f32 1.0, %v1030
      %v1032 = vrcp.pop %v961
      %v1033 = vmul.f32 1.0, %v1032
      %v1034 = vmul.f32 %v676, %v963
      %v1035 = vmul.f32 %v679, %v965
      %v1036 = vmul.f32 %v684, %v967
      %v1037 = vmul.f32 %v687, %v969
      %v1038 = vmul.f32 %v692, %v971
      %v1039 = vmul.f32 %v695, %v973
      %v1040 = vmul.f32 %v700, %v975
      %v1041 = vmul.f32 %v703, %v977
      %v1042 = vmul.f32 %v708, %v979
      %v1043 = vmul.f32 %v711, %v981
      %v1044 = vmul.f32 %v716, %v983
      %v1045 = vmul.f32 %v719, %v985
      %v1046 = vmul.f32 %v724, %v987
      %v1047 = vmul.f32 %v727, %v989
      %v1048 = vmul.f32 %v732, %v991
      %v1049 = vmul.f32 %v735, %v993
      %v1050 = vmul.f32 %v740, %v995
      %v1051 = vmul.f32 %v743, %v997
      %v1052 = vmul.f32 %v748, %v999
      %v1053 = vmul.f32 %v751, %v1001
      %v1054 = vmul.f32 %v756, %v1003
      %v1055 = vmul.f32 %v759, %v1005
      %v1056 = vmul.f32 %v764, %v1007
      %v1057 = vmul.f32 %v767, %v1009
      %v1058 = vmul.f32 %v772, %v1011
      %v1059 = vmul.f32 %v775, %v1013
      %v1060 = vmul.f32 %v780, %v1015
      %v1061 = vmul.f32 %v783, %v1017
      %v1062 = vmul.f32 %v788, %v1019
      %v1063 = vmul.f32 %v791, %v1021
      %v1064 = vmul.f32 %v796, %v1023
      %v1065 = vmul.f32 %v799, %v1025
      %v1066 = vmul.f32 %v804, %v1027
      %v1067 = vmul.f32 %v807, %v1029
      %v1068 = vmul.f32 %v812, %v1031
      %v1069 = vmul.f32 %v815, %v1033
      %p1070 = scmp.gt.s32.totalorder %s23, 0
      %s1071 = scalar_select %p1070, 1, 0
      %v1072 = vstv %s1071
      %vm1073 = vcmp.eq.s32.totalorder %v1072, 1
      %v1074 = vsel %vm1073, %v1034, 0.0
      %v1075 = vsel %vm1073, %v1035, 0.0
      %p1076 = scmp.lt.s32.totalorder %s23, 0
      %s1077 = scalar_select %p1076, 1, 0
      %v1078 = vstv %s1077
      %vm1079 = vcmp.eq.s32.totalorder %v1078, 1
      %v1080 = vsel %vm1079, %v1068, 0.0
      %v1081 = vsel %vm1079, %v1069, 0.0
      %v1082 = vpack.c.bf16 %v1075, %v1074
      %v1083 = vpack.c.bf16 %v1037, %v1036
      %v1084 = vpack.c.bf16 %v1039, %v1038
      %v1085 = vpack.c.bf16 %v1041, %v1040
      %v1086 = vpack.c.bf16 %v1043, %v1042
      %v1087 = vpack.c.bf16 %v1045, %v1044
      %v1088 = vpack.c.bf16 %v1047, %v1046
      %v1089 = vpack.c.bf16 %v1049, %v1048
      %v1090 = vpack.c.bf16 %v1051, %v1050
      %v1091 = vpack.c.bf16 %v1053, %v1052
      %v1092 = vpack.c.bf16 %v1055, %v1054
      %v1093 = vpack.c.bf16 %v1057, %v1056
      %v1094 = vpack.c.bf16 %v1059, %v1058
      %v1095 = vpack.c.bf16 %v1061, %v1060
      %v1096 = vpack.c.bf16 %v1063, %v1062
      %v1097 = vpack.c.bf16 %v1065, %v1064
      %v1098 = vpack.c.bf16 %v1067, %v1066
      %v1099 = vpack.c.bf16 %v1081, %v1080
      %v1101 = vshrl.u32 %v1082, 16
      %v1103 = vrot.slane %v1101, 7
      %v1104 = vshll.u32 %v1082, 16
      %v1106 = vor.u32 %v1103, %v1104
      %v1108 = vshrl.u32 %v1083, 16
      %v1110 = vrot.slane %v1108, 7
      %v1111 = vshll.u32 %v1083, 16
      %v1113 = vor.u32 %v1110, %v1111
      %v1115 = vshrl.u32 %v1084, 16
      %v1117 = vrot.slane %v1115, 7
      %v1118 = vshll.u32 %v1084, 16
      %v1120 = vor.u32 %v1117, %v1118
      %v1122 = vshrl.u32 %v1085, 16
      %v1124 = vrot.slane %v1122, 7
      %v1125 = vshll.u32 %v1085, 16
      %v1127 = vor.u32 %v1124, %v1125
      %v1129 = vshrl.u32 %v1086, 16
      %v1131 = vrot.slane %v1129, 7
      %v1132 = vshll.u32 %v1086, 16
      %v1134 = vor.u32 %v1131, %v1132
      %v1136 = vshrl.u32 %v1087, 16
      %v1138 = vrot.slane %v1136, 7
      %v1139 = vshll.u32 %v1087, 16
      %v1141 = vor.u32 %v1138, %v1139
      %v1143 = vshrl.u32 %v1088, 16
      %v1145 = vrot.slane %v1143, 7
      %v1146 = vshll.u32 %v1088, 16
      %v1148 = vor.u32 %v1145, %v1146
      %v1150 = vshrl.u32 %v1089, 16
      %v1152 = vrot.slane %v1150, 7
      %v1153 = vshll.u32 %v1089, 16
      %v1155 = vor.u32 %v1152, %v1153
      %v1157 = vshrl.u32 %v1090, 16
      %v1159 = vrot.slane %v1157, 7
      %v1160 = vshll.u32 %v1090, 16
      %v1162 = vor.u32 %v1159, %v1160
      %v1164 = vshrl.u32 %v1091, 16
      %v1166 = vrot.slane %v1164, 7
      %v1167 = vshll.u32 %v1091, 16
      %v1169 = vor.u32 %v1166, %v1167
      %v1171 = vshrl.u32 %v1092, 16
      %v1173 = vrot.slane %v1171, 7
      %v1174 = vshll.u32 %v1092, 16
      %v1176 = vor.u32 %v1173, %v1174
      %v1178 = vshrl.u32 %v1093, 16
      %v1180 = vrot.slane %v1178, 7
      %v1181 = vshll.u32 %v1093, 16
      %v1183 = vor.u32 %v1180, %v1181
      %v1185 = vshrl.u32 %v1094, 16
      %v1187 = vrot.slane %v1185, 7
      %v1188 = vshll.u32 %v1094, 16
      %v1190 = vor.u32 %v1187, %v1188
      %v1192 = vshrl.u32 %v1095, 16
      %v1194 = vrot.slane %v1192, 7
      %v1195 = vshll.u32 %v1095, 16
      %v1197 = vor.u32 %v1194, %v1195
      %v1199 = vshrl.u32 %v1096, 16
      %v1201 = vrot.slane %v1199, 7
      %v1202 = vshll.u32 %v1096, 16
      %v1204 = vor.u32 %v1201, %v1202
      %v1206 = vshrl.u32 %v1097, 16
      %v1208 = vrot.slane %v1206, 7
      %v1209 = vshll.u32 %v1097, 16
      %v1211 = vor.u32 %v1208, %v1209
      %v1213 = vshrl.u32 %v1098, 16
      %v1215 = vrot.slane %v1213, 7
      %v1216 = vshll.u32 %v1098, 16
      %v1218 = vor.u32 %v1215, %v1216
      %v1220 = vshrl.u32 %v1099, 16
      %v1222 = vrot.slane %v1220, 7
      %v1223 = vshll.u32 %v1099, 16
      %v1225 = vor.u32 %v1222, %v1223
      %vm1244 = vcmask 1040384
      %vm1245 = vsmask.f32 256
      %vm1246 = vmand %vm1244, %vm1245
      %v1247 = vsel %vm1246, 0, %v1106
      %v1248 = vsel %vm1246, 0, %v1113
      %v1249 = vsel %vm1246, 0, %v1120
      %v1250 = vsel %vm1246, 0, %v1127
      %v1251 = vsel %vm1246, 0, %v1134
      %v1252 = vsel %vm1246, 0, %v1141
      %v1253 = vsel %vm1246, 0, %v1148
      %v1254 = vsel %vm1246, 0, %v1155
      %v1255 = vsel %vm1246, 0, %v1162
      %v1256 = vsel %vm1246, 0, %v1169
      %v1257 = vsel %vm1246, 0, %v1176
      %v1258 = vsel %vm1246, 0, %v1183
      %v1259 = vsel %vm1246, 0, %v1190
      %v1260 = vsel %vm1246, 0, %v1197
      %v1261 = vsel %vm1246, 0, %v1204
      %v1262 = vsel %vm1246, 0, %v1211
      %v1263 = vsel %vm1246, 0, %v1218
      %v1264 = vsel %vm1246, 0, %v1225
      %v1265 = vrot.slane %v1104, 1
      %v1266 = vor.u32 %v1101, %v1265
      %v1267 = vrot.slane %v1111, 1
      %v1268 = vor.u32 %v1108, %v1267
      %v1269 = vrot.slane %v1118, 1
      %v1270 = vor.u32 %v1115, %v1269
      %v1271 = vrot.slane %v1125, 1
      %v1272 = vor.u32 %v1122, %v1271
      %v1273 = vrot.slane %v1132, 1
      %v1274 = vor.u32 %v1129, %v1273
      %v1275 = vrot.slane %v1139, 1
      %v1276 = vor.u32 %v1136, %v1275
      %v1277 = vrot.slane %v1146, 1
      %v1278 = vor.u32 %v1143, %v1277
      %v1279 = vrot.slane %v1153, 1
      %v1280 = vor.u32 %v1150, %v1279
      %v1281 = vrot.slane %v1160, 1
      %v1282 = vor.u32 %v1157, %v1281
      %v1283 = vrot.slane %v1167, 1
      %v1284 = vor.u32 %v1164, %v1283
      %v1285 = vrot.slane %v1174, 1
      %v1286 = vor.u32 %v1171, %v1285
      %v1287 = vrot.slane %v1181, 1
      %v1288 = vor.u32 %v1178, %v1287
      %v1289 = vrot.slane %v1188, 1
      %v1290 = vor.u32 %v1185, %v1289
      %v1291 = vrot.slane %v1195, 1
      %v1292 = vor.u32 %v1192, %v1291
      %v1293 = vrot.slane %v1202, 1
      %v1294 = vor.u32 %v1199, %v1293
      %v1295 = vrot.slane %v1209, 1
      %v1296 = vor.u32 %v1206, %v1295
      %v1297 = vrot.slane %v1216, 1
      %v1298 = vor.u32 %v1213, %v1297
      %v1299 = vrot.slane %v1223, 1
      %v1300 = vor.u32 %v1220, %v1299
      %vm1319 = vcmask 1047552
      %vm1320 = vsmask.f32 7424
      %vm1321 = vmand %vm1319, %vm1320
      %v1322 = vsel %vm1321, %v1266, 0
      %v1323 = vsel %vm1321, %v1268, 0
      %v1324 = vsel %vm1321, %v1270, 0
      %v1325 = vsel %vm1321, %v1272, 0
      %v1326 = vsel %vm1321, %v1274, 0
      %v1327 = vsel %vm1321, %v1276, 0
      %v1328 = vsel %vm1321, %v1278, 0
      %v1329 = vsel %vm1321, %v1280, 0
      %v1330 = vsel %vm1321, %v1282, 0
      %v1331 = vsel %vm1321, %v1284, 0
      %v1332 = vsel %vm1321, %v1286, 0
      %v1333 = vsel %vm1321, %v1288, 0
      %v1334 = vsel %vm1321, %v1290, 0
      %v1335 = vsel %vm1321, %v1292, 0
      %v1336 = vsel %vm1321, %v1294, 0
      %v1337 = vsel %vm1321, %v1296, 0
      %v1338 = vsel %vm1321, %v1298, 0
      %v1339 = vsel %vm1321, %v1300, 0
      %1358 = vrot.lane.b32.xlu0 %v1082, 4
      %v1359 = vpop.permute.xlu0 %1358
      %1360 = vrot.lane.b32.xlu0 %v1083, 4
      %v1361 = vpop.permute.xlu0 %1360
      %1362 = vrot.lane.b32.xlu0 %v1084, 4
      %v1363 = vpop.permute.xlu0 %1362
      %1364 = vrot.lane.b32.xlu0 %v1085, 4
      %v1365 = vpop.permute.xlu0 %1364
      %1366 = vrot.lane.b32.xlu0 %v1086, 4
      %v1367 = vpop.permute.xlu0 %1366
      %1368 = vrot.lane.b32.xlu0 %v1087, 4
      %v1369 = vpop.permute.xlu0 %1368
      %1370 = vrot.lane.b32.xlu0 %v1088, 4
      %v1371 = vpop.permute.xlu0 %1370
      %1372 = vrot.lane.b32.xlu0 %v1089, 4
      %v1373 = vpop.permute.xlu0 %1372
      %1374 = vrot.lane.b32.xlu0 %v1090, 4
      %v1375 = vpop.permute.xlu0 %1374
      %1376 = vrot.lane.b32.xlu0 %v1091, 4
      %v1377 = vpop.permute.xlu0 %1376
      %1378 = vrot.lane.b32.xlu0 %v1092, 4
      %v1379 = vpop.permute.xlu0 %1378
      %1380 = vrot.lane.b32.xlu0 %v1093, 4
      %v1381 = vpop.permute.xlu0 %1380
      %1382 = vrot.lane.b32.xlu0 %v1094, 4
      %v1383 = vpop.permute.xlu0 %1382
      %1384 = vrot.lane.b32.xlu0 %v1095, 4
      %v1385 = vpop.permute.xlu0 %1384
      %1386 = vrot.lane.b32.xlu0 %v1096, 4
      %v1387 = vpop.permute.xlu0 %1386
      %1388 = vrot.lane.b32.xlu0 %v1097, 4
      %v1389 = vpop.permute.xlu0 %1388
      %1390 = vrot.lane.b32.xlu0 %v1098, 4
      %v1391 = vpop.permute.xlu0 %1390
      %1392 = vrot.lane.b32.xlu0 %v1099, 4
      %v1393 = vpop.permute.xlu0 %1392
      %1412 = vrot.lane.b32.xlu0 %v1322, 8
      %v1413 = vpop.permute.xlu0 %1412
      %1414 = vrot.lane.b32.xlu0 %v1323, 8
      %v1415 = vpop.permute.xlu0 %1414
      %1416 = vrot.lane.b32.xlu0 %v1324, 8
      %v1417 = vpop.permute.xlu0 %1416
      %1418 = vrot.lane.b32.xlu0 %v1325, 8
      %v1419 = vpop.permute.xlu0 %1418
      %1420 = vrot.lane.b32.xlu0 %v1326, 8
      %v1421 = vpop.permute.xlu0 %1420
      %1422 = vrot.lane.b32.xlu0 %v1327, 8
      %v1423 = vpop.permute.xlu0 %1422
      %1424 = vrot.lane.b32.xlu0 %v1328, 8
      %v1425 = vpop.permute.xlu0 %1424
      %1426 = vrot.lane.b32.xlu0 %v1329, 8
      %v1427 = vpop.permute.xlu0 %1426
      %1428 = vrot.lane.b32.xlu0 %v1330, 8
      %v1429 = vpop.permute.xlu0 %1428
      %1430 = vrot.lane.b32.xlu0 %v1331, 8
      %v1431 = vpop.permute.xlu0 %1430
      %1432 = vrot.lane.b32.xlu0 %v1332, 8
      %v1433 = vpop.permute.xlu0 %1432
      %1434 = vrot.lane.b32.xlu0 %v1333, 8
      %v1435 = vpop.permute.xlu0 %1434
      %1436 = vrot.lane.b32.xlu0 %v1334, 8
      %v1437 = vpop.permute.xlu0 %1436
      %1438 = vrot.lane.b32.xlu0 %v1335, 8
      %v1439 = vpop.permute.xlu0 %1438
      %1440 = vrot.lane.b32.xlu0 %v1336, 8
      %v1441 = vpop.permute.xlu0 %1440
      %1442 = vrot.lane.b32.xlu0 %v1337, 8
      %v1443 = vpop.permute.xlu0 %1442
      %1444 = vrot.lane.b32.xlu0 %v1338, 8
      %v1445 = vpop.permute.xlu0 %1444
      %1446 = vrot.lane.b32.xlu0 %v1339, 8
      %v1447 = vpop.permute.xlu0 %1446
      %v1450 = vsel %vm582, %v1247, %v1359
      %v1453 = vsel %vm582, %v1248, %v1361
      %v1456 = vsel %vm582, %v1249, %v1363
      %v1459 = vsel %vm582, %v1250, %v1365
      %v1462 = vsel %vm582, %v1251, %v1367
      %v1465 = vsel %vm582, %v1252, %v1369
      %v1468 = vsel %vm582, %v1253, %v1371
      %v1471 = vsel %vm582, %v1254, %v1373
      %v1474 = vsel %vm582, %v1255, %v1375
      %v1477 = vsel %vm582, %v1256, %v1377
      %v1480 = vsel %vm582, %v1257, %v1379
      %v1483 = vsel %vm582, %v1258, %v1381
      %v1486 = vsel %vm582, %v1259, %v1383
      %v1489 = vsel %vm582, %v1260, %v1385
      %v1492 = vsel %vm582, %v1261, %v1387
      %v1495 = vsel %vm582, %v1262, %v1389
      %v1498 = vsel %vm582, %v1263, %v1391
      %v1501 = vsel %vm582, %v1264, %v1393
      %vm1502 = vcmask 64512
      %v1504 = vsel %vm1502, %v1450, %v1413
      %v1506 = vsel %vm1502, %v1453, %v1415
      %v1508 = vsel %vm1502, %v1456, %v1417
      %v1510 = vsel %vm1502, %v1459, %v1419
      %v1512 = vsel %vm1502, %v1462, %v1421
      %v1514 = vsel %vm1502, %v1465, %v1423
      %v1516 = vsel %vm1502, %v1468, %v1425
      %v1518 = vsel %vm1502, %v1471, %v1427
      %v1520 = vsel %vm1502, %v1474, %v1429
      %v1522 = vsel %vm1502, %v1477, %v1431
      %v1524 = vsel %vm1502, %v1480, %v1433
      %v1526 = vsel %vm1502, %v1483, %v1435
      %v1528 = vsel %vm1502, %v1486, %v1437
      %v1530 = vsel %vm1502, %v1489, %v1439
      %v1532 = vsel %vm1502, %v1492, %v1441
      %v1534 = vsel %vm1502, %v1495, %v1443
      %v1536 = vsel %vm1502, %v1498, %v1445
      %v1538 = vsel %vm1502, %v1501, %v1447
      %1555 = vrot.lane.b32.xlu0 %v1506, 12
      %v1556 = vpop.permute.xlu0 %1555
      %1557 = vrot.lane.b32.xlu0 %v1508, 12
      %v1558 = vpop.permute.xlu0 %1557
      %1559 = vrot.lane.b32.xlu0 %v1510, 12
      %v1560 = vpop.permute.xlu0 %1559
      %1561 = vrot.lane.b32.xlu0 %v1512, 12
      %v1562 = vpop.permute.xlu0 %1561
      %1563 = vrot.lane.b32.xlu0 %v1514, 12
      %v1564 = vpop.permute.xlu0 %1563
      %1565 = vrot.lane.b32.xlu0 %v1516, 12
      %v1566 = vpop.permute.xlu0 %1565
      %1567 = vrot.lane.b32.xlu0 %v1518, 12
      %v1568 = vpop.permute.xlu0 %1567
      %1569 = vrot.lane.b32.xlu0 %v1520, 12
      %v1570 = vpop.permute.xlu0 %1569
      %1571 = vrot.lane.b32.xlu0 %v1522, 12
      %v1572 = vpop.permute.xlu0 %1571
      %1573 = vrot.lane.b32.xlu0 %v1524, 12
      %v1574 = vpop.permute.xlu0 %1573
      %1575 = vrot.lane.b32.xlu0 %v1526, 12
      %v1576 = vpop.permute.xlu0 %1575
      %1577 = vrot.lane.b32.xlu0 %v1528, 12
      %v1578 = vpop.permute.xlu0 %1577
      %1579 = vrot.lane.b32.xlu0 %v1530, 12
      %v1580 = vpop.permute.xlu0 %1579
      %1581 = vrot.lane.b32.xlu0 %v1532, 12
      %v1582 = vpop.permute.xlu0 %1581
      %1583 = vrot.lane.b32.xlu0 %v1534, 12
      %v1584 = vpop.permute.xlu0 %1583
      %1585 = vrot.lane.b32.xlu0 %v1536, 12
      %v1586 = vpop.permute.xlu0 %1585
      %1588 = vrot.lane.b32.xlu0 %v1508, 24
      %v1589 = vpop.permute.xlu0 %1588
      %1590 = vrot.lane.b32.xlu0 %v1510, 24
      %v1591 = vpop.permute.xlu0 %1590
      %1592 = vrot.lane.b32.xlu0 %v1512, 24
      %v1593 = vpop.permute.xlu0 %1592
      %1594 = vrot.lane.b32.xlu0 %v1514, 24
      %v1595 = vpop.permute.xlu0 %1594
      %1596 = vrot.lane.b32.xlu0 %v1516, 24
      %v1597 = vpop.permute.xlu0 %1596
      %1598 = vrot.lane.b32.xlu0 %v1518, 24
      %v1599 = vpop.permute.xlu0 %1598
      %1600 = vrot.lane.b32.xlu0 %v1520, 24
      %v1601 = vpop.permute.xlu0 %1600
      %1602 = vrot.lane.b32.xlu0 %v1522, 24
      %v1603 = vpop.permute.xlu0 %1602
      %1604 = vrot.lane.b32.xlu0 %v1524, 24
      %v1605 = vpop.permute.xlu0 %1604
      %1606 = vrot.lane.b32.xlu0 %v1526, 24
      %v1607 = vpop.permute.xlu0 %1606
      %1608 = vrot.lane.b32.xlu0 %v1528, 24
      %v1609 = vpop.permute.xlu0 %1608
      %1610 = vrot.lane.b32.xlu0 %v1530, 24
      %v1611 = vpop.permute.xlu0 %1610
      %1612 = vrot.lane.b32.xlu0 %v1532, 24
      %v1613 = vpop.permute.xlu0 %1612
      %1614 = vrot.lane.b32.xlu0 %v1534, 24
      %v1615 = vpop.permute.xlu0 %1614
      %1616 = vrot.lane.b32.xlu0 %v1536, 24
      %v1617 = vpop.permute.xlu0 %1616
      %1618 = vrot.lane.b32.xlu0 %v1538, 24
      %v1619 = vpop.permute.xlu0 %1618
      %vm1620 = vcmask 97280
      %v1622 = vsel %vm1620, %v1504, %v1556
      %v1624 = vsel %vm1620, %v1506, %v1558
      %v1626 = vsel %vm1620, %v1508, %v1560
      %v1628 = vsel %vm1620, %v1510, %v1562
      %v1630 = vsel %vm1620, %v1512, %v1564
      %v1632 = vsel %vm1620, %v1514, %v1566
      %v1634 = vsel %vm1620, %v1516, %v1568
      %v1636 = vsel %vm1620, %v1518, %v1570
      %v1638 = vsel %vm1620, %v1520, %v1572
      %v1640 = vsel %vm1620, %v1522, %v1574
      %v1642 = vsel %vm1620, %v1524, %v1576
      %v1644 = vsel %vm1620, %v1526, %v1578
      %v1646 = vsel %vm1620, %v1528, %v1580
      %v1648 = vsel %vm1620, %v1530, %v1582
      %v1650 = vsel %vm1620, %v1532, %v1584
      %v1652 = vsel %vm1620, %v1534, %v1586
      %vm1653 = vcmask 195584
      %v1655 = vsel %vm1653, %v1622, %v1589
      %v1657 = vsel %vm1653, %v1624, %v1591
      %v1659 = vsel %vm1653, %v1626, %v1593
      %v1661 = vsel %vm1653, %v1628, %v1595
      %v1663 = vsel %vm1653, %v1630, %v1597
      %v1665 = vsel %vm1653, %v1632, %v1599
      %v1667 = vsel %vm1653, %v1634, %v1601
      %v1669 = vsel %vm1653, %v1636, %v1603
      %v1671 = vsel %vm1653, %v1638, %v1605
      %v1673 = vsel %vm1653, %v1640, %v1607
      %v1675 = vsel %vm1653, %v1642, %v1609
      %v1677 = vsel %vm1653, %v1644, %v1611
      %v1679 = vsel %vm1653, %v1646, %v1613
      %v1681 = vsel %vm1653, %v1648, %v1615
      %v1683 = vsel %vm1653, %v1650, %v1617
      %v1685 = vsel %vm1653, %v1652, %v1619
      %v1686 = vld [vmem:[%s5] sm:$0xf]
      %v1687 = vld [vmem:[%s5 + $0x4] sm:$0xf]
      %v1688 = vld [vmem:[%s5 + $0x8] sm:$0xf]
      %v1689 = vld [vmem:[%s5 + $0xc] sm:$0xf]
      %v1690 = vld [vmem:[%s5 + $0x10] sm:$0x3]
      %v1691 = vld [vmem:[%s6] sm:$0x1]
      %v1693 = vlaneseq
      %v1694 = vshrl.u32 %v1693, 7
      %v1695 = vsub.s32 0, %v1694
      %v1696 = vrot.slane %v1691, %v1695
      %v1703 = vunpack.c.l.b16 %v1686
      %v1704 = vunpack.c.l.b16 %v1687
      %v1705 = vunpack.c.l.b16 %v1688
      %v1706 = vunpack.c.l.b16 %v1689
      %v1707 = vunpack.c.l.b16 %v1690
      %v1708 = vpack.c.b16 %v1704, %v1703
      %v1709 = vpack.c.b16 %v1706, %v1705
      %v1710 = vpack.c.b16 %v1707, %v1707
      %vm1713 = vcmask 293888
      %v1714 = vsel %vm1713, %v1655, 0
      %v1716 = vsel %vm1713, %v1657, 0
      %v1718 = vsel %vm1713, %v1659, 0
      %v1720 = vsel %vm1713, %v1661, 0
      %v1722 = vsel %vm1713, %v1663, 0
      %v1724 = vsel %vm1713, %v1665, 0
      %v1726 = vsel %vm1713, %v1667, 0
      %v1728 = vsel %vm1713, %v1669, 0
      %v1730 = vsel %vm1713, %v1671, 0
      %v1732 = vsel %vm1713, %v1673, 0
      %v1734 = vsel %vm1713, %v1675, 0
      %v1736 = vsel %vm1713, %v1677, 0
      %v1738 = vsel %vm1713, %v1679, 0
      %v1740 = vsel %vm1713, %v1681, 0
      %v1742 = vsel %vm1713, %v1683, 0
      %v1744 = vsel %vm1713, %v1685, 0
      %v1747 = vsel %vm637, %v1710, 0
      %1749 = vmatprep.subr.bf16.mxu0 0
      %1750 = vmatpush1.bf16.msra.mxu0 0
      %1751 = vmatprep.subr.bf16.mxu0 0
      %1752 = vmatpush1.bf16.msra.mxu0 0
      %1753 = vmatprep.subr.bf16.mxu0 0
      %1754 = vmatpush1.bf16.msra.mxu0 0
      %1755 = vmatprep.subr.bf16.mxu0 0
      %1756 = vmatpush1.bf16.msra.mxu0 0
      %1757 = vmatprep.subr.bf16.mxu0 0
      %1758 = vmatpush1.bf16.msra.mxu0 0
      %1759 = vmatprep.subr.bf16.mxu0 0
      %1760 = vmatpush1.bf16.msra.mxu0 %v1747
      %1761 = vmatprep.subr.bf16.mxu0 0
      %1762 = vmatpush1.bf16.msra.mxu0 %v1709
      %1763 = vmatprep.subr.bf16.mxu0 0
      %1764 = vmatpush1.bf16.msra.mxu0 %v1708
      %1765 = vmatprep.subr.bf16.mxu0 0
      %1766 = vmatpush2.bf16.msra.mxu0 0
      %1767 = vmatprep.subr.bf16.mxu0 0
      %1768 = vmatpush2.bf16.msra.mxu0 0
      %1769 = vmatprep.subr.bf16.mxu0 0
      %1770 = vmatpush2.bf16.msra.mxu0 0
      %1771 = vmatprep.subr.bf16.mxu0 0
      %1772 = vmatpush2.bf16.msra.mxu0 0
      %1773 = vmatprep.subr.bf16.mxu0 0
      %1774 = vmatpush2.bf16.msra.mxu0 0
      %1775 = vmatprep.subr.bf16.mxu0 0
      %1776 = vmatpush2.bf16.msra.mxu0 0
      %1777 = vmatprep.subr.bf16.mxu0 0
      %1778 = vmatpush2.bf16.msra.mxu0 0
      %1779 = vmatprep.subr.bf16.mxu0 0
      %1780 = vmatpush2.bf16.msra.mxu0 0
      %1781 = vmatprep.mubr.bf16.mxu0 0
      %1782 = vmatmul.mubr.bf16.gmra.mxu0 %v1714
      %v1783 = vpop.f32.mrf.mxu0
      %v1784 = vadd.f32 %v1696, %v1783
      %v1785 = vpop.f32.mrf.mxu0
      %v1786 = vpop.f32.mrf.mxu0
      %v1787 = vadd.f32 %v1696, %v1786
      %v1788 = vpop.f32.mrf.mxu0
      %1789 = vmatprep.mubr.bf16.mxu0 0
      %1790 = vmatmul.mubr.bf16.gmra.mxu0 %v1716
      %v1791 = vpop.f32.mrf.mxu0
      %v1792 = vadd.f32 %v1696, %v1791
      %v1793 = vpop.f32.mrf.mxu0
      %v1794 = vpop.f32.mrf.mxu0
      %v1795 = vadd.f32 %v1696, %v1794
      %v1796 = vpop.f32.mrf.mxu0
      %1797 = vmatprep.mubr.bf16.mxu0 0
      %1798 = vmatmul.mubr.bf16.gmra.mxu0 %v1718
      %v1799 = vpop.f32.mrf.mxu0
      %v1800 = vadd.f32 %v1696, %v1799
      %v1801 = vpop.f32.mrf.mxu0
      %v1802 = vpop.f32.mrf.mxu0
      %v1803 = vadd.f32 %v1696, %v1802
      %v1804 = vpop.f32.mrf.mxu0
      %1805 = vmatprep.mubr.bf16.mxu0 0
      %1806 = vmatmul.mubr.bf16.gmra.mxu0 %v1720
      %v1807 = vpop.f32.mrf.mxu0
      %v1808 = vadd.f32 %v1696, %v1807
      %v1809 = vpop.f32.mrf.mxu0
      %v1810 = vpop.f32.mrf.mxu0
      %v1811 = vadd.f32 %v1696, %v1810
      %v1812 = vpop.f32.mrf.mxu0
      %1813 = vmatprep.mubr.bf16.mxu0 0
      %1814 = vmatmul.mubr.bf16.gmra.mxu0 %v1722
      %v1815 = vpop.f32.mrf.mxu0
      %v1816 = vadd.f32 %v1696, %v1815
      %v1817 = vpop.f32.mrf.mxu0
      %v1818 = vpop.f32.mrf.mxu0
      %v1819 = vadd.f32 %v1696, %v1818
      %v1820 = vpop.f32.mrf.mxu0
      %1821 = vmatprep.mubr.bf16.mxu0 0
      %1822 = vmatmul.mubr.bf16.gmra.mxu0 %v1724
      %v1823 = vpop.f32.mrf.mxu0
      %v1824 = vadd.f32 %v1696, %v1823
      %v1825 = vpop.f32.mrf.mxu0
      %v1826 = vpop.f32.mrf.mxu0
      %v1827 = vadd.f32 %v1696, %v1826
      %v1828 = vpop.f32.mrf.mxu0
      %1829 = vmatprep.mubr.bf16.mxu0 0
      %1830 = vmatmul.mubr.bf16.gmra.mxu0 %v1726
      %v1831 = vpop.f32.mrf.mxu0
      %v1832 = vadd.f32 %v1696, %v1831
      %v1833 = vpop.f32.mrf.mxu0
      %v1834 = vpop.f32.mrf.mxu0
      %v1835 = vadd.f32 %v1696, %v1834
      %v1836 = vpop.f32.mrf.mxu0
      %1837 = vmatprep.mubr.bf16.mxu0 0
      %1838 = vmatmul.mubr.bf16.gmra.mxu0 %v1728
      %v1839 = vpop.f32.mrf.mxu0
      %v1840 = vadd.f32 %v1696, %v1839
      %v1841 = vpop.f32.mrf.mxu0
      %v1842 = vpop.f32.mrf.mxu0
      %v1843 = vadd.f32 %v1696, %v1842
      %v1844 = vpop.f32.mrf.mxu0
      %1845 = vmatprep.mubr.bf16.mxu0 0
      %1846 = vmatmul.mubr.bf16.gmra.mxu0 %v1730
      %v1847 = vpop.f32.mrf.mxu0
      %v1848 = vadd.f32 %v1696, %v1847
      %v1849 = vpop.f32.mrf.mxu0
      %v1850 = vpop.f32.mrf.mxu0
      %v1851 = vadd.f32 %v1696, %v1850
      %v1852 = vpop.f32.mrf.mxu0
      %1853 = vmatprep.mubr.bf16.mxu0 0
      %1854 = vmatmul.mubr.bf16.gmra.mxu0 %v1732
      %v1855 = vpop.f32.mrf.mxu0
      %v1856 = vadd.f32 %v1696, %v1855
      %v1857 = vpop.f32.mrf.mxu0
      %v1858 = vpop.f32.mrf.mxu0
      %v1859 = vadd.f32 %v1696, %v1858
      %v1860 = vpop.f32.mrf.mxu0
      %1861 = vmatprep.mubr.bf16.mxu0 0
      %1862 = vmatmul.mubr.bf16.gmra.mxu0 %v1734
      %v1863 = vpop.f32.mrf.mxu0
      %v1864 = vadd.f32 %v1696, %v1863
      %v1865 = vpop.f32.mrf.mxu0
      %v1866 = vpop.f32.mrf.mxu0
      %v1867 = vadd.f32 %v1696, %v1866
      %v1868 = vpop.f32.mrf.mxu0
      %1869 = vmatprep.mubr.bf16.mxu0 0
      %1870 = vmatmul.mubr.bf16.gmra.mxu0 %v1736
      %v1871 = vpop.f32.mrf.mxu0
      %v1872 = vadd.f32 %v1696, %v1871
      %v1873 = vpop.f32.mrf.mxu0
      %v1874 = vpop.f32.mrf.mxu0
      %v1875 = vadd.f32 %v1696, %v1874
      %v1876 = vpop.f32.mrf.mxu0
      %1877 = vmatprep.mubr.bf16.mxu0 0
      %1878 = vmatmul.mubr.bf16.gmra.mxu0 %v1738
      %v1879 = vpop.f32.mrf.mxu0
      %v1880 = vadd.f32 %v1696, %v1879
      %v1881 = vpop.f32.mrf.mxu0
      %v1882 = vpop.f32.mrf.mxu0
      %v1883 = vadd.f32 %v1696, %v1882
      %v1884 = vpop.f32.mrf.mxu0
      %1885 = vmatprep.mubr.bf16.mxu0 0
      %1886 = vmatmul.mubr.bf16.gmra.mxu0 %v1740
      %v1887 = vpop.f32.mrf.mxu0
      %v1888 = vadd.f32 %v1696, %v1887
      %v1889 = vpop.f32.mrf.mxu0
      %v1890 = vpop.f32.mrf.mxu0
      %v1891 = vadd.f32 %v1696, %v1890
      %v1892 = vpop.f32.mrf.mxu0
      %1893 = vmatprep.mubr.bf16.mxu0 0
      %1894 = vmatmul.mubr.bf16.gmra.mxu0 %v1742
      %v1895 = vpop.f32.mrf.mxu0
      %v1896 = vadd.f32 %v1696, %v1895
      %v1897 = vpop.f32.mrf.mxu0
      %v1898 = vpop.f32.mrf.mxu0
      %v1899 = vadd.f32 %v1696, %v1898
      %v1900 = vpop.f32.mrf.mxu0
      %1901 = vmatprep.mubr.bf16.mxu0 0
      %1902 = vmatmul.mubr.bf16.gmra.mxu0 %v1744
      %v1903 = vpop.f32.mrf.mxu0
      %v1904 = vadd.f32 %v1696, %v1903
      %v1905 = vpop.f32.mrf.mxu0
      %v1906 = vpop.f32.mrf.mxu0
      %v1907 = vadd.f32 %v1696, %v1906
      %v1908 = vpop.f32.mrf.mxu0
      %1909 = vdwg.mxu0
      %v1910 = vxor.u32 %v1784, 2147483648
      %v1911 = vxor.u32 %v1787, 2147483648
      %v1912 = vxor.u32 %v1792, 2147483648
      %v1913 = vxor.u32 %v1795, 2147483648
      %v1914 = vxor.u32 %v1800, 2147483648
      %v1915 = vxor.u32 %v1803, 2147483648
      %v1916 = vxor.u32 %v1808, 2147483648
      %v1917 = vxor.u32 %v1811, 2147483648
      %v1918 = vxor.u32 %v1816, 2147483648
      %v1919 = vxor.u32 %v1819, 2147483648
      %v1920 = vxor.u32 %v1824, 2147483648
      %v1921 = vxor.u32 %v1827, 2147483648
      %v1922 = vxor.u32 %v1832, 2147483648
      %v1923 = vxor.u32 %v1835, 2147483648
      %v1924 = vxor.u32 %v1840, 2147483648
      %v1925 = vxor.u32 %v1843, 2147483648
      %v1926 = vxor.u32 %v1848, 2147483648
      %v1927 = vxor.u32 %v1851, 2147483648
      %v1928 = vxor.u32 %v1856, 2147483648
      %v1929 = vxor.u32 %v1859, 2147483648
      %v1930 = vxor.u32 %v1864, 2147483648
      %v1931 = vxor.u32 %v1867, 2147483648
      %v1932 = vxor.u32 %v1872, 2147483648
      %v1933 = vxor.u32 %v1875, 2147483648
      %v1934 = vxor.u32 %v1880, 2147483648
      %v1935 = vxor.u32 %v1883, 2147483648
      %v1936 = vxor.u32 %v1888, 2147483648
      %v1937 = vxor.u32 %v1891, 2147483648
      %v1938 = vxor.u32 %v1896, 2147483648
      %v1939 = vxor.u32 %v1899, 2147483648
      %v1940 = vxor.u32 %v1904, 2147483648
      %v1941 = vxor.u32 %v1907, 2147483648
      %v1942 = vmul.f32 %v1910, 1.442695
      %v1943 = vpow.pop %v1942
      %v1944 = vmul.f32 %v1911, 1.442695
      %v1945 = vpow.pop %v1944
      %v1946 = vmul.f32 %v1912, 1.442695
      %v1947 = vpow.pop %v1946
      %v1948 = vmul.f32 %v1913, 1.442695
      %v1949 = vpow.pop %v1948
      %v1950 = vmul.f32 %v1914, 1.442695
      %v1951 = vpow.pop %v1950
      %v1952 = vmul.f32 %v1915, 1.442695
      %v1953 = vpow.pop %v1952
      %v1954 = vmul.f32 %v1916, 1.442695
      %v1955 = vpow.pop %v1954
      %v1956 = vmul.f32 %v1917, 1.442695
      %v1957 = vpow.pop %v1956
      %v1958 = vmul.f32 %v1918, 1.442695
      %v1959 = vpow.pop %v1958
      %v1960 = vmul.f32 %v1919, 1.442695
      %v1961 = vpow.pop %v1960
      %v1962 = vmul.f32 %v1920, 1.442695
      %v1963 = vpow.pop %v1962
      %v1964 = vmul.f32 %v1921, 1.442695
      %v1965 = vpow.pop %v1964
      %v1966 = vmul.f32 %v1922, 1.442695
      %v1967 = vpow.pop %v1966
      %v1968 = vmul.f32 %v1923, 1.442695
      %v1969 = vpow.pop %v1968
      %v1970 = vmul.f32 %v1924, 1.442695
      %v1971 = vpow.pop %v1970
      %v1972 = vmul.f32 %v1925, 1.442695
      %v1973 = vpow.pop %v1972
      %v1974 = vmul.f32 %v1926, 1.442695
      %v1975 = vpow.pop %v1974
      %v1976 = vmul.f32 %v1927, 1.442695
      %v1977 = vpow.pop %v1976
      %v1978 = vmul.f32 %v1928, 1.442695
      %v1979 = vpow.pop %v1978
      %v1980 = vmul.f32 %v1929, 1.442695
      %v1981 = vpow.pop %v1980
      %v1982 = vmul.f32 %v1930, 1.442695
      %v1983 = vpow.pop %v1982
      %v1984 = vmul.f32 %v1931, 1.442695
      %v1985 = vpow.pop %v1984
      %v1986 = vmul.f32 %v1932, 1.442695
      %v1987 = vpow.pop %v1986
      %v1988 = vmul.f32 %v1933, 1.442695
      %v1989 = vpow.pop %v1988
      %v1990 = vmul.f32 %v1934, 1.442695
      %v1991 = vpow.pop %v1990
      %v1992 = vmul.f32 %v1935, 1.442695
      %v1993 = vpow.pop %v1992
      %v1994 = vmul.f32 %v1936, 1.442695
      %v1995 = vpow.pop %v1994
      %v1996 = vmul.f32 %v1937, 1.442695
      %v1997 = vpow.pop %v1996
      %v1998 = vmul.f32 %v1938, 1.442695
      %v1999 = vpow.pop %v1998
      %v2000 = vmul.f32 %v1939, 1.442695
      %v2001 = vpow.pop %v2000
      %v2002 = vmul.f32 %v1940, 1.442695
      %v2003 = vpow.pop %v2002
      %v2004 = vmul.f32 %v1941, 1.442695
      %v2005 = vpow.pop %v2004
      %v2006 = vadd.f32 %v1943, 1.0
      %v2007 = vadd.f32 %v1945, 1.0
      %v2008 = vadd.f32 %v1947, 1.0
      %v2009 = vadd.f32 %v1949, 1.0
      %v2010 = vadd.f32 %v1951, 1.0
      %v2011 = vadd.f32 %v1953, 1.0
      %v2012 = vadd.f32 %v1955, 1.0
      %v2013 = vadd.f32 %v1957, 1.0
      %v2014 = vadd.f32 %v1959, 1.0
      %v2015 = vadd.f32 %v1961, 1.0
      %v2016 = vadd.f32 %v1963, 1.0
      %v2017 = vadd.f32 %v1965, 1.0
      %v2018 = vadd.f32 %v1967, 1.0
      %v2019 = vadd.f32 %v1969, 1.0
      %v2020 = vadd.f32 %v1971, 1.0
      %v2021 = vadd.f32 %v1973, 1.0
      %v2022 = vadd.f32 %v1975, 1.0
      %v2023 = vadd.f32 %v1977, 1.0
      %v2024 = vadd.f32 %v1979, 1.0
      %v2025 = vadd.f32 %v1981, 1.0
      %v2026 = vadd.f32 %v1983, 1.0
      %v2027 = vadd.f32 %v1985, 1.0
      %v2028 = vadd.f32 %v1987, 1.0
      %v2029 = vadd.f32 %v1989, 1.0
      %v2030 = vadd.f32 %v1991, 1.0
      %v2031 = vadd.f32 %v1993, 1.0
      %v2032 = vadd.f32 %v1995, 1.0
      %v2033 = vadd.f32 %v1997, 1.0
      %v2034 = vadd.f32 %v1999, 1.0
      %v2035 = vadd.f32 %v2001, 1.0
      %v2036 = vadd.f32 %v2003, 1.0
      %v2037 = vadd.f32 %v2005, 1.0
      %v2038 = vrcp.pop %v2006
      %v2039 = vmul.f32 1.0, %v2038
      %v2040 = vrcp.pop %v2007
      %v2041 = vmul.f32 1.0, %v2040
      %v2042 = vrcp.pop %v2008
      %v2043 = vmul.f32 1.0, %v2042
      %v2044 = vrcp.pop %v2009
      %v2045 = vmul.f32 1.0, %v2044
      %v2046 = vrcp.pop %v2010
      %v2047 = vmul.f32 1.0, %v2046
      %v2048 = vrcp.pop %v2011
      %v2049 = vmul.f32 1.0, %v2048
      %v2050 = vrcp.pop %v2012
      %v2051 = vmul.f32 1.0, %v2050
      %v2052 = vrcp.pop %v2013
      %v2053 = vmul.f32 1.0, %v2052
      %v2054 = vrcp.pop %v2014
      %v2055 = vmul.f32 1.0, %v2054
      %v2056 = vrcp.pop %v2015
      %v2057 = vmul.f32 1.0, %v2056
      %v2058 = vrcp.pop %v2016
      %v2059 = vmul.f32 1.0, %v2058
      %v2060 = vrcp.pop %v2017
      %v2061 = vmul.f32 1.0, %v2060
      %v2062 = vrcp.pop %v2018
      %v2063 = vmul.f32 1.0, %v2062
      %v2064 = vrcp.pop %v2019
      %v2065 = vmul.f32 1.0, %v2064
      %v2066 = vrcp.pop %v2020
      %v2067 = vmul.f32 1.0, %v2066
      %v2068 = vrcp.pop %v2021
      %v2069 = vmul.f32 1.0, %v2068
      %v2070 = vrcp.pop %v2022
      %v2071 = vmul.f32 1.0, %v2070
      %v2072 = vrcp.pop %v2023
      %v2073 = vmul.f32 1.0, %v2072
      %v2074 = vrcp.pop %v2024
      %v2075 = vmul.f32 1.0, %v2074
      %v2076 = vrcp.pop %v2025
      %v2077 = vmul.f32 1.0, %v2076
      %v2078 = vrcp.pop %v2026
      %v2079 = vmul.f32 1.0, %v2078
      %v2080 = vrcp.pop %v2027
      %v2081 = vmul.f32 1.0, %v2080
      %v2082 = vrcp.pop %v2028
      %v2083 = vmul.f32 1.0, %v2082
      %v2084 = vrcp.pop %v2029
      %v2085 = vmul.f32 1.0, %v2084
      %v2086 = vrcp.pop %v2030
      %v2087 = vmul.f32 1.0, %v2086
      %v2088 = vrcp.pop %v2031
      %v2089 = vmul.f32 1.0, %v2088
      %v2090 = vrcp.pop %v2032
      %v2091 = vmul.f32 1.0, %v2090
      %v2092 = vrcp.pop %v2033
      %v2093 = vmul.f32 1.0, %v2092
      %v2094 = vrcp.pop %v2034
      %v2095 = vmul.f32 1.0, %v2094
      %v2096 = vrcp.pop %v2035
      %v2097 = vmul.f32 1.0, %v2096
      %v2098 = vrcp.pop %v2036
      %v2099 = vmul.f32 1.0, %v2098
      %v2100 = vrcp.pop %v2037
      %v2101 = vmul.f32 1.0, %v2100
      %v2102 = vmul.f32 %v1784, %v2039
      %v2103 = vmul.f32 %v1787, %v2041
      %v2104 = vmul.f32 %v1792, %v2043
      %v2105 = vmul.f32 %v1795, %v2045
      %v2106 = vmul.f32 %v1800, %v2047
      %v2107 = vmul.f32 %v1803, %v2049
      %v2108 = vmul.f32 %v1808, %v2051
      %v2109 = vmul.f32 %v1811, %v2053
      %v2110 = vmul.f32 %v1816, %v2055
      %v2111 = vmul.f32 %v1819, %v2057
      %v2112 = vmul.f32 %v1824, %v2059
      %v2113 = vmul.f32 %v1827, %v2061
      %v2114 = vmul.f32 %v1832, %v2063
      %v2115 = vmul.f32 %v1835, %v2065
      %v2116 = vmul.f32 %v1840, %v2067
      %v2117 = vmul.f32 %v1843, %v2069
      %v2118 = vmul.f32 %v1848, %v2071
      %v2119 = vmul.f32 %v1851, %v2073
      %v2120 = vmul.f32 %v1856, %v2075
      %v2121 = vmul.f32 %v1859, %v2077
      %v2122 = vmul.f32 %v1864, %v2079
      %v2123 = vmul.f32 %v1867, %v2081
      %v2124 = vmul.f32 %v1872, %v2083
      %v2125 = vmul.f32 %v1875, %v2085
      %v2126 = vmul.f32 %v1880, %v2087
      %v2127 = vmul.f32 %v1883, %v2089
      %v2128 = vmul.f32 %v1888, %v2091
      %v2129 = vmul.f32 %v1891, %v2093
      %v2130 = vmul.f32 %v1896, %v2095
      %v2131 = vmul.f32 %v1899, %v2097
      %v2132 = vmul.f32 %v1904, %v2099
      %v2133 = vmul.f32 %v1907, %v2101
      %v2134 = vunpack.c.l.bf16 %v450
      %v2135 = vunpack.c.l.bf16 %v451
      %v2136 = vunpack.c.l.bf16 %v452
      %v2137 = vunpack.c.l.bf16 %v453
      %v2138 = vunpack.c.l.bf16 %v454
      %v2139 = vunpack.c.l.bf16 %v455
      %v2140 = vunpack.c.l.bf16 %v456
      %v2141 = vunpack.c.l.bf16 %v457
      %v2142 = vunpack.c.l.bf16 %v458
      %v2143 = vunpack.c.l.bf16 %v459
      %v2144 = vunpack.c.l.bf16 %v460
      %v2145 = vunpack.c.l.bf16 %v461
      %v2146 = vunpack.c.l.bf16 %v462
      %v2147 = vunpack.c.l.bf16 %v463
      %v2148 = vunpack.c.l.bf16 %v464
      %v2149 = vunpack.c.l.bf16 %v465
      %v2150 = vunpack.c.l.bf16 %v466
      %v2151 = vunpack.c.l.bf16 %v467
      %v2152 = vunpack.c.l.bf16 %v468
      %v2153 = vunpack.c.l.bf16 %v469
      %v2154 = vunpack.c.l.bf16 %v470
      %v2155 = vunpack.c.l.bf16 %v471
      %v2156 = vunpack.c.l.bf16 %v472
      %v2157 = vunpack.c.l.bf16 %v473
      %v2158 = vunpack.c.l.bf16 %v474
      %v2159 = vunpack.c.l.bf16 %v475
      %v2160 = vunpack.c.l.bf16 %v476
      %v2161 = vunpack.c.l.bf16 %v477
      %v2162 = vunpack.c.l.bf16 %v478
      %v2163 = vunpack.c.l.bf16 %v479
      %v2164 = vunpack.c.l.bf16 %v480
      %v2165 = vunpack.c.l.bf16 %v481
      %v2166 = vadd.f32 %v2102, %v2134
      %v2167 = vadd.f32 %v2103, %v2135
      %v2168 = vadd.f32 %v2104, %v2136
      %v2169 = vadd.f32 %v2105, %v2137
      %v2170 = vadd.f32 %v2106, %v2138
      %v2171 = vadd.f32 %v2107, %v2139
      %v2172 = vadd.f32 %v2108, %v2140
      %v2173 = vadd.f32 %v2109, %v2141
      %v2174 = vadd.f32 %v2110, %v2142
      %v2175 = vadd.f32 %v2111, %v2143
      %v2176 = vadd.f32 %v2112, %v2144
      %v2177 = vadd.f32 %v2113, %v2145
      %v2178 = vadd.f32 %v2114, %v2146
      %v2179 = vadd.f32 %v2115, %v2147
      %v2180 = vadd.f32 %v2116, %v2148
      %v2181 = vadd.f32 %v2117, %v2149
      %v2182 = vadd.f32 %v2118, %v2150
      %v2183 = vadd.f32 %v2119, %v2151
      %v2184 = vadd.f32 %v2120, %v2152
      %v2185 = vadd.f32 %v2121, %v2153
      %v2186 = vadd.f32 %v2122, %v2154
      %v2187 = vadd.f32 %v2123, %v2155
      %v2188 = vadd.f32 %v2124, %v2156
      %v2189 = vadd.f32 %v2125, %v2157
      %v2190 = vadd.f32 %v2126, %v2158
      %v2191 = vadd.f32 %v2127, %v2159
      %v2192 = vadd.f32 %v2128, %v2160
      %v2193 = vadd.f32 %v2129, %v2161
      %v2194 = vadd.f32 %v2130, %v2162
      %v2195 = vadd.f32 %v2131, %v2163
      %v2196 = vadd.f32 %v2132, %v2164
      %v2197 = vadd.f32 %v2133, %v2165
      %v2198 = vpack.c.bf16 %v2167, %v2166
      %v2199 = vpack.c.bf16 %v2169, %v2168
      %v2200 = vpack.c.bf16 %v2171, %v2170
      %v2201 = vpack.c.bf16 %v2173, %v2172
      %v2202 = vpack.c.bf16 %v2175, %v2174
      %v2203 = vpack.c.bf16 %v2177, %v2176
      %v2204 = vpack.c.bf16 %v2179, %v2178
      %v2205 = vpack.c.bf16 %v2181, %v2180
      %v2206 = vpack.c.bf16 %v2183, %v2182
      %v2207 = vpack.c.bf16 %v2185, %v2184
      %v2208 = vpack.c.bf16 %v2187, %v2186
      %v2209 = vpack.c.bf16 %v2189, %v2188
      %v2210 = vpack.c.bf16 %v2191, %v2190
      %v2211 = vpack.c.bf16 %v2193, %v2192
      %v2212 = vpack.c.bf16 %v2195, %v2194
      %v2213 = vpack.c.bf16 %v2197, %v2196
      %v2230 = vunpack.c.l.b16 %v2198
      %v2231 = vunpack.c.h.b16 %v2198
      %v2232 = vunpack.c.l.b16 %v2199
      %v2233 = vunpack.c.h.b16 %v2199
      %v2234 = vunpack.c.l.b16 %v2200
      %v2235 = vunpack.c.h.b16 %v2200
      %v2236 = vunpack.c.l.b16 %v2201
      %v2237 = vunpack.c.h.b16 %v2201
      %v2238 = vunpack.c.l.b16 %v2202
      %v2239 = vunpack.c.h.b16 %v2202
      %v2240 = vunpack.c.l.b16 %v2203
      %v2241 = vunpack.c.h.b16 %v2203
      %v2242 = vunpack.c.l.b16 %v2204
      %v2243 = vunpack.c.h.b16 %v2204
      %v2244 = vunpack.c.l.b16 %v2205
      %v2245 = vunpack.c.h.b16 %v2205
      %v2246 = vunpack.c.l.b16 %v2206
      %v2247 = vunpack.c.h.b16 %v2206
      %v2248 = vunpack.c.l.b16 %v2207
      %v2249 = vunpack.c.h.b16 %v2207
      %v2250 = vunpack.c.l.b16 %v2208
      %v2251 = vunpack.c.h.b16 %v2208
      %v2252 = vunpack.c.l.b16 %v2209
      %v2253 = vunpack.c.h.b16 %v2209
      %v2254 = vunpack.c.l.b16 %v2210
      %v2255 = vunpack.c.h.b16 %v2210
      %v2256 = vunpack.c.l.b16 %v2211
      %v2257 = vunpack.c.h.b16 %v2211
      %v2258 = vunpack.c.l.b16 %v2212
      %v2259 = vunpack.c.h.b16 %v2212
      %v2260 = vunpack.c.l.b16 %v2213
      %v2261 = vunpack.c.h.b16 %v2213
      %v2262 = vpack.c.b16 %v2230, %v2230
      %v2263 = vpack.c.b16 %v2231, %v2231
      %v2264 = vpack.c.b16 %v2232, %v2232
      %v2265 = vpack.c.b16 %v2233, %v2233
      %v2266 = vpack.c.b16 %v2234, %v2234
      %v2267 = vpack.c.b16 %v2235, %v2235
      %v2268 = vpack.c.b16 %v2236, %v2236
      %v2269 = vpack.c.b16 %v2237, %v2237
      %v2270 = vpack.c.b16 %v2238, %v2238
      %v2271 = vpack.c.b16 %v2239, %v2239
      %v2272 = vpack.c.b16 %v2240, %v2240
      %v2273 = vpack.c.b16 %v2241, %v2241
      %v2274 = vpack.c.b16 %v2242, %v2242
      %v2275 = vpack.c.b16 %v2243, %v2243
      %v2276 = vpack.c.b16 %v2244, %v2244
      %v2277 = vpack.c.b16 %v2245, %v2245
      %v2278 = vpack.c.b16 %v2246, %v2246
      %v2279 = vpack.c.b16 %v2247, %v2247
      %v2280 = vpack.c.b16 %v2248, %v2248
      %v2281 = vpack.c.b16 %v2249, %v2249
      %v2282 = vpack.c.b16 %v2250, %v2250
      %v2283 = vpack.c.b16 %v2251, %v2251
      %v2284 = vpack.c.b16 %v2252, %v2252
      %v2285 = vpack.c.b16 %v2253, %v2253
      %v2286 = vpack.c.b16 %v2254, %v2254
      %v2287 = vpack.c.b16 %v2255, %v2255
      %v2288 = vpack.c.b16 %v2256, %v2256
      %v2289 = vpack.c.b16 %v2257, %v2257
      %v2290 = vpack.c.b16 %v2258, %v2258
      %v2291 = vpack.c.b16 %v2259, %v2259
      %v2292 = vpack.c.b16 %v2260, %v2260
      %v2293 = vpack.c.b16 %v2261, %v2261
      %vm2326 = vcmask 27648
      %2327 = vst.msk [vmem:[%s445] sm:$0xf] %vm2326, %v2262
      %2328 = vst.msk [vmem:[%s445 + $0x4] sm:$0xf] %vm2326, %v2263
      %2329 = vst.msk [vmem:[%s445 + $0x8] sm:$0xf] %vm2326, %v2264
      %2330 = vst.msk [vmem:[%s445 + $0xc] sm:$0xf] %vm2326, %v2265
      %2331 = vst.msk [vmem:[%s445 + $0x10] sm:$0xf] %vm2326, %v2266
      %2332 = vst.msk [vmem:[%s445 + $0x14] sm:$0xf] %vm2326, %v2267
      %2333 = vst.msk [vmem:[%s445 + $0x18] sm:$0xf] %vm2326, %v2268
      %2334 = vst.msk [vmem:[%s445 + $0x1c] sm:$0xf] %vm2326, %v2269
      %2335 = vst.msk [vmem:[%s445 + $0x20] sm:$0xf] %vm2326, %v2270
      %2336 = vst.msk [vmem:[%s445 + $0x24] sm:$0xf] %vm2326, %v2271
      %2337 = vst.msk [vmem:[%s445 + $0x28] sm:$0xf] %vm2326, %v2272
      %2338 = vst.msk [vmem:[%s445 + $0x2c] sm:$0xf] %vm2326, %v2273
      %2339 = vst.msk [vmem:[%s445 + $0x30] sm:$0xf] %vm2326, %v2274
      %2340 = vst.msk [vmem:[%s445 + $0x34] sm:$0xf] %vm2326, %v2275
      %2341 = vst.msk [vmem:[%s445 + $0x38] sm:$0xf] %vm2326, %v2276
      %2342 = vst.msk [vmem:[%s445 + $0x3c] sm:$0xf] %vm2326, %v2277
      %2343 = vst.msk [vmem:[%s445 + $0x40] sm:$0xf] %vm2326, %v2278
      %2344 = vst.msk [vmem:[%s445 + $0x44] sm:$0xf] %vm2326, %v2279
      %2345 = vst.msk [vmem:[%s445 + $0x48] sm:$0xf] %vm2326, %v2280
      %2346 = vst.msk [vmem:[%s445 + $0x4c] sm:$0xf] %vm2326, %v2281
      %2347 = vst.msk [vmem:[%s445 + $0x50] sm:$0xf] %vm2326, %v2282
      %2348 = vst.msk [vmem:[%s445 + $0x54] sm:$0xf] %vm2326, %v2283
      %2349 = vst.msk [vmem:[%s445 + $0x58] sm:$0xf] %vm2326, %v2284
      %2350 = vst.msk [vmem:[%s445 + $0x5c] sm:$0xf] %vm2326, %v2285
      %2351 = vst.msk [vmem:[%s445 + $0x60] sm:$0xf] %vm2326, %v2286
      %2352 = vst.msk [vmem:[%s445 + $0x64] sm:$0xf] %vm2326, %v2287
      %2353 = vst.msk [vmem:[%s445 + $0x68] sm:$0xf] %vm2326, %v2288
      %2354 = vst.msk [vmem:[%s445 + $0x6c] sm:$0xf] %vm2326, %v2289
      %2355 = vst.msk [vmem:[%s445 + $0x70] sm:$0xf] %vm2326, %v2290
      %2356 = vst.msk [vmem:[%s445 + $0x74] sm:$0xf] %vm2326, %v2291
      %2357 = vst.msk [vmem:[%s445 + $0x78] sm:$0xf] %vm2326, %v2292
      %2358 = vst.msk [vmem:[%s445 + $0x7c] sm:$0xf] %vm2326, %v2293
      %s2359 = smul.u32 16, %s23
      %p2360 = scmp.lt.s32.totalorder %s22, 1
      %s2361 = scalar_select %p2360, %s22, 1
      %p2362 = scmp.lt.s32.totalorder %s2359, 15
      %s2363 = scalar_select %p2362, %s2359, 15
      %s2364 = smul.addr %s2363, 2
      %s2365 = smul.addr %s2361, 32
      %s2366 = sadd.s32 %s2364, %s2365
      %s2367 = smul.addr %s2366, 4
      %s2368 = scalar_lea.vmem %s7, %s2367
      // Predicated region
      $region49: #{_lambda_.4} parent=47 // pred_check
        %p2369 = pneg %p234
      $region50: #{_lambda_.4} parent=47 // pred_check_branch
        %2371 = sbr.rel (%p2369) target = $region52
      $region51: #{_lambda_.4} parent=47 // pred_region
        %s2372 = smul.u32 16, %s23
      $region52: #{_lambda_.4} parent=47 // pred_fallthru
        _
    $region48: #{_lambda_.4} parent=5 // pred_fallthru
      _
    %p2373 = scmp.le.s32.totalorder 2, %s13
    // Predicated region
    $region53: #{_lambda_.4} parent=5 // pred_check
      %p2374 = pneg %p2373
    $region54: #{_lambda_.4} parent=5 // pred_check_branch
      %2376 = sbr.rel (%p2374) target = $region56
    $region55: #{_lambda_.4} parent=5 // pred_region
      %s2377 = ssub.s32 %s13, 2
      // Predicated region
      $region57: #{_lambda_.4} parent=55 // pred_check
        %p2378 = pneg %p240
      $region58: #{_lambda_.4} parent=55 // pred_check_branch
        %2380 = sbr.rel (%p2378) target = $region60
      $region59: #{_lambda_.4} parent=55 // pred_region
        %s2381 = smul.u32 16, %s25
        %p2382 = scmp.lt.s32.totalorder %s24, 1
        %s2383 = scalar_select %p2382, %s24, 1
        %p2384 = scmp.lt.s32.totalorder %s2381, 15
        %s2385 = scalar_select %p2384, %s2381, 15
        %s2386 = smul.addr %s2385, 2
        %s2387 = smul.addr %s2383, 32
        %s2388 = sadd.s32 %s2386, %s2387
        %s2389 = smul.addr %s2388, 4
        %s2390 = scalar_lea.vmem %s7, %s2389
      $region60: #{_lambda_.4} parent=55 // pred_fallthru
        _
    $region56: #{_lambda_.4} parent=5 // pred_fallthru
      _
  $region6: #{_lambda_.4} parent=0 // loop_footer
    %s17 = sadd.s32 1, %s13
  $region7: #{_lambda_.4} parent=0 // loop_footer_branch
    %12 = sbr.rel target = $region3
  $region8: #{_lambda_.4} parent=0 // loop_exit
    _

// kernel: _lambda_.5
$region0: #{_lambda_.5}
  #allocation0 [shape = 'u32[]', space=smem, size = 0x4, offset = 0x4, fixed_abs, tag = 'smem constant byte address 0x4 - core index']
  #allocation1 [shape = 'u32[144,128]{1,0:T(1,128)}', space=vmem, size = 0x12000, scoped, tag = 'internal scratch']
  %s0 = inlined_call_operand.vmem [shape: bf16[512,4], index: 0, kind: input, shape index: {}]
  %s1 = inlined_call_operand.vmem [shape: bf16[512,4], index: 1, kind: input, shape index: {}]
  %s2 = inlined_call_operand.vmem [shape: bf16[8,8], index: 2, kind: input, shape index: {}]
  %s3 = inlined_call_operand.vmem [shape: f32[1,8], index: 3, kind: input, shape index: {}]
  %s4 = inlined_call_operand.vmem [shape: f32[512,8], index: 4, kind: output, shape index: {}]
  %s5 = sld [smem:[#allocation0]]
  $region26: #{_lambda_.5} parent=0
    _
  %s7 = ssub.s32 1, %s5
  %s8 = scalar_select 0, %s7, %s5
  // Predicated region
  $region2: #{_lambda_.5} parent=0 // pred_check
    _
  $region3: #{_lambda_.5} parent=0 // pred_check_branch
    %10 = sbr.rel (0) target = $region5
  $region4: #{_lambda_.5} parent=0 // pred_region
    _
  $region5: #{_lambda_.5} parent=0 // pred_fallthru
    _
  // Predicated region
  $region6: #{_lambda_.5} parent=0 // pred_check
    _
  $region7: #{_lambda_.5} parent=0 // pred_check_branch
    %12 = sbr.rel (0) target = $region9
  $region8: #{_lambda_.5} parent=0 // pred_region
    _
  $region9: #{_lambda_.5} parent=0 // pred_fallthru
    _
  // Predicated region
  $region10: #{_lambda_.5} parent=0 // pred_check
    _
  $region11: #{_lambda_.5} parent=0 // pred_check_branch
    %14 = sbr.rel (0) target = $region13
  $region12: #{_lambda_.5} parent=0 // pred_region
    _
  $region13: #{_lambda_.5} parent=0 // pred_fallthru
    _
  // Predicated region
  $region14: #{_lambda_.5} parent=0 // pred_check
    _
  $region15: #{_lambda_.5} parent=0 // pred_check_branch
    %16 = sbr.rel (0) target = $region17
  $region16: #{_lambda_.5} parent=0 // pred_region
    _
  $region17: #{_lambda_.5} parent=0 // pred_fallthru
    _
  %v18 = vld [vmem:[%s0] sm:$0xf]
  %v19 = vld [vmem:[%s0 + $0x4] sm:$0xf]
  %v20 = vld [vmem:[%s0 + $0x8] sm:$0xf]
  %v21 = vld [vmem:[%s0 + $0xc] sm:$0xf]
  %v22 = vld [vmem:[%s0 + $0x10] sm:$0xf]
  %v23 = vld [vmem:[%s0 + $0x14] sm:$0xf]
  %v24 = vld [vmem:[%s0 + $0x18] sm:$0xf]
  %v25 = vld [vmem:[%s0 + $0x1c] sm:$0xf]
  %v26 = vld [vmem:[%s0 + $0x20] sm:$0xf]
  %v27 = vld [vmem:[%s0 + $0x24] sm:$0xf]
  %v28 = vld [vmem:[%s0 + $0x28] sm:$0xf]
  %v29 = vld [vmem:[%s0 + $0x2c] sm:$0xf]
  %v30 = vld [vmem:[%s0 + $0x30] sm:$0xf]
  %v31 = vld [vmem:[%s0 + $0x34] sm:$0xf]
  %v32 = vld [vmem:[%s0 + $0x38] sm:$0xf]
  %v33 = vld [vmem:[%s0 + $0x3c] sm:$0xf]
  %v34 = vld [vmem:[%s0 + $0x40] sm:$0xf]
  %v35 = vld [vmem:[%s0 + $0x44] sm:$0xf]
  %v36 = vld [vmem:[%s0 + $0x48] sm:$0xf]
  %v37 = vld [vmem:[%s0 + $0x4c] sm:$0xf]
  %v38 = vld [vmem:[%s0 + $0x50] sm:$0xf]
  %v39 = vld [vmem:[%s0 + $0x54] sm:$0xf]
  %v40 = vld [vmem:[%s0 + $0x58] sm:$0xf]
  %v41 = vld [vmem:[%s0 + $0x5c] sm:$0xf]
  %v42 = vld [vmem:[%s0 + $0x60] sm:$0xf]
  %v43 = vld [vmem:[%s0 + $0x64] sm:$0xf]
  %v44 = vld [vmem:[%s0 + $0x68] sm:$0xf]
  %v45 = vld [vmem:[%s0 + $0x6c] sm:$0xf]
  %v46 = vld [vmem:[%s0 + $0x70] sm:$0xf]
  %v47 = vld [vmem:[%s0 + $0x74] sm:$0xf]
  %v48 = vld [vmem:[%s0 + $0x78] sm:$0xf]
  %v49 = vld [vmem:[%s0 + $0x7c] sm:$0xf]
  %v50 = vld [vmem:[%s0 + $0x80] sm:$0xf]
  %v51 = vld [vmem:[%s0 + $0x84] sm:$0xf]
  %v52 = vld [vmem:[%s0 + $0x88] sm:$0xf]
  %v53 = vld [vmem:[%s0 + $0x8c] sm:$0xf]
  %v54 = vld [vmem:[%s0 + $0x90] sm:$0xf]
  %v55 = vld [vmem:[%s0 + $0x94] sm:$0xf]
  %v56 = vld [vmem:[%s0 + $0x98] sm:$0xf]
  %v57 = vld [vmem:[%s0 + $0x9c] sm:$0xf]
  %v58 = vld [vmem:[%s0 + $0xa0] sm:$0xf]
  %v59 = vld [vmem:[%s0 + $0xa4] sm:$0xf]
  %v60 = vld [vmem:[%s0 + $0xa8] sm:$0xf]
  %v61 = vld [vmem:[%s0 + $0xac] sm:$0xf]
  %v62 = vld [vmem:[%s0 + $0xb0] sm:$0xf]
  %v63 = vld [vmem:[%s0 + $0xb4] sm:$0xf]
  %v64 = vld [vmem:[%s0 + $0xb8] sm:$0xf]
  %v65 = vld [vmem:[%s0 + $0xbc] sm:$0xf]
  %v66 = vld [vmem:[%s0 + $0xc0] sm:$0xf]
  %v67 = vld [vmem:[%s0 + $0xc4] sm:$0xf]
  %v68 = vld [vmem:[%s0 + $0xc8] sm:$0xf]
  %v69 = vld [vmem:[%s0 + $0xcc] sm:$0xf]
  %v70 = vld [vmem:[%s0 + $0xd0] sm:$0xf]
  %v71 = vld [vmem:[%s0 + $0xd4] sm:$0xf]
  %v72 = vld [vmem:[%s0 + $0xd8] sm:$0xf]
  %v73 = vld [vmem:[%s0 + $0xdc] sm:$0xf]
  %v74 = vld [vmem:[%s0 + $0xe0] sm:$0xf]
  %v75 = vld [vmem:[%s0 + $0xe4] sm:$0xf]
  %v76 = vld [vmem:[%s0 + $0xe8] sm:$0xf]
  %v77 = vld [vmem:[%s0 + $0xec] sm:$0xf]
  %v78 = vld [vmem:[%s0 + $0xf0] sm:$0xf]
  %v79 = vld [vmem:[%s0 + $0xf4] sm:$0xf]
  %v80 = vld [vmem:[%s0 + $0xf8] sm:$0xf]
  %v81 = vld [vmem:[%s0 + $0xfc] sm:$0xf]
  %v82 = vld [vmem:[%s1] sm:$0xf]
  %v83 = vld [vmem:[%s1 + $0x4] sm:$0xf]
  %v84 = vld [vmem:[%s1 + $0x8] sm:$0xf]
  %v85 = vld [vmem:[%s1 + $0xc] sm:$0xf]
  %v86 = vld [vmem:[%s1 + $0x10] sm:$0xf]
  %v87 = vld [vmem:[%s1 + $0x14] sm:$0xf]
  %v88 = vld [vmem:[%s1 + $0x18] sm:$0xf]
  %v89 = vld [vmem:[%s1 + $0x1c] sm:$0xf]
  %v90 = vld [vmem:[%s1 + $0x20] sm:$0xf]
  %v91 = vld [vmem:[%s1 + $0x24] sm:$0xf]
  %v92 = vld [vmem:[%s1 + $0x28] sm:$0xf]
  %v93 = vld [vmem:[%s1 + $0x2c] sm:$0xf]
  %v94 = vld [vmem:[%s1 + $0x30] sm:$0xf]
  %v95 = vld [vmem:[%s1 + $0x34] sm:$0xf]
  %v96 = vld [vmem:[%s1 + $0x38] sm:$0xf]
  %v97 = vld [vmem:[%s1 + $0x3c] sm:$0xf]
  %v98 = vld [vmem:[%s1 + $0x40] sm:$0xf]
  %v99 = vld [vmem:[%s1 + $0x44] sm:$0xf]
  %v100 = vld [vmem:[%s1 + $0x48] sm:$0xf]
  %v101 = vld [vmem:[%s1 + $0x4c] sm:$0xf]
  %v102 = vld [vmem:[%s1 + $0x50] sm:$0xf]
  %v103 = vld [vmem:[%s1 + $0x54] sm:$0xf]
  %v104 = vld [vmem:[%s1 + $0x58] sm:$0xf]
  %v105 = vld [vmem:[%s1 + $0x5c] sm:$0xf]
  %v106 = vld [vmem:[%s1 + $0x60] sm:$0xf]
  %v107 = vld [vmem:[%s1 + $0x64] sm:$0xf]
  %v108 = vld [vmem:[%s1 + $0x68] sm:$0xf]
  %v109 = vld [vmem:[%s1 + $0x6c] sm:$0xf]
  %v110 = vld [vmem:[%s1 + $0x70] sm:$0xf]
  %v111 = vld [vmem:[%s1 + $0x74] sm:$0xf]
  %v112 = vld [vmem:[%s1 + $0x78] sm:$0xf]
  %v113 = vld [vmem:[%s1 + $0x7c] sm:$0xf]
  %v114 = vld [vmem:[%s1 + $0x80] sm:$0xf]
  %v115 = vld [vmem:[%s1 + $0x84] sm:$0xf]
  %v116 = vld [vmem:[%s1 + $0x88] sm:$0xf]
  %v117 = vld [vmem:[%s1 + $0x8c] sm:$0xf]
  %v118 = vld [vmem:[%s1 + $0x90] sm:$0xf]
  %v119 = vld [vmem:[%s1 + $0x94] sm:$0xf]
  %v120 = vld [vmem:[%s1 + $0x98] sm:$0xf]
  %v121 = vld [vmem:[%s1 + $0x9c] sm:$0xf]
  %v122 = vld [vmem:[%s1 + $0xa0] sm:$0xf]
  %v123 = vld [vmem:[%s1 + $0xa4] sm:$0xf]
  %v124 = vld [vmem:[%s1 + $0xa8] sm:$0xf]
  %v125 = vld [vmem:[%s1 + $0xac] sm:$0xf]
  %v126 = vld [vmem:[%s1 + $0xb0] sm:$0xf]
  %v127 = vld [vmem:[%s1 + $0xb4] sm:$0xf]
  %v128 = vld [vmem:[%s1 + $0xb8] sm:$0xf]
  %v129 = vld [vmem:[%s1 + $0xbc] sm:$0xf]
  %v130 = vld [vmem:[%s1 + $0xc0] sm:$0xf]
  %v131 = vld [vmem:[%s1 + $0xc4] sm:$0xf]
  %v132 = vld [vmem:[%s1 + $0xc8] sm:$0xf]
  %v133 = vld [vmem:[%s1 + $0xcc] sm:$0xf]
  %v134 = vld [vmem:[%s1 + $0xd0] sm:$0xf]
  %v135 = vld [vmem:[%s1 + $0xd4] sm:$0xf]
  %v136 = vld [vmem:[%s1 + $0xd8] sm:$0xf]
  %v137 = vld [vmem:[%s1 + $0xdc] sm:$0xf]
  %v138 = vld [vmem:[%s1 + $0xe0] sm:$0xf]
  %v139 = vld [vmem:[%s1 + $0xe4] sm:$0xf]
  %v140 = vld [vmem:[%s1 + $0xe8] sm:$0xf]
  %v141 = vld [vmem:[%s1 + $0xec] sm:$0xf]
  %v142 = vld [vmem:[%s1 + $0xf0] sm:$0xf]
  %v143 = vld [vmem:[%s1 + $0xf4] sm:$0xf]
  %v144 = vld [vmem:[%s1 + $0xf8] sm:$0xf]
  %v145 = vld [vmem:[%s1 + $0xfc] sm:$0xf]
  %v210 = vunpack.c.l.b16 %v18
  %v211 = vunpack.c.l.b16 %v19
  %v212 = vunpack.c.l.b16 %v20
  %v213 = vunpack.c.l.b16 %v21
  %v214 = vunpack.c.l.b16 %v22
  %v215 = vunpack.c.l.b16 %v23
  %v216 = vunpack.c.l.b16 %v24
  %v217 = vunpack.c.l.b16 %v25
  %v218 = vunpack.c.l.b16 %v26
  %v219 = vunpack.c.l.b16 %v27
  %v220 = vunpack.c.l.b16 %v28
  %v221 = vunpack.c.l.b16 %v29
  %v222 = vunpack.c.l.b16 %v30
  %v223 = vunpack.c.l.b16 %v31
  %v224 = vunpack.c.l.b16 %v32
  %v225 = vunpack.c.l.b16 %v33
  %v226 = vunpack.c.l.b16 %v34
  %v227 = vunpack.c.l.b16 %v35
  %v228 = vunpack.c.l.b16 %v36
  %v229 = vunpack.c.l.b16 %v37
  %v230 = vunpack.c.l.b16 %v38
  %v231 = vunpack.c.l.b16 %v39
  %v232 = vunpack.c.l.b16 %v40
  %v233 = vunpack.c.l.b16 %v41
  %v234 = vunpack.c.l.b16 %v42
  %v235 = vunpack.c.l.b16 %v43
  %v236 = vunpack.c.l.b16 %v44
  %v237 = vunpack.c.l.b16 %v45
  %v238 = vunpack.c.l.b16 %v46
  %v239 = vunpack.c.l.b16 %v47
  %v240 = vunpack.c.l.b16 %v48
  %v241 = vunpack.c.l.b16 %v49
  %v242 = vunpack.c.l.b16 %v50
  %v243 = vunpack.c.l.b16 %v51
  %v244 = vunpack.c.l.b16 %v52
  %v245 = vunpack.c.l.b16 %v53
  %v246 = vunpack.c.l.b16 %v54
  %v247 = vunpack.c.l.b16 %v55
  %v248 = vunpack.c.l.b16 %v56
  %v249 = vunpack.c.l.b16 %v57
  %v250 = vunpack.c.l.b16 %v58
  %v251 = vunpack.c.l.b16 %v59
  %v252 = vunpack.c.l.b16 %v60
  %v253 = vunpack.c.l.b16 %v61
  %v254 = vunpack.c.l.b16 %v62
  %v255 = vunpack.c.l.b16 %v63
  %v256 = vunpack.c.l.b16 %v64
  %v257 = vunpack.c.l.b16 %v65
  %v258 = vunpack.c.l.b16 %v66
  %v259 = vunpack.c.l.b16 %v67
  %v260 = vunpack.c.l.b16 %v68
  %v261 = vunpack.c.l.b16 %v69
  %v262 = vunpack.c.l.b16 %v70
  %v263 = vunpack.c.l.b16 %v71
  %v264 = vunpack.c.l.b16 %v72
  %v265 = vunpack.c.l.b16 %v73
  %v266 = vunpack.c.l.b16 %v74
  %v267 = vunpack.c.l.b16 %v75
  %v268 = vunpack.c.l.b16 %v76
  %v269 = vunpack.c.l.b16 %v77
  %v270 = vunpack.c.l.b16 %v78
  %v271 = vunpack.c.l.b16 %v79
  %v272 = vunpack.c.l.b16 %v80
  %v273 = vunpack.c.l.b16 %v81
  %v274 = vpack.c.b16 %v211, %v210
  %v275 = vpack.c.b16 %v213, %v212
  %v276 = vpack.c.b16 %v215, %v214
  %v277 = vpack.c.b16 %v217, %v216
  %v278 = vpack.c.b16 %v219, %v218
  %v279 = vpack.c.b16 %v221, %v220
  %v280 = vpack.c.b16 %v223, %v222
  %v281 = vpack.c.b16 %v225, %v224
  %v282 = vpack.c.b16 %v227, %v226
  %v283 = vpack.c.b16 %v229, %v228
  %v284 = vpack.c.b16 %v231, %v230
  %v285 = vpack.c.b16 %v233, %v232
  %v286 = vpack.c.b16 %v235, %v234
  %v287 = vpack.c.b16 %v237, %v236
  %v288 = vpack.c.b16 %v239, %v238
  %v289 = vpack.c.b16 %v241, %v240
  %v290 = vpack.c.b16 %v243, %v242
  %v291 = vpack.c.b16 %v245, %v244
  %v292 = vpack.c.b16 %v247, %v246
  %v293 = vpack.c.b16 %v249, %v248
  %v294 = vpack.c.b16 %v251, %v250
  %v295 = vpack.c.b16 %v253, %v252
  %v296 = vpack.c.b16 %v255, %v254
  %v297 = vpack.c.b16 %v257, %v256
  %v298 = vpack.c.b16 %v259, %v258
  %v299 = vpack.c.b16 %v261, %v260
  %v300 = vpack.c.b16 %v263, %v262
  %v301 = vpack.c.b16 %v265, %v264
  %v302 = vpack.c.b16 %v267, %v266
  %v303 = vpack.c.b16 %v269, %v268
  %v304 = vpack.c.b16 %v271, %v270
  %v305 = vpack.c.b16 %v273, %v272
  %v370 = vunpack.c.l.b16 %v82
  %v371 = vunpack.c.l.b16 %v83
  %v372 = vunpack.c.l.b16 %v84
  %v373 = vunpack.c.l.b16 %v85
  %v374 = vunpack.c.l.b16 %v86
  %v375 = vunpack.c.l.b16 %v87
  %v376 = vunpack.c.l.b16 %v88
  %v377 = vunpack.c.l.b16 %v89
  %v378 = vunpack.c.l.b16 %v90
  %v379 = vunpack.c.l.b16 %v91
  %v380 = vunpack.c.l.b16 %v92
  %v381 = vunpack.c.l.b16 %v93
  %v382 = vunpack.c.l.b16 %v94
  %v383 = vunpack.c.l.b16 %v95
  %v384 = vunpack.c.l.b16 %v96
  %v385 = vunpack.c.l.b16 %v97
  %v386 = vunpack.c.l.b16 %v98
  %v387 = vunpack.c.l.b16 %v99
  %v388 = vunpack.c.l.b16 %v100
  %v389 = vunpack.c.l.b16 %v101
  %v390 = vunpack.c.l.b16 %v102
  %v391 = vunpack.c.l.b16 %v103
  %v392 = vunpack.c.l.b16 %v104
  %v393 = vunpack.c.l.b16 %v105
  %v394 = vunpack.c.l.b16 %v106
  %v395 = vunpack.c.l.b16 %v107
  %v396 = vunpack.c.l.b16 %v108
  %v397 = vunpack.c.l.b16 %v109
  %v398 = vunpack.c.l.b16 %v110
  %v399 = vunpack.c.l.b16 %v111
  %v400 = vunpack.c.l.b16 %v112
  %v401 = vunpack.c.l.b16 %v113
  %v402 = vunpack.c.l.b16 %v114
  %v403 = vunpack.c.l.b16 %v115
  %v404 = vunpack.c.l.b16 %v116
  %v405 = vunpack.c.l.b16 %v117
  %v406 = vunpack.c.l.b16 %v118
  %v407 = vunpack.c.l.b16 %v119
  %v408 = vunpack.c.l.b16 %v120
  %v409 = vunpack.c.l.b16 %v121
  %v410 = vunpack.c.l.b16 %v122
  %v411 = vunpack.c.l.b16 %v123
  %v412 = vunpack.c.l.b16 %v124
  %v413 = vunpack.c.l.b16 %v125
  %v414 = vunpack.c.l.b16 %v126
  %v415 = vunpack.c.l.b16 %v127
  %v416 = vunpack.c.l.b16 %v128
  %v417 = vunpack.c.l.b16 %v129
  %v418 = vunpack.c.l.b16 %v130
  %v419 = vunpack.c.l.b16 %v131
  %v420 = vunpack.c.l.b16 %v132
  %v421 = vunpack.c.l.b16 %v133
  %v422 = vunpack.c.l.b16 %v134
  %v423 = vunpack.c.l.b16 %v135
  %v424 = vunpack.c.l.b16 %v136
  %v425 = vunpack.c.l.b16 %v137
  %v426 = vunpack.c.l.b16 %v138
  %v427 = vunpack.c.l.b16 %v139
  %v428 = vunpack.c.l.b16 %v140
  %v429 = vunpack.c.l.b16 %v141
  %v430 = vunpack.c.l.b16 %v142
  %v431 = vunpack.c.l.b16 %v143
  %v432 = vunpack.c.l.b16 %v144
  %v433 = vunpack.c.l.b16 %v145
  %v434 = vpack.c.b16 %v371, %v370
  %v435 = vpack.c.b16 %v373, %v372
  %v436 = vpack.c.b16 %v375, %v374
  %v437 = vpack.c.b16 %v377, %v376
  %v438 = vpack.c.b16 %v379, %v378
  %v439 = vpack.c.b16 %v381, %v380
  %v440 = vpack.c.b16 %v383, %v382
  %v441 = vpack.c.b16 %v385, %v384
  %v442 = vpack.c.b16 %v387, %v386
  %v443 = vpack.c.b16 %v389, %v388
  %v444 = vpack.c.b16 %v391, %v390
  %v445 = vpack.c.b16 %v393, %v392
  %v446 = vpack.c.b16 %v395, %v394
  %v447 = vpack.c.b16 %v397, %v396
  %v448 = vpack.c.b16 %v399, %v398
  %v449 = vpack.c.b16 %v401, %v400
  %v450 = vpack.c.b16 %v403, %v402
  %v451 = vpack.c.b16 %v405, %v404
  %v452 = vpack.c.b16 %v407, %v406
  %v453 = vpack.c.b16 %v409, %v408
  %v454 = vpack.c.b16 %v411, %v410
  %v455 = vpack.c.b16 %v413, %v412
  %v456 = vpack.c.b16 %v415, %v414
  %v457 = vpack.c.b16 %v417, %v416
  %v458 = vpack.c.b16 %v419, %v418
  %v459 = vpack.c.b16 %v421, %v420
  %v460 = vpack.c.b16 %v423, %v422
  %v461 = vpack.c.b16 %v425, %v424
  %v462 = vpack.c.b16 %v427, %v426
  %v463 = vpack.c.b16 %v429, %v428
  %v464 = vpack.c.b16 %v431, %v430
  %v465 = vpack.c.b16 %v433, %v432
  %466 = vrot.lane.b32.xlu0 %v434, 4
  %v467 = vpop.permute.xlu0 %466
  %468 = vrot.lane.b32.xlu0 %v435, 4
  %v469 = vpop.permute.xlu0 %468
  %470 = vrot.lane.b32.xlu0 %v436, 4
  %v471 = vpop.permute.xlu0 %470
  %472 = vrot.lane.b32.xlu0 %v437, 4
  %v473 = vpop.permute.xlu0 %472
  %474 = vrot.lane.b32.xlu0 %v438, 4
  %v475 = vpop.permute.xlu0 %474
  %476 = vrot.lane.b32.xlu0 %v439, 4
  %v477 = vpop.permute.xlu0 %476
  %478 = vrot.lane.b32.xlu0 %v440, 4
  %v479 = vpop.permute.xlu0 %478
  %480 = vrot.lane.b32.xlu0 %v441, 4
  %v481 = vpop.permute.xlu0 %480
  %482 = vrot.lane.b32.xlu0 %v442, 4
  %v483 = vpop.permute.xlu0 %482
  %484 = vrot.lane.b32.xlu0 %v443, 4
  %v485 = vpop.permute.xlu0 %484
  %486 = vrot.lane.b32.xlu0 %v444, 4
  %v487 = vpop.permute.xlu0 %486
  %488 = vrot.lane.b32.xlu0 %v445, 4
  %v489 = vpop.permute.xlu0 %488
  %490 = vrot.lane.b32.xlu0 %v446, 4
  %v491 = vpop.permute.xlu0 %490
  %492 = vrot.lane.b32.xlu0 %v447, 4
  %v493 = vpop.permute.xlu0 %492
  %494 = vrot.lane.b32.xlu0 %v448, 4
  %v495 = vpop.permute.xlu0 %494
  %496 = vrot.lane.b32.xlu0 %v449, 4
  %v497 = vpop.permute.xlu0 %496
  %498 = vrot.lane.b32.xlu0 %v450, 4
  %v499 = vpop.permute.xlu0 %498
  %500 = vrot.lane.b32.xlu0 %v451, 4
  %v501 = vpop.permute.xlu0 %500
  %502 = vrot.lane.b32.xlu0 %v452, 4
  %v503 = vpop.permute.xlu0 %502
  %504 = vrot.lane.b32.xlu0 %v453, 4
  %v505 = vpop.permute.xlu0 %504
  %506 = vrot.lane.b32.xlu0 %v454, 4
  %v507 = vpop.permute.xlu0 %506
  %508 = vrot.lane.b32.xlu0 %v455, 4
  %v509 = vpop.permute.xlu0 %508
  %510 = vrot.lane.b32.xlu0 %v456, 4
  %v511 = vpop.permute.xlu0 %510
  %512 = vrot.lane.b32.xlu0 %v457, 4
  %v513 = vpop.permute.xlu0 %512
  %514 = vrot.lane.b32.xlu0 %v458, 4
  %v515 = vpop.permute.xlu0 %514
  %516 = vrot.lane.b32.xlu0 %v459, 4
  %v517 = vpop.permute.xlu0 %516
  %518 = vrot.lane.b32.xlu0 %v460, 4
  %v519 = vpop.permute.xlu0 %518
  %520 = vrot.lane.b32.xlu0 %v461, 4
  %v521 = vpop.permute.xlu0 %520
  %522 = vrot.lane.b32.xlu0 %v462, 4
  %v523 = vpop.permute.xlu0 %522
  %524 = vrot.lane.b32.xlu0 %v463, 4
  %v525 = vpop.permute.xlu0 %524
  %526 = vrot.lane.b32.xlu0 %v464, 4
  %v527 = vpop.permute.xlu0 %526
  %528 = vrot.lane.b32.xlu0 %v465, 4
  %v529 = vpop.permute.xlu0 %528
  %vm530 = vcmask 31744
  %v533 = vsel %vm530, %v274, %v467
  %v536 = vsel %vm530, %v275, %v469
  %v539 = vsel %vm530, %v276, %v471
  %v542 = vsel %vm530, %v277, %v473
  %v545 = vsel %vm530, %v278, %v475
  %v548 = vsel %vm530, %v279, %v477
  %v551 = vsel %vm530, %v280, %v479
  %v554 = vsel %vm530, %v281, %v481
  %v557 = vsel %vm530, %v282, %v483
  %v560 = vsel %vm530, %v283, %v485
  %v563 = vsel %vm530, %v284, %v487
  %v566 = vsel %vm530, %v285, %v489
  %v569 = vsel %vm530, %v286, %v491
  %v572 = vsel %vm530, %v287, %v493
  %v575 = vsel %vm530, %v288, %v495
  %v578 = vsel %vm530, %v289, %v497
  %v581 = vsel %vm530, %v290, %v499
  %v584 = vsel %vm530, %v291, %v501
  %v587 = vsel %vm530, %v292, %v503
  %v590 = vsel %vm530, %v293, %v505
  %v593 = vsel %vm530, %v294, %v507
  %v596 = vsel %vm530, %v295, %v509
  %v599 = vsel %vm530, %v296, %v511
  %v602 = vsel %vm530, %v297, %v513
  %v605 = vsel %vm530, %v298, %v515
  %v608 = vsel %vm530, %v299, %v517
  %v611 = vsel %vm530, %v300, %v519
  %v614 = vsel %vm530, %v301, %v521
  %v617 = vsel %vm530, %v302, %v523
  %v620 = vsel %vm530, %v303, %v525
  %v623 = vsel %vm530, %v304, %v527
  %v626 = vsel %vm530, %v305, %v529
  %v627 = vld [vmem:[%s2] sm:$0xf]
  %v628 = vld [vmem:[%s3] sm:$0x1]
  %v630 = vlaneseq
  %v631 = vshrl.u32 %v630, 7
  %v632 = vsub.s32 0, %v631
  %v633 = vrot.slane %v628, %v632
  %vm635 = vcmask 64512
  %v636 = vsel %vm635, %v533, 0
  %v638 = vsel %vm635, %v536, 0
  %v640 = vsel %vm635, %v539, 0
  %v642 = vsel %vm635, %v542, 0
  %v644 = vsel %vm635, %v545, 0
  %v646 = vsel %vm635, %v548, 0
  %v648 = vsel %vm635, %v551, 0
  %v650 = vsel %vm635, %v554, 0
  %v652 = vsel %vm635, %v557, 0
  %v654 = vsel %vm635, %v560, 0
  %v656 = vsel %vm635, %v563, 0
  %v658 = vsel %vm635, %v566, 0
  %v660 = vsel %vm635, %v569, 0
  %v662 = vsel %vm635, %v572, 0
  %v664 = vsel %vm635, %v575, 0
  %v666 = vsel %vm635, %v578, 0
  %v668 = vsel %vm635, %v581, 0
  %v670 = vsel %vm635, %v584, 0
  %v672 = vsel %vm635, %v587, 0
  %v674 = vsel %vm635, %v590, 0
  %v676 = vsel %vm635, %v593, 0
  %v678 = vsel %vm635, %v596, 0
  %v680 = vsel %vm635, %v599, 0
  %v682 = vsel %vm635, %v602, 0
  %v684 = vsel %vm635, %v605, 0
  %v686 = vsel %vm635, %v608, 0
  %v688 = vsel %vm635, %v611, 0
  %v690 = vsel %vm635, %v614, 0
  %v692 = vsel %vm635, %v617, 0
  %v694 = vsel %vm635, %v620, 0
  %v696 = vsel %vm635, %v623, 0
  %v698 = vsel %vm635, %v626, 0
  %vm700 = vcmask 1043456
  %v702 = vsel %vm700, %v627, 0
  %704 = vmatprep.subr.bf16.mxu0 0
  %705 = vmatpush1.bf16.msra.mxu0 0
  %706 = vmatprep.subr.bf16.mxu0 0
  %707 = vmatpush1.bf16.msra.mxu0 0
  %708 = vmatprep.subr.bf16.mxu0 0
  %709 = vmatpush1.bf16.msra.mxu0 0
  %710 = vmatprep.subr.bf16.mxu0 0
  %711 = vmatpush1.bf16.msra.mxu0 0
  %712 = vmatprep.subr.bf16.mxu0 0
  %713 = vmatpush1.bf16.msra.mxu0 0
  %714 = vmatprep.subr.bf16.mxu0 0
  %715 = vmatpush1.bf16.msra.mxu0 0
  %716 = vmatprep.subr.bf16.mxu0 0
  %717 = vmatpush1.bf16.msra.mxu0 0
  %718 = vmatprep.subr.bf16.mxu0 0
  %719 = vmatpush1.bf16.msra.mxu0 %v702
  %720 = vmatprep.subr.bf16.mxu0 0
  %721 = vmatpush2.bf16.msra.mxu0 0
  %722 = vmatprep.subr.bf16.mxu0 0
  %723 = vmatpush2.bf16.msra.mxu0 0
  %724 = vmatprep.subr.bf16.mxu0 0
  %725 = vmatpush2.bf16.msra.mxu0 0
  %726 = vmatprep.subr.bf16.mxu0 0
  %727 = vmatpush2.bf16.msra.mxu0 0
  %728 = vmatprep.subr.bf16.mxu0 0
  %729 = vmatpush2.bf16.msra.mxu0 0
  %730 = vmatprep.subr.bf16.mxu0 0
  %731 = vmatpush2.bf16.msra.mxu0 0
  %732 = vmatprep.subr.bf16.mxu0 0
  %733 = vmatpush2.bf16.msra.mxu0 0
  %734 = vmatprep.subr.bf16.mxu0 0
  %735 = vmatpush2.bf16.msra.mxu0 0
  %736 = vmatprep.mubr.bf16.mxu0 0
  %737 = vmatmul.mubr.bf16.gmra.mxu0 %v636
  %v738 = vpop.f32.mrf.mxu0
  %v739 = vadd.f32 %v633, %v738
  %v740 = vpop.f32.mrf.mxu0
  %v741 = vpop.f32.mrf.mxu0
  %v742 = vadd.f32 %v633, %v741
  %v743 = vpop.f32.mrf.mxu0
  %744 = vmatprep.mubr.bf16.mxu0 0
  %745 = vmatmul.mubr.bf16.gmra.mxu0 %v638
  %v746 = vpop.f32.mrf.mxu0
  %v747 = vadd.f32 %v633, %v746
  %v748 = vpop.f32.mrf.mxu0
  %v749 = vpop.f32.mrf.mxu0
  %v750 = vadd.f32 %v633, %v749
  %v751 = vpop.f32.mrf.mxu0
  %752 = vmatprep.mubr.bf16.mxu0 0
  %753 = vmatmul.mubr.bf16.gmra.mxu0 %v640
  %v754 = vpop.f32.mrf.mxu0
  %v755 = vadd.f32 %v633, %v754
  %v756 = vpop.f32.mrf.mxu0
  %v757 = vpop.f32.mrf.mxu0
  %v758 = vadd.f32 %v633, %v757
  %v759 = vpop.f32.mrf.mxu0
  %760 = vmatprep.mubr.bf16.mxu0 0
  %761 = vmatmul.mubr.bf16.gmra.mxu0 %v642
  %v762 = vpop.f32.mrf.mxu0
  %v763 = vadd.f32 %v633, %v762
  %v764 = vpop.f32.mrf.mxu0
  %v765 = vpop.f32.mrf.mxu0
  %v766 = vadd.f32 %v633, %v765
  %v767 = vpop.f32.mrf.mxu0
  %768 = vmatprep.mubr.bf16.mxu0 0
  %769 = vmatmul.mubr.bf16.gmra.mxu0 %v644
  %v770 = vpop.f32.mrf.mxu0
  %v771 = vadd.f32 %v633, %v770
  %v772 = vpop.f32.mrf.mxu0
  %v773 = vpop.f32.mrf.mxu0
  %v774 = vadd.f32 %v633, %v773
  %v775 = vpop.f32.mrf.mxu0
  %776 = vmatprep.mubr.bf16.mxu0 0
  %777 = vmatmul.mubr.bf16.gmra.mxu0 %v646
  %v778 = vpop.f32.mrf.mxu0
  %v779 = vadd.f32 %v633, %v778
  %v780 = vpop.f32.mrf.mxu0
  %v781 = vpop.f32.mrf.mxu0
  %v782 = vadd.f32 %v633, %v781
  %v783 = vpop.f32.mrf.mxu0
  %784 = vmatprep.mubr.bf16.mxu0 0
  %785 = vmatmul.mubr.bf16.gmra.mxu0 %v648
  %v786 = vpop.f32.mrf.mxu0
  %v787 = vadd.f32 %v633, %v786
  %v788 = vpop.f32.mrf.mxu0
  %v789 = vpop.f32.mrf.mxu0
  %v790 = vadd.f32 %v633, %v789
  %v791 = vpop.f32.mrf.mxu0
  %792 = vmatprep.mubr.bf16.mxu0 0
  %793 = vmatmul.mubr.bf16.gmra.mxu0 %v650
  %v794 = vpop.f32.mrf.mxu0
  %v795 = vadd.f32 %v633, %v794
  %v796 = vpop.f32.mrf.mxu0
  %v797 = vpop.f32.mrf.mxu0
  %v798 = vadd.f32 %v633, %v797
  %v799 = vpop.f32.mrf.mxu0
  %800 = vmatprep.mubr.bf16.mxu0 0
  %801 = vmatmul.mubr.bf16.gmra.mxu0 %v652
  %v802 = vpop.f32.mrf.mxu0
  %v803 = vadd.f32 %v633, %v802
  %v804 = vpop.f32.mrf.mxu0
  %v805 = vpop.f32.mrf.mxu0
  %v806 = vadd.f32 %v633, %v805
  %v807 = vpop.f32.mrf.mxu0
  %808 = vmatprep.mubr.bf16.mxu0 0
  %809 = vmatmul.mubr.bf16.gmra.mxu0 %v654
  %v810 = vpop.f32.mrf.mxu0
  %v811 = vadd.f32 %v633, %v810
  %v812 = vpop.f32.mrf.mxu0
  %v813 = vpop.f32.mrf.mxu0
  %v814 = vadd.f32 %v633, %v813
  %v815 = vpop.f32.mrf.mxu0
  %816 = vmatprep.mubr.bf16.mxu0 0
  %817 = vmatmul.mubr.bf16.gmra.mxu0 %v656
  %v818 = vpop.f32.mrf.mxu0
  %v819 = vadd.f32 %v633, %v818
  %v820 = vpop.f32.mrf.mxu0
  %v821 = vpop.f32.mrf.mxu0
  %v822 = vadd.f32 %v633, %v821
  %v823 = vpop.f32.mrf.mxu0
  %824 = vmatprep.mubr.bf16.mxu0 0
  %825 = vmatmul.mubr.bf16.gmra.mxu0 %v658
  %v826 = vpop.f32.mrf.mxu0
  %v827 = vadd.f32 %v633, %v826
  %v828 = vpop.f32.mrf.mxu0
  %v829 = vpop.f32.mrf.mxu0
  %v830 = vadd.f32 %v633, %v829
  %v831 = vpop.f32.mrf.mxu0
  %832 = vmatprep.mubr.bf16.mxu0 0
  %833 = vmatmul.mubr.bf16.gmra.mxu0 %v660
  %v834 = vpop.f32.mrf.mxu0
  %v835 = vadd.f32 %v633, %v834
  %v836 = vpop.f32.mrf.mxu0
  %v837 = vpop.f32.mrf.mxu0
  %v838 = vadd.f32 %v633, %v837
  %v839 = vpop.f32.mrf.mxu0
  %840 = vmatprep.mubr.bf16.mxu0 0
  %841 = vmatmul.mubr.bf16.gmra.mxu0 %v662
  %v842 = vpop.f32.mrf.mxu0
  %v843 = vadd.f32 %v633, %v842
  %v844 = vpop.f32.mrf.mxu0
  %v845 = vpop.f32.mrf.mxu0
  %v846 = vadd.f32 %v633, %v845
  %v847 = vpop.f32.mrf.mxu0
  %848 = vmatprep.mubr.bf16.mxu0 0
  %849 = vmatmul.mubr.bf16.gmra.mxu0 %v664
  %v850 = vpop.f32.mrf.mxu0
  %v851 = vadd.f32 %v633, %v850
  %v852 = vpop.f32.mrf.mxu0
  %v853 = vpop.f32.mrf.mxu0
  %v854 = vadd.f32 %v633, %v853
  %v855 = vpop.f32.mrf.mxu0
  %856 = vmatprep.mubr.bf16.mxu0 0
  %857 = vmatmul.mubr.bf16.gmra.mxu0 %v666
  %v858 = vpop.f32.mrf.mxu0
  %v859 = vadd.f32 %v633, %v858
  %v860 = vpop.f32.mrf.mxu0
  %v861 = vpop.f32.mrf.mxu0
  %v862 = vadd.f32 %v633, %v861
  %v863 = vpop.f32.mrf.mxu0
  %864 = vmatprep.mubr.bf16.mxu0 0
  %865 = vmatmul.mubr.bf16.gmra.mxu0 %v668
  %v866 = vpop.f32.mrf.mxu0
  %v867 = vadd.f32 %v633, %v866
  %v868 = vpop.f32.mrf.mxu0
  %v869 = vpop.f32.mrf.mxu0
  %v870 = vadd.f32 %v633, %v869
  %v871 = vpop.f32.mrf.mxu0
  %872 = vmatprep.mubr.bf16.mxu0 0
  %873 = vmatmul.mubr.bf16.gmra.mxu0 %v670
  %v874 = vpop.f32.mrf.mxu0
  %v875 = vadd.f32 %v633, %v874
  %v876 = vpop.f32.mrf.mxu0
  %v877 = vpop.f32.mrf.mxu0
  %v878 = vadd.f32 %v633, %v877
  %v879 = vpop.f32.mrf.mxu0
  %880 = vmatprep.mubr.bf16.mxu0 0
  %881 = vmatmul.mubr.bf16.gmra.mxu0 %v672
  %v882 = vpop.f32.mrf.mxu0
  %v883 = vadd.f32 %v633, %v882
  %v884 = vpop.f32.mrf.mxu0
  %v885 = vpop.f32.mrf.mxu0
  %v886 = vadd.f32 %v633, %v885
  %v887 = vpop.f32.mrf.mxu0
  %888 = vmatprep.mubr.bf16.mxu0 0
  %889 = vmatmul.mubr.bf16.gmra.mxu0 %v674
  %v890 = vpop.f32.mrf.mxu0
  %v891 = vadd.f32 %v633, %v890
  %v892 = vpop.f32.mrf.mxu0
  %v893 = vpop.f32.mrf.mxu0
  %v894 = vadd.f32 %v633, %v893
  %v895 = vpop.f32.mrf.mxu0
  %896 = vmatprep.mubr.bf16.mxu0 0
  %897 = vmatmul.mubr.bf16.gmra.mxu0 %v676
  %v898 = vpop.f32.mrf.mxu0
  %v899 = vadd.f32 %v633, %v898
  %v900 = vpop.f32.mrf.mxu0
  %v901 = vpop.f32.mrf.mxu0
  %v902 = vadd.f32 %v633, %v901
  %v903 = vpop.f32.mrf.mxu0
  %904 = vmatprep.mubr.bf16.mxu0 0
  %905 = vmatmul.mubr.bf16.gmra.mxu0 %v678
  %v906 = vpop.f32.mrf.mxu0
  %v907 = vadd.f32 %v633, %v906
  %v908 = vpop.f32.mrf.mxu0
  %v909 = vpop.f32.mrf.mxu0
  %v910 = vadd.f32 %v633, %v909
  %v911 = vpop.f32.mrf.mxu0
  %912 = vmatprep.mubr.bf16.mxu0 0
  %913 = vmatmul.mubr.bf16.gmra.mxu0 %v680
  %v914 = vpop.f32.mrf.mxu0
  %v915 = vadd.f32 %v633, %v914
  %v916 = vpop.f32.mrf.mxu0
  %v917 = vpop.f32.mrf.mxu0
  %v918 = vadd.f32 %v633, %v917
  %v919 = vpop.f32.mrf.mxu0
  %920 = vmatprep.mubr.bf16.mxu0 0
  %921 = vmatmul.mubr.bf16.gmra.mxu0 %v682
  %v922 = vpop.f32.mrf.mxu0
  %v923 = vadd.f32 %v633, %v922
  %v924 = vpop.f32.mrf.mxu0
  %v925 = vpop.f32.mrf.mxu0
  %v926 = vadd.f32 %v633, %v925
  %v927 = vpop.f32.mrf.mxu0
  %928 = vmatprep.mubr.bf16.mxu0 0
  %929 = vmatmul.mubr.bf16.gmra.mxu0 %v684
  %v930 = vpop.f32.mrf.mxu0
  %v931 = vadd.f32 %v633, %v930
  %v932 = vpop.f32.mrf.mxu0
  %v933 = vpop.f32.mrf.mxu0
  %v934 = vadd.f32 %v633, %v933
  %v935 = vpop.f32.mrf.mxu0
  %936 = vmatprep.mubr.bf16.mxu0 0
  %937 = vmatmul.mubr.bf16.gmra.mxu0 %v686
  %v938 = vpop.f32.mrf.mxu0
  %v939 = vadd.f32 %v633, %v938
  %v940 = vpop.f32.mrf.mxu0
  %v941 = vpop.f32.mrf.mxu0
  %v942 = vadd.f32 %v633, %v941
  %v943 = vpop.f32.mrf.mxu0
  %944 = vmatprep.mubr.bf16.mxu0 0
  %945 = vmatmul.mubr.bf16.gmra.mxu0 %v688
  %v946 = vpop.f32.mrf.mxu0
  %v947 = vadd.f32 %v633, %v946
  %v948 = vpop.f32.mrf.mxu0
  %v949 = vpop.f32.mrf.mxu0
  %v950 = vadd.f32 %v633, %v949
  %v951 = vpop.f32.mrf.mxu0
  %952 = vmatprep.mubr.bf16.mxu0 0
  %953 = vmatmul.mubr.bf16.gmra.mxu0 %v690
  %v954 = vpop.f32.mrf.mxu0
  %v955 = vadd.f32 %v633, %v954
  %v956 = vpop.f32.mrf.mxu0
  %v957 = vpop.f32.mrf.mxu0
  %v958 = vadd.f32 %v633, %v957
  %v959 = vpop.f32.mrf.mxu0
  %960 = vmatprep.mubr.bf16.mxu0 0
  %961 = vmatmul.mubr.bf16.gmra.mxu0 %v692
  %v962 = vpop.f32.mrf.mxu0
  %v963 = vadd.f32 %v633, %v962
  %v964 = vpop.f32.mrf.mxu0
  %v965 = vpop.f32.mrf.mxu0
  %v966 = vadd.f32 %v633, %v965
  %v967 = vpop.f32.mrf.mxu0
  %968 = vmatprep.mubr.bf16.mxu0 0
  %969 = vmatmul.mubr.bf16.gmra.mxu0 %v694
  %v970 = vpop.f32.mrf.mxu0
  %v971 = vadd.f32 %v633, %v970
  %v972 = vpop.f32.mrf.mxu0
  %v973 = vpop.f32.mrf.mxu0
  %v974 = vadd.f32 %v633, %v973
  %v975 = vpop.f32.mrf.mxu0
  %976 = vmatprep.mubr.bf16.mxu0 0
  %977 = vmatmul.mubr.bf16.gmra.mxu0 %v696
  %v978 = vpop.f32.mrf.mxu0
  %v979 = vadd.f32 %v633, %v978
  %v980 = vpop.f32.mrf.mxu0
  %v981 = vpop.f32.mrf.mxu0
  %v982 = vadd.f32 %v633, %v981
  %v983 = vpop.f32.mrf.mxu0
  %984 = vmatprep.mubr.bf16.mxu0 0
  %985 = vmatmul.mubr.bf16.gmra.mxu0 %v698
  %v986 = vpop.f32.mrf.mxu0
  %v987 = vadd.f32 %v633, %v986
  %v988 = vpop.f32.mrf.mxu0
  %v989 = vpop.f32.mrf.mxu0
  %v990 = vadd.f32 %v633, %v989
  %v991 = vpop.f32.mrf.mxu0
  %992 = vdwg.mxu0
  %v993 = vxor.u32 %v739, 2147483648
  %v994 = vxor.u32 %v742, 2147483648
  %v995 = vxor.u32 %v747, 2147483648
  %v996 = vxor.u32 %v750, 2147483648
  %v997 = vxor.u32 %v755, 2147483648
  %v998 = vxor.u32 %v758, 2147483648
  %v999 = vxor.u32 %v763, 2147483648
  %v1000 = vxor.u32 %v766, 2147483648
  %v1001 = vxor.u32 %v771, 2147483648
  %v1002 = vxor.u32 %v774, 2147483648
  %v1003 = vxor.u32 %v779, 2147483648
  %v1004 = vxor.u32 %v782, 2147483648
  %v1005 = vxor.u32 %v787, 2147483648
  %v1006 = vxor.u32 %v790, 2147483648
  %v1007 = vxor.u32 %v795, 2147483648
  %v1008 = vxor.u32 %v798, 2147483648
  %v1009 = vxor.u32 %v803, 2147483648
  %v1010 = vxor.u32 %v806, 2147483648
  %v1011 = vxor.u32 %v811, 2147483648
  %v1012 = vxor.u32 %v814, 2147483648
  %v1013 = vxor.u32 %v819, 2147483648
  %v1014 = vxor.u32 %v822, 2147483648
  %v1015 = vxor.u32 %v827, 2147483648
  %v1016 = vxor.u32 %v830, 2147483648
  %v1017 = vxor.u32 %v835, 2147483648
  %v1018 = vxor.u32 %v838, 2147483648
  %v1019 = vxor.u32 %v843, 2147483648
  %v1020 = vxor.u32 %v846, 2147483648
  %v1021 = vxor.u32 %v851, 2147483648
  %v1022 = vxor.u32 %v854, 2147483648
  %v1023 = vxor.u32 %v859, 2147483648
  %v1024 = vxor.u32 %v862, 2147483648
  %v1025 = vxor.u32 %v867, 2147483648
  %v1026 = vxor.u32 %v870, 2147483648
  %v1027 = vxor.u32 %v875, 2147483648
  %v1028 = vxor.u32 %v878, 2147483648
  %v1029 = vxor.u32 %v883, 2147483648
  %v1030 = vxor.u32 %v886, 2147483648
  %v1031 = vxor.u32 %v891, 2147483648
  %v1032 = vxor.u32 %v894, 2147483648
  %v1033 = vxor.u32 %v899, 2147483648
  %v1034 = vxor.u32 %v902, 2147483648
  %v1035 = vxor.u32 %v907, 2147483648
  %v1036 = vxor.u32 %v910, 2147483648
  %v1037 = vxor.u32 %v915, 2147483648
  %v1038 = vxor.u32 %v918, 2147483648
  %v1039 = vxor.u32 %v923, 2147483648
  %v1040 = vxor.u32 %v926, 2147483648
  %v1041 = vxor.u32 %v931, 2147483648
  %v1042 = vxor.u32 %v934, 2147483648
  %v1043 = vxor.u32 %v939, 2147483648
  %v1044 = vxor.u32 %v942, 2147483648
  %v1045 = vxor.u32 %v947, 2147483648
  %v1046 = vxor.u32 %v950, 2147483648
  %v1047 = vxor.u32 %v955, 2147483648
  %v1048 = vxor.u32 %v958, 2147483648
  %v1049 = vxor.u32 %v963, 2147483648
  %v1050 = vxor.u32 %v966, 2147483648
  %v1051 = vxor.u32 %v971, 2147483648
  %v1052 = vxor.u32 %v974, 2147483648
  %v1053 = vxor.u32 %v979, 2147483648
  %v1054 = vxor.u32 %v982, 2147483648
  %v1055 = vxor.u32 %v987, 2147483648
  %v1056 = vxor.u32 %v990, 2147483648
  %v1057 = vmul.f32 %v993, 1.442695
  %v1058 = vpow.pop %v1057
  %v1059 = vmul.f32 %v994, 1.442695
  %v1060 = vpow.pop %v1059
  %v1061 = vmul.f32 %v995, 1.442695
  %v1062 = vpow.pop %v1061
  %v1063 = vmul.f32 %v996, 1.442695
  %v1064 = vpow.pop %v1063
  %v1065 = vmul.f32 %v997, 1.442695
  %v1066 = vpow.pop %v1065
  %v1067 = vmul.f32 %v998, 1.442695
  %v1068 = vpow.pop %v1067
  %v1069 = vmul.f32 %v999, 1.442695
  %v1070 = vpow.pop %v1069
  %v1071 = vmul.f32 %v1000, 1.442695
  %v1072 = vpow.pop %v1071
  %v1073 = vmul.f32 %v1001, 1.442695
  %v1074 = vpow.pop %v1073
  %v1075 = vmul.f32 %v1002, 1.442695
  %v1076 = vpow.pop %v1075
  %v1077 = vmul.f32 %v1003, 1.442695
  %v1078 = vpow.pop %v1077
  %v1079 = vmul.f32 %v1004, 1.442695
  %v1080 = vpow.pop %v1079
  %v1081 = vmul.f32 %v1005, 1.442695
  %v1082 = vpow.pop %v1081
  %v1083 = vmul.f32 %v1006, 1.442695
  %v1084 = vpow.pop %v1083
  %v1085 = vmul.f32 %v1007, 1.442695
  %v1086 = vpow.pop %v1085
  %v1087 = vmul.f32 %v1008, 1.442695
  %v1088 = vpow.pop %v1087
  %v1089 = vmul.f32 %v1009, 1.442695
  %v1090 = vpow.pop %v1089
  %v1091 = vmul.f32 %v1010, 1.442695
  %v1092 = vpow.pop %v1091
  %v1093 = vmul.f32 %v1011, 1.442695
  %v1094 = vpow.pop %v1093
  %v1095 = vmul.f32 %v1012, 1.442695
  %v1096 = vpow.pop %v1095
  %v1097 = vmul.f32 %v1013, 1.442695
  %v1098 = vpow.pop %v1097
  %v1099 = vmul.f32 %v1014, 1.442695
  %v1100 = vpow.pop %v1099
  %v1101 = vmul.f32 %v1015, 1.442695
  %v1102 = vpow.pop %v1101
  %v1103 = vmul.f32 %v1016, 1.442695
  %v1104 = vpow.pop %v1103
  %v1105 = vmul.f32 %v1017, 1.442695
  %v1106 = vpow.pop %v1105
  %v1107 = vmul.f32 %v1018, 1.442695
  %v1108 = vpow.pop %v1107
  %v1109 = vmul.f32 %v1019, 1.442695
  %v1110 = vpow.pop %v1109
  %v1111 = vmul.f32 %v1020, 1.442695
  %v1112 = vpow.pop %v1111
  %v1113 = vmul.f32 %v1021, 1.442695
  %v1114 = vpow.pop %v1113
  %v1115 = vmul.f32 %v1022, 1.442695
  %v1116 = vpow.pop %v1115
  %v1117 = vmul.f32 %v1023, 1.442695
  %v1118 = vpow.pop %v1117
  %v1119 = vmul.f32 %v1024, 1.442695
  %v1120 = vpow.pop %v1119
  %v1121 = vmul.f32 %v1025, 1.442695
  %v1122 = vpow.pop %v1121
  %v1123 = vmul.f32 %v1026, 1.442695
  %v1124 = vpow.pop %v1123
  %v1125 = vmul.f32 %v1027, 1.442695
  %v1126 = vpow.pop %v1125
  %v1127 = vmul.f32 %v1028, 1.442695
  %v1128 = vpow.pop %v1127
  %v1129 = vmul.f32 %v1029, 1.442695
  %v1130 = vpow.pop %v1129
  %v1131 = vmul.f32 %v1030, 1.442695
  %v1132 = vpow.pop %v1131
  %v1133 = vmul.f32 %v1031, 1.442695
  %v1134 = vpow.pop %v1133
  %v1135 = vmul.f32 %v1032, 1.442695
  %v1136 = vpow.pop %v1135
  %v1137 = vmul.f32 %v1033, 1.442695
  %v1138 = vpow.pop %v1137
  %v1139 = vmul.f32 %v1034, 1.442695
  %v1140 = vpow.pop %v1139
  %v1141 = vmul.f32 %v1035, 1.442695
  %v1142 = vpow.pop %v1141
  %v1143 = vmul.f32 %v1036, 1.442695
  %v1144 = vpow.pop %v1143
  %v1145 = vmul.f32 %v1037, 1.442695
  %v1146 = vpow.pop %v1145
  %v1147 = vmul.f32 %v1038, 1.442695
  %v1148 = vpow.pop %v1147
  %v1149 = vmul.f32 %v1039, 1.442695
  %v1150 = vpow.pop %v1149
  %v1151 = vmul.f32 %v1040, 1.442695
  %v1152 = vpow.pop %v1151
  %v1153 = vmul.f32 %v1041, 1.442695
  %v1154 = vpow.pop %v1153
  %v1155 = vmul.f32 %v1042, 1.442695
  %v1156 = vpow.pop %v1155
  %v1157 = vmul.f32 %v1043, 1.442695
  %v1158 = vpow.pop %v1157
  %v1159 = vmul.f32 %v1044, 1.442695
  %v1160 = vpow.pop %v1159
  %v1161 = vmul.f32 %v1045, 1.442695
  %v1162 = vpow.pop %v1161
  %v1163 = vmul.f32 %v1046, 1.442695
  %v1164 = vpow.pop %v1163
  %v1165 = vmul.f32 %v1047, 1.442695
  %v1166 = vpow.pop %v1165
  %v1167 = vmul.f32 %v1048, 1.442695
  %v1168 = vpow.pop %v1167
  %v1169 = vmul.f32 %v1049, 1.442695
  %v1170 = vpow.pop %v1169
  %v1171 = vmul.f32 %v1050, 1.442695
  %v1172 = vpow.pop %v1171
  %v1173 = vmul.f32 %v1051, 1.442695
  %v1174 = vpow.pop %v1173
  %v1175 = vmul.f32 %v1052, 1.442695
  %v1176 = vpow.pop %v1175
  %v1177 = vmul.f32 %v1053, 1.442695
  %v1178 = vpow.pop %v1177
  %v1179 = vmul.f32 %v1054, 1.442695
  %v1180 = vpow.pop %v1179
  %v1181 = vmul.f32 %v1055, 1.442695
  %v1182 = vpow.pop %v1181
  %v1183 = vmul.f32 %v1056, 1.442695
  %v1184 = vpow.pop %v1183
  %v1185 = vadd.f32 %v1058, 1.0
  %v1186 = vadd.f32 %v1060, 1.0
  %v1187 = vadd.f32 %v1062, 1.0
  %v1188 = vadd.f32 %v1064, 1.0
  %v1189 = vadd.f32 %v1066, 1.0
  %v1190 = vadd.f32 %v1068, 1.0
  %v1191 = vadd.f32 %v1070, 1.0
  %v1192 = vadd.f32 %v1072, 1.0
  %v1193 = vadd.f32 %v1074, 1.0
  %v1194 = vadd.f32 %v1076, 1.0
  %v1195 = vadd.f32 %v1078, 1.0
  %v1196 = vadd.f32 %v1080, 1.0
  %v1197 = vadd.f32 %v1082, 1.0
  %v1198 = vadd.f32 %v1084, 1.0
  %v1199 = vadd.f32 %v1086, 1.0
  %v1200 = vadd.f32 %v1088, 1.0
  %v1201 = vadd.f32 %v1090, 1.0
  %v1202 = vadd.f32 %v1092, 1.0
  %v1203 = vadd.f32 %v1094, 1.0
  %v1204 = vadd.f32 %v1096, 1.0
  %v1205 = vadd.f32 %v1098, 1.0
  %v1206 = vadd.f32 %v1100, 1.0
  %v1207 = vadd.f32 %v1102, 1.0
  %v1208 = vadd.f32 %v1104, 1.0
  %v1209 = vadd.f32 %v1106, 1.0
  %v1210 = vadd.f32 %v1108, 1.0
  %v1211 = vadd.f32 %v1110, 1.0
  %v1212 = vadd.f32 %v1112, 1.0
  %v1213 = vadd.f32 %v1114, 1.0
  %v1214 = vadd.f32 %v1116, 1.0
  %v1215 = vadd.f32 %v1118, 1.0
  %v1216 = vadd.f32 %v1120, 1.0
  %v1217 = vadd.f32 %v1122, 1.0
  %v1218 = vadd.f32 %v1124, 1.0
  %v1219 = vadd.f32 %v1126, 1.0
  %v1220 = vadd.f32 %v1128, 1.0
  %v1221 = vadd.f32 %v1130, 1.0
  %v1222 = vadd.f32 %v1132, 1.0
  %v1223 = vadd.f32 %v1134, 1.0
  %v1224 = vadd.f32 %v1136, 1.0
  %v1225 = vadd.f32 %v1138, 1.0
  %v1226 = vadd.f32 %v1140, 1.0
  %v1227 = vadd.f32 %v1142, 1.0
  %v1228 = vadd.f32 %v1144, 1.0
  %v1229 = vadd.f32 %v1146, 1.0
  %v1230 = vadd.f32 %v1148, 1.0
  %v1231 = vadd.f32 %v1150, 1.0
  %v1232 = vadd.f32 %v1152, 1.0
  %v1233 = vadd.f32 %v1154, 1.0
  %v1234 = vadd.f32 %v1156, 1.0
  %v1235 = vadd.f32 %v1158, 1.0
  %v1236 = vadd.f32 %v1160, 1.0
  %v1237 = vadd.f32 %v1162, 1.0
  %v1238 = vadd.f32 %v1164, 1.0
  %v1239 = vadd.f32 %v1166, 1.0
  %v1240 = vadd.f32 %v1168, 1.0
  %v1241 = vadd.f32 %v1170, 1.0
  %v1242 = vadd.f32 %v1172, 1.0
  %v1243 = vadd.f32 %v1174, 1.0
  %v1244 = vadd.f32 %v1176, 1.0
  %v1245 = vadd.f32 %v1178, 1.0
  %v1246 = vadd.f32 %v1180, 1.0
  %v1247 = vadd.f32 %v1182, 1.0
  %v1248 = vadd.f32 %v1184, 1.0
  %v1249 = vrcp.pop %v1185
  %v1250 = vmul.f32 1.0, %v1249
  %v1251 = vrcp.pop %v1186
  %v1252 = vmul.f32 1.0, %v1251
  %v1253 = vrcp.pop %v1187
  %v1254 = vmul.f32 1.0, %v1253
  %v1255 = vrcp.pop %v1188
  %v1256 = vmul.f32 1.0, %v1255
  %v1257 = vrcp.pop %v1189
  %v1258 = vmul.f32 1.0, %v1257
  %v1259 = vrcp.pop %v1190
  %v1260 = vmul.f32 1.0, %v1259
  %v1261 = vrcp.pop %v1191
  %v1262 = vmul.f32 1.0, %v1261
  %v1263 = vrcp.pop %v1192
  %v1264 = vmul.f32 1.0, %v1263
  %v1265 = vrcp.pop %v1193
  %v1266 = vmul.f32 1.0, %v1265
  %v1267 = vrcp.pop %v1194
  %v1268 = vmul.f32 1.0, %v1267
  %v1269 = vrcp.pop %v1195
  %v1270 = vmul.f32 1.0, %v1269
  %v1271 = vrcp.pop %v1196
  %v1272 = vmul.f32 1.0, %v1271
  %v1273 = vrcp.pop %v1197
  %v1274 = vmul.f32 1.0, %v1273
  %v1275 = vrcp.pop %v1198
  %v1276 = vmul.f32 1.0, %v1275
  %v1277 = vrcp.pop %v1199
  %v1278 = vmul.f32 1.0, %v1277
  %v1279 = vrcp.pop %v1200
  %v1280 = vmul.f32 1.0, %v1279
  %v1281 = vrcp.pop %v1201
  %v1282 = vmul.f32 1.0, %v1281
  %v1283 = vrcp.pop %v1202
  %v1284 = vmul.f32 1.0, %v1283
  %v1285 = vrcp.pop %v1203
  %v1286 = vmul.f32 1.0, %v1285
  %v1287 = vrcp.pop %v1204
  %v1288 = vmul.f32 1.0, %v1287
  %v1289 = vrcp.pop %v1205
  %v1290 = vmul.f32 1.0, %v1289
  %v1291 = vrcp.pop %v1206
  %v1292 = vmul.f32 1.0, %v1291
  %v1293 = vrcp.pop %v1207
  %v1294 = vmul.f32 1.0, %v1293
  %v1295 = vrcp.pop %v1208
  %v1296 = vmul.f32 1.0, %v1295
  %v1297 = vrcp.pop %v1209
  %v1298 = vmul.f32 1.0, %v1297
  %v1299 = vrcp.pop %v1210
  %v1300 = vmul.f32 1.0, %v1299
  %v1301 = vrcp.pop %v1211
  %v1302 = vmul.f32 1.0, %v1301
  %v1303 = vrcp.pop %v1212
  %v1304 = vmul.f32 1.0, %v1303
  %v1305 = vrcp.pop %v1213
  %v1306 = vmul.f32 1.0, %v1305
  %v1307 = vrcp.pop %v1214
  %v1308 = vmul.f32 1.0, %v1307
  %v1309 = vrcp.pop %v1215
  %v1310 = vmul.f32 1.0, %v1309
  %v1311 = vrcp.pop %v1216
  %v1312 = vmul.f32 1.0, %v1311
  %v1313 = vrcp.pop %v1217
  %v1314 = vmul.f32 1.0, %v1313
  %v1315 = vrcp.pop %v1218
  %v1316 = vmul.f32 1.0, %v1315
  %v1317 = vrcp.pop %v1219
  %v1318 = vmul.f32 1.0, %v1317
  %v1319 = vrcp.pop %v1220
  %v1320 = vmul.f32 1.0, %v1319
  %v1321 = vrcp.pop %v1221
  %v1322 = vmul.f32 1.0, %v1321
  %v1323 = vrcp.pop %v1222
  %v1324 = vmul.f32 1.0, %v1323
  %v1325 = vrcp.pop %v1223
  %v1326 = vmul.f32 1.0, %v1325
  %v1327 = vrcp.pop %v1224
  %v1328 = vmul.f32 1.0, %v1327
  %v1329 = vrcp.pop %v1225
  %v1330 = vmul.f32 1.0, %v1329
  %v1331 = vrcp.pop %v1226
  %v1332 = vmul.f32 1.0, %v1331
  %v1333 = vrcp.pop %v1227
  %v1334 = vmul.f32 1.0, %v1333
  %v1335 = vrcp.pop %v1228
  %v1336 = vmul.f32 1.0, %v1335
  %v1337 = vrcp.pop %v1229
  %v1338 = vmul.f32 1.0, %v1337
  %v1339 = vrcp.pop %v1230
  %v1340 = vmul.f32 1.0, %v1339
  %v1341 = vrcp.pop %v1231
  %v1342 = vmul.f32 1.0, %v1341
  %v1343 = vrcp.pop %v1232
  %v1344 = vmul.f32 1.0, %v1343
  %v1345 = vrcp.pop %v1233
  %v1346 = vmul.f32 1.0, %v1345
  %v1347 = vrcp.pop %v1234
  %v1348 = vmul.f32 1.0, %v1347
  %v1349 = vrcp.pop %v1235
  %v1350 = vmul.f32 1.0, %v1349
  %v1351 = vrcp.pop %v1236
  %v1352 = vmul.f32 1.0, %v1351
  %v1353 = vrcp.pop %v1237
  %v1354 = vmul.f32 1.0, %v1353
  %v1355 = vrcp.pop %v1238
  %v1356 = vmul.f32 1.0, %v1355
  %v1357 = vrcp.pop %v1239
  %v1358 = vmul.f32 1.0, %v1357
  %v1359 = vrcp.pop %v1240
  %v1360 = vmul.f32 1.0, %v1359
  %v1361 = vrcp.pop %v1241
  %v1362 = vmul.f32 1.0, %v1361
  %v1363 = vrcp.pop %v1242
  %v1364 = vmul.f32 1.0, %v1363
  %v1365 = vrcp.pop %v1243
  %v1366 = vmul.f32 1.0, %v1365
  %v1367 = vrcp.pop %v1244
  %v1368 = vmul.f32 1.0, %v1367
  %v1369 = vrcp.pop %v1245
  %v1370 = vmul.f32 1.0, %v1369
  %v1371 = vrcp.pop %v1246
  %v1372 = vmul.f32 1.0, %v1371
  %v1373 = vrcp.pop %v1247
  %v1374 = vmul.f32 1.0, %v1373
  %v1375 = vrcp.pop %v1248
  %v1376 = vmul.f32 1.0, %v1375
  %v1377 = vmul.f32 %v739, %v1250
  %v1378 = vmul.f32 %v742, %v1252
  %v1379 = vmul.f32 %v747, %v1254
  %v1380 = vmul.f32 %v750, %v1256
  %v1381 = vmul.f32 %v755, %v1258
  %v1382 = vmul.f32 %v758, %v1260
  %v1383 = vmul.f32 %v763, %v1262
  %v1384 = vmul.f32 %v766, %v1264
  %v1385 = vmul.f32 %v771, %v1266
  %v1386 = vmul.f32 %v774, %v1268
  %v1387 = vmul.f32 %v779, %v1270
  %v1388 = vmul.f32 %v782, %v1272
  %v1389 = vmul.f32 %v787, %v1274
  %v1390 = vmul.f32 %v790, %v1276
  %v1391 = vmul.f32 %v795, %v1278
  %v1392 = vmul.f32 %v798, %v1280
  %v1393 = vmul.f32 %v803, %v1282
  %v1394 = vmul.f32 %v806, %v1284
  %v1395 = vmul.f32 %v811, %v1286
  %v1396 = vmul.f32 %v814, %v1288
  %v1397 = vmul.f32 %v819, %v1290
  %v1398 = vmul.f32 %v822, %v1292
  %v1399 = vmul.f32 %v827, %v1294
  %v1400 = vmul.f32 %v830, %v1296
  %v1401 = vmul.f32 %v835, %v1298
  %v1402 = vmul.f32 %v838, %v1300
  %v1403 = vmul.f32 %v843, %v1302
  %v1404 = vmul.f32 %v846, %v1304
  %v1405 = vmul.f32 %v851, %v1306
  %v1406 = vmul.f32 %v854, %v1308
  %v1407 = vmul.f32 %v859, %v1310
  %v1408 = vmul.f32 %v862, %v1312
  %v1409 = vmul.f32 %v867, %v1314
  %v1410 = vmul.f32 %v870, %v1316
  %v1411 = vmul.f32 %v875, %v1318
  %v1412 = vmul.f32 %v878, %v1320
  %v1413 = vmul.f32 %v883, %v1322
  %v1414 = vmul.f32 %v886, %v1324
  %v1415 = vmul.f32 %v891, %v1326
  %v1416 = vmul.f32 %v894, %v1328
  %v1417 = vmul.f32 %v899, %v1330
  %v1418 = vmul.f32 %v902, %v1332
  %v1419 = vmul.f32 %v907, %v1334
  %v1420 = vmul.f32 %v910, %v1336
  %v1421 = vmul.f32 %v915, %v1338
  %v1422 = vmul.f32 %v918, %v1340
  %v1423 = vmul.f32 %v923, %v1342
  %v1424 = vmul.f32 %v926, %v1344
  %v1425 = vmul.f32 %v931, %v1346
  %v1426 = vmul.f32 %v934, %v1348
  %v1427 = vmul.f32 %v939, %v1350
  %v1428 = vmul.f32 %v942, %v1352
  %v1429 = vmul.f32 %v947, %v1354
  %v1430 = vmul.f32 %v950, %v1356
  %v1431 = vmul.f32 %v955, %v1358
  %v1432 = vmul.f32 %v958, %v1360
  %v1433 = vmul.f32 %v963, %v1362
  %v1434 = vmul.f32 %v966, %v1364
  %v1435 = vmul.f32 %v971, %v1366
  %v1436 = vmul.f32 %v974, %v1368
  %v1437 = vmul.f32 %v979, %v1370
  %v1438 = vmul.f32 %v982, %v1372
  %v1439 = vmul.f32 %v987, %v1374
  %v1440 = vmul.f32 %v990, %v1376
  %1441 = vst.msk [vmem:[%s4] sm:$0xff] %vm635, %v1377
  %1442 = vst.msk [vmem:[%s4 + $0x8] sm:$0xff] %vm635, %v1378
  %1443 = vst.msk [vmem:[%s4 + $0x10] sm:$0xff] %vm635, %v1379
  %1444 = vst.msk [vmem:[%s4 + $0x18] sm:$0xff] %vm635, %v1380
  %1445 = vst.msk [vmem:[%s4 + $0x20] sm:$0xff] %vm635, %v1381
  %1446 = vst.msk [vmem:[%s4 + $0x28] sm:$0xff] %vm635, %v1382
  %1447 = vst.msk [vmem:[%s4 + $0x30] sm:$0xff] %vm635, %v1383
  %1448 = vst.msk [vmem:[%s4 + $0x38] sm:$0xff] %vm635, %v1384
  %1449 = vst.msk [vmem:[%s4 + $0x40] sm:$0xff] %vm635, %v1385
  %1450 = vst.msk [vmem:[%s4 + $0x48] sm:$0xff] %vm635, %v1386
  %1451 = vst.msk [vmem:[%s4 + $0x50] sm:$0xff] %vm635, %v1387
  %1452 = vst.msk [vmem:[%s4 + $0x58] sm:$0xff] %vm635, %v1388
  %1453 = vst.msk [vmem:[%s4 + $0x60] sm:$0xff] %vm635, %v1389
  %1454 = vst.msk [vmem:[%s4 + $0x68] sm:$0xff] %vm635, %v1390
  %1455 = vst.msk [vmem:[%s4 + $0x70] sm:$0xff] %vm635, %v1391
  %1456 = vst.msk [vmem:[%s4 + $0x78] sm:$0xff] %vm635, %v1392
  %1457 = vst.msk [vmem:[%s4 + $0x80] sm:$0xff] %vm635, %v1393
  %1458 = vst.msk [vmem:[%s4 + $0x88] sm:$0xff] %vm635, %v1394
  %1459 = vst.msk [vmem:[%s4 + $0x90] sm:$0xff] %vm635, %v1395
  %1460 = vst.msk [vmem:[%s4 + $0x98] sm:$0xff] %vm635, %v1396
  %1461 = vst.msk [vmem:[%s4 + $0xa0] sm:$0xff] %vm635, %v1397
  %1462 = vst.msk [vmem:[%s4 + $0xa8] sm:$0xff] %vm635, %v1398
  %1463 = vst.msk [vmem:[%s4 + $0xb0] sm:$0xff] %vm635, %v1399
  %1464 = vst.msk [vmem:[%s4 + $0xb8] sm:$0xff] %vm635, %v1400
  %1465 = vst.msk [vmem:[%s4 + $0xc0] sm:$0xff] %vm635, %v1401
  %1466 = vst.msk [vmem:[%s4 + $0xc8] sm:$0xff] %vm635, %v1402
  %1467 = vst.msk [vmem:[%s4 + $0xd0] sm:$0xff] %vm635, %v1403
  %1468 = vst.msk [vmem:[%s4 + $0xd8] sm:$0xff] %vm635, %v1404
  %1469 = vst.msk [vmem:[%s4 + $0xe0] sm:$0xff] %vm635, %v1405
  %1470 = vst.msk [vmem:[%s4 + $0xe8] sm:$0xff] %vm635, %v1406
  %1471 = vst.msk [vmem:[%s4 + $0xf0] sm:$0xff] %vm635, %v1407
  %1472 = vst.msk [vmem:[%s4 + $0xf8] sm:$0xff] %vm635, %v1408
  %1473 = vst.msk [vmem:[%s4 + $0x100] sm:$0xff] %vm635, %v1409
  %1474 = vst.msk [vmem:[%s4 + $0x108] sm:$0xff] %vm635, %v1410
  %1475 = vst.msk [vmem:[%s4 + $0x110] sm:$0xff] %vm635, %v1411
  %1476 = vst.msk [vmem:[%s4 + $0x118] sm:$0xff] %vm635, %v1412
  %1477 = vst.msk [vmem:[%s4 + $0x120] sm:$0xff] %vm635, %v1413
  %1478 = vst.msk [vmem:[%s4 + $0x128] sm:$0xff] %vm635, %v1414
  %1479 = vst.msk [vmem:[%s4 + $0x130] sm:$0xff] %vm635, %v1415
  %1480 = vst.msk [vmem:[%s4 + $0x138] sm:$0xff] %vm635, %v1416
  %1481 = vst.msk [vmem:[%s4 + $0x140] sm:$0xff] %vm635, %v1417
  %1482 = vst.msk [vmem:[%s4 + $0x148] sm:$0xff] %vm635, %v1418
  %1483 = vst.msk [vmem:[%s4 + $0x150] sm:$0xff] %vm635, %v1419
  %1484 = vst.msk [vmem:[%s4 + $0x158] sm:$0xff] %vm635, %v1420
  %1485 = vst.msk [vmem:[%s4 + $0x160] sm:$0xff] %vm635, %v1421
  %1486 = vst.msk [vmem:[%s4 + $0x168] sm:$0xff] %vm635, %v1422
  %1487 = vst.msk [vmem:[%s4 + $0x170] sm:$0xff] %vm635, %v1423
  %1488 = vst.msk [vmem:[%s4 + $0x178] sm:$0xff] %vm635, %v1424
  %1489 = vst.msk [vmem:[%s4 + $0x180] sm:$0xff] %vm635, %v1425
  %1490 = vst.msk [vmem:[%s4 + $0x188] sm:$0xff] %vm635, %v1426
  %1491 = vst.msk [vmem:[%s4 + $0x190] sm:$0xff] %vm635, %v1427
  %1492 = vst.msk [vmem:[%s4 + $0x198] sm:$0xff] %vm635, %v1428
  %1493 = vst.msk [vmem:[%s4 + $0x1a0] sm:$0xff] %vm635, %v1429
  %1494 = vst.msk [vmem:[%s4 + $0x1a8] sm:$0xff] %vm635, %v1430
  %1495 = vst.msk [vmem:[%s4 + $0x1b0] sm:$0xff] %vm635, %v1431
  %1496 = vst.msk [vmem:[%s4 + $0x1b8] sm:$0xff] %vm635, %v1432
  %1497 = vst.msk [vmem:[%s4 + $0x1c0] sm:$0xff] %vm635, %v1433
  %1498 = vst.msk [vmem:[%s4 + $0x1c8] sm:$0xff] %vm635, %v1434
  %1499 = vst.msk [vmem:[%s4 + $0x1d0] sm:$0xff] %vm635, %v1435
  %1500 = vst.msk [vmem:[%s4 + $0x1d8] sm:$0xff] %vm635, %v1436
  %1501 = vst.msk [vmem:[%s4 + $0x1e0] sm:$0xff] %vm635, %v1437
  %1502 = vst.msk [vmem:[%s4 + $0x1e8] sm:$0xff] %vm635, %v1438
  %1503 = vst.msk [vmem:[%s4 + $0x1f0] sm:$0xff] %vm635, %v1439
  %1504 = vst.msk [vmem:[%s4 + $0x1f8] sm:$0xff] %vm635, %v1440
  // Predicated region
  $region18: #{_lambda_.5} parent=0 // pred_check
    _
  $region19: #{_lambda_.5} parent=0 // pred_check_branch
    %1506 = sbr.rel (0) target = $region21
  $region20: #{_lambda_.5} parent=0 // pred_region
    _
  $region21: #{_lambda_.5} parent=0 // pred_fallthru
    _
  // Predicated region
  $region22: #{_lambda_.5} parent=0 // pred_check
    _
  $region23: #{_lambda_.5} parent=0 // pred_check_branch
    %1508 = sbr.rel (0) target = $region25
  $region24: #{_lambda_.5} parent=0 // pred_region
    _
  $region25: #{_lambda_.5} parent=0 // pred_fallthru
    _

// kernel: _lambda_.3
$region0: #{_lambda_.3}
  #allocation0 [shape = 'u32[]', space=smem, size = 0x4, offset = 0x4, fixed_abs, tag = 'smem constant byte address 0x4 - core index']
  #allocation1 [shape = 'u32[144,128]{1,0:T(1,128)}', space=vmem, size = 0x12000, scoped, tag = 'internal scratch']
  %s0 = inlined_call_operand.vmem [shape: f32[512,4], index: 0, kind: input, shape index: {}]
  %s1 = inlined_call_operand.vmem [shape: bf16[4,4], index: 1, kind: input, shape index: {}]
  %s2 = inlined_call_operand.vmem [shape: bf16[4,4], index: 2, kind: input, shape index: {}]
  %s3 = inlined_call_operand.vmem [shape: f32[1,4], index: 3, kind: input, shape index: {}]
  %s4 = inlined_call_operand.vmem [shape: f32[1,4], index: 4, kind: input, shape index: {}]
  %s5 = inlined_call_operand.vmem [shape: bf16[512,4], index: 5, kind: output, shape index: {0}]
  %s6 = inlined_call_operand.vmem [shape: bf16[512,4], index: 6, kind: output, shape index: {1}]
  %7 = xla_tuple %s5, %s6
  %s8 = sld [smem:[#allocation0]]
  $region38: #{_lambda_.3} parent=0
    _
  %s10 = ssub.s32 1, %s8
  %s11 = scalar_select 0, %s10, %s8
  // Predicated region
  $region2: #{_lambda_.3} parent=0 // pred_check
    _
  $region3: #{_lambda_.3} parent=0 // pred_check_branch
    %13 = sbr.rel (0) target = $region5
  $region4: #{_lambda_.3} parent=0 // pred_region
    _
  $region5: #{_lambda_.3} parent=0 // pred_fallthru
    _
  // Predicated region
  $region6: #{_lambda_.3} parent=0 // pred_check
    _
  $region7: #{_lambda_.3} parent=0 // pred_check_branch
    %15 = sbr.rel (0) target = $region9
  $region8: #{_lambda_.3} parent=0 // pred_region
    _
  $region9: #{_lambda_.3} parent=0 // pred_fallthru
    _
  // Predicated region
  $region10: #{_lambda_.3} parent=0 // pred_check
    _
  $region11: #{_lambda_.3} parent=0 // pred_check_branch
    %17 = sbr.rel (0) target = $region13
  $region12: #{_lambda_.3} parent=0 // pred_region
    _
  $region13: #{_lambda_.3} parent=0 // pred_fallthru
    _
  // Predicated region
  $region14: #{_lambda_.3} parent=0 // pred_check
    _
  $region15: #{_lambda_.3} parent=0 // pred_check_branch
    %19 = sbr.rel (0) target = $region17
  $region16: #{_lambda_.3} parent=0 // pred_region
    _
  $region17: #{_lambda_.3} parent=0 // pred_fallthru
    _
  // Predicated region
  $region18: #{_lambda_.3} parent=0 // pred_check
    _
  $region19: #{_lambda_.3} parent=0 // pred_check_branch
    %21 = sbr.rel (0) target = $region21
  $region20: #{_lambda_.3} parent=0 // pred_region
    _
  $region21: #{_lambda_.3} parent=0 // pred_fallthru
    _
  %v23 = vld [vmem:[%s0] sm:$0xff]
  %v24 = vld [vmem:[%s0 + $0x8] sm:$0xff]
  %v25 = vld [vmem:[%s0 + $0x10] sm:$0xff]
  %v26 = vld [vmem:[%s0 + $0x18] sm:$0xff]
  %v27 = vld [vmem:[%s0 + $0x20] sm:$0xff]
  %v28 = vld [vmem:[%s0 + $0x28] sm:$0xff]
  %v29 = vld [vmem:[%s0 + $0x30] sm:$0xff]
  %v30 = vld [vmem:[%s0 + $0x38] sm:$0xff]
  %v31 = vld [vmem:[%s0 + $0x40] sm:$0xff]
  %v32 = vld [vmem:[%s0 + $0x48] sm:$0xff]
  %v33 = vld [vmem:[%s0 + $0x50] sm:$0xff]
  %v34 = vld [vmem:[%s0 + $0x58] sm:$0xff]
  %v35 = vld [vmem:[%s0 + $0x60] sm:$0xff]
  %v36 = vld [vmem:[%s0 + $0x68] sm:$0xff]
  %v37 = vld [vmem:[%s0 + $0x70] sm:$0xff]
  %v38 = vld [vmem:[%s0 + $0x78] sm:$0xff]
  %v39 = vld [vmem:[%s0 + $0x80] sm:$0xff]
  %v40 = vld [vmem:[%s0 + $0x88] sm:$0xff]
  %v41 = vld [vmem:[%s0 + $0x90] sm:$0xff]
  %v42 = vld [vmem:[%s0 + $0x98] sm:$0xff]
  %v43 = vld [vmem:[%s0 + $0xa0] sm:$0xff]
  %v44 = vld [vmem:[%s0 + $0xa8] sm:$0xff]
  %v45 = vld [vmem:[%s0 + $0xb0] sm:$0xff]
  %v46 = vld [vmem:[%s0 + $0xb8] sm:$0xff]
  %v47 = vld [vmem:[%s0 + $0xc0] sm:$0xff]
  %v48 = vld [vmem:[%s0 + $0xc8] sm:$0xff]
  %v49 = vld [vmem:[%s0 + $0xd0] sm:$0xff]
  %v50 = vld [vmem:[%s0 + $0xd8] sm:$0xff]
  %v51 = vld [vmem:[%s0 + $0xe0] sm:$0xff]
  %v52 = vld [vmem:[%s0 + $0xe8] sm:$0xff]
  %v53 = vld [vmem:[%s0 + $0xf0] sm:$0xff]
  %v54 = vld [vmem:[%s0 + $0xf8] sm:$0xff]
  %v55 = vld [vmem:[%s0 + $0x100] sm:$0xff]
  %v56 = vld [vmem:[%s0 + $0x108] sm:$0xff]
  %v57 = vld [vmem:[%s0 + $0x110] sm:$0xff]
  %v58 = vld [vmem:[%s0 + $0x118] sm:$0xff]
  %v59 = vld [vmem:[%s0 + $0x120] sm:$0xff]
  %v60 = vld [vmem:[%s0 + $0x128] sm:$0xff]
  %v61 = vld [vmem:[%s0 + $0x130] sm:$0xff]
  %v62 = vld [vmem:[%s0 + $0x138] sm:$0xff]
  %v63 = vld [vmem:[%s0 + $0x140] sm:$0xff]
  %v64 = vld [vmem:[%s0 + $0x148] sm:$0xff]
  %v65 = vld [vmem:[%s0 + $0x150] sm:$0xff]
  %v66 = vld [vmem:[%s0 + $0x158] sm:$0xff]
  %v67 = vld [vmem:[%s0 + $0x160] sm:$0xff]
  %v68 = vld [vmem:[%s0 + $0x168] sm:$0xff]
  %v69 = vld [vmem:[%s0 + $0x170] sm:$0xff]
  %v70 = vld [vmem:[%s0 + $0x178] sm:$0xff]
  %v71 = vld [vmem:[%s0 + $0x180] sm:$0xff]
  %v72 = vld [vmem:[%s0 + $0x188] sm:$0xff]
  %v73 = vld [vmem:[%s0 + $0x190] sm:$0xff]
  %v74 = vld [vmem:[%s0 + $0x198] sm:$0xff]
  %v75 = vld [vmem:[%s0 + $0x1a0] sm:$0xff]
  %v76 = vld [vmem:[%s0 + $0x1a8] sm:$0xff]
  %v77 = vld [vmem:[%s0 + $0x1b0] sm:$0xff]
  %v78 = vld [vmem:[%s0 + $0x1b8] sm:$0xff]
  %v79 = vld [vmem:[%s0 + $0x1c0] sm:$0xff]
  %v80 = vld [vmem:[%s0 + $0x1c8] sm:$0xff]
  %v81 = vld [vmem:[%s0 + $0x1d0] sm:$0xff]
  %v82 = vld [vmem:[%s0 + $0x1d8] sm:$0xff]
  %v83 = vld [vmem:[%s0 + $0x1e0] sm:$0xff]
  %v84 = vld [vmem:[%s0 + $0x1e8] sm:$0xff]
  %v85 = vld [vmem:[%s0 + $0x1f0] sm:$0xff]
  %v86 = vld [vmem:[%s0 + $0x1f8] sm:$0xff]
  %v87 = vpack.c.bf16 %v24, %v23
  %v88 = vpack.c.bf16 %v26, %v25
  %v89 = vpack.c.bf16 %v28, %v27
  %v90 = vpack.c.bf16 %v30, %v29
  %v91 = vpack.c.bf16 %v32, %v31
  %v92 = vpack.c.bf16 %v34, %v33
  %v93 = vpack.c.bf16 %v36, %v35
  %v94 = vpack.c.bf16 %v38, %v37
  %v95 = vpack.c.bf16 %v40, %v39
  %v96 = vpack.c.bf16 %v42, %v41
  %v97 = vpack.c.bf16 %v44, %v43
  %v98 = vpack.c.bf16 %v46, %v45
  %v99 = vpack.c.bf16 %v48, %v47
  %v100 = vpack.c.bf16 %v50, %v49
  %v101 = vpack.c.bf16 %v52, %v51
  %v102 = vpack.c.bf16 %v54, %v53
  %v103 = vpack.c.bf16 %v56, %v55
  %v104 = vpack.c.bf16 %v58, %v57
  %v105 = vpack.c.bf16 %v60, %v59
  %v106 = vpack.c.bf16 %v62, %v61
  %v107 = vpack.c.bf16 %v64, %v63
  %v108 = vpack.c.bf16 %v66, %v65
  %v109 = vpack.c.bf16 %v68, %v67
  %v110 = vpack.c.bf16 %v70, %v69
  %v111 = vpack.c.bf16 %v72, %v71
  %v112 = vpack.c.bf16 %v74, %v73
  %v113 = vpack.c.bf16 %v76, %v75
  %v114 = vpack.c.bf16 %v78, %v77
  %v115 = vpack.c.bf16 %v80, %v79
  %v116 = vpack.c.bf16 %v82, %v81
  %v117 = vpack.c.bf16 %v84, %v83
  %v118 = vpack.c.bf16 %v86, %v85
  %v119 = vld [vmem:[%s1] sm:$0x3]
  %v120 = vld [vmem:[%s2] sm:$0x3]
  %v121 = vld [vmem:[%s3] sm:$0x1]
  %v123 = vlaneseq
  %v124 = vshrl.u32 %v123, 7
  %v125 = vsub.s32 0, %v124
  %v126 = vrot.slane %v121, %v125
  %vm128 = vcmask 31744
  %v130 = vsel %vm128, %v87, 0
  %v133 = vsel %vm128, %v88, 0
  %v136 = vsel %vm128, %v89, 0
  %v139 = vsel %vm128, %v90, 0
  %v142 = vsel %vm128, %v91, 0
  %v145 = vsel %vm128, %v92, 0
  %v148 = vsel %vm128, %v93, 0
  %v151 = vsel %vm128, %v94, 0
  %v154 = vsel %vm128, %v95, 0
  %v157 = vsel %vm128, %v96, 0
  %v160 = vsel %vm128, %v97, 0
  %v163 = vsel %vm128, %v98, 0
  %v166 = vsel %vm128, %v99, 0
  %v169 = vsel %vm128, %v100, 0
  %v172 = vsel %vm128, %v101, 0
  %v175 = vsel %vm128, %v102, 0
  %v178 = vsel %vm128, %v103, 0
  %v181 = vsel %vm128, %v104, 0
  %v184 = vsel %vm128, %v105, 0
  %v187 = vsel %vm128, %v106, 0
  %v190 = vsel %vm128, %v107, 0
  %v193 = vsel %vm128, %v108, 0
  %v196 = vsel %vm128, %v109, 0
  %v199 = vsel %vm128, %v110, 0
  %v202 = vsel %vm128, %v111, 0
  %v205 = vsel %vm128, %v112, 0
  %v208 = vsel %vm128, %v113, 0
  %v211 = vsel %vm128, %v114, 0
  %v214 = vsel %vm128, %v115, 0
  %v217 = vsel %vm128, %v116, 0
  %v220 = vsel %vm128, %v117, 0
  %v223 = vsel %vm128, %v118, 0
  %vm225 = vcmask 1041408
  %v227 = vsel %vm225, %v119, 0
  %229 = vmatprep.subr.bf16.mxu0 0
  %230 = vmatpush1.bf16.msra.mxu0 0
  %231 = vmatprep.subr.bf16.mxu0 0
  %232 = vmatpush1.bf16.msra.mxu0 0
  %233 = vmatprep.subr.bf16.mxu0 0
  %234 = vmatpush1.bf16.msra.mxu0 0
  %235 = vmatprep.subr.bf16.mxu0 0
  %236 = vmatpush1.bf16.msra.mxu0 0
  %237 = vmatprep.subr.bf16.mxu0 0
  %238 = vmatpush1.bf16.msra.mxu0 0
  %239 = vmatprep.subr.bf16.mxu0 0
  %240 = vmatpush1.bf16.msra.mxu0 0
  %241 = vmatprep.subr.bf16.mxu0 0
  %242 = vmatpush1.bf16.msra.mxu0 0
  %243 = vmatprep.subr.bf16.mxu0 0
  %244 = vmatpush1.bf16.msra.mxu0 %v227
  %245 = vmatprep.subr.bf16.mxu0 0
  %246 = vmatpush2.bf16.msra.mxu0 0
  %247 = vmatprep.subr.bf16.mxu0 0
  %248 = vmatpush2.bf16.msra.mxu0 0
  %249 = vmatprep.subr.bf16.mxu0 0
  %250 = vmatpush2.bf16.msra.mxu0 0
  %251 = vmatprep.subr.bf16.mxu0 0
  %252 = vmatpush2.bf16.msra.mxu0 0
  %253 = vmatprep.subr.bf16.mxu0 0
  %254 = vmatpush2.bf16.msra.mxu0 0
  %255 = vmatprep.subr.bf16.mxu0 0
  %256 = vmatpush2.bf16.msra.mxu0 0
  %257 = vmatprep.subr.bf16.mxu0 0
  %258 = vmatpush2.bf16.msra.mxu0 0
  %259 = vmatprep.subr.bf16.mxu0 0
  %260 = vmatpush2.bf16.msra.mxu0 0
  %261 = vmatprep.mubr.bf16.mxu0 0
  %262 = vmatmul.mubr.bf16.gmra.mxu0 %v130
  %v263 = vpop.f32.mrf.mxu0
  %v264 = vadd.f32 %v126, %v263
  %v265 = vpop.f32.mrf.mxu0
  %v266 = vpop.f32.mrf.mxu0
  %v267 = vadd.f32 %v126, %v266
  %v268 = vpop.f32.mrf.mxu0
  %269 = vmatprep.mubr.bf16.mxu0 0
  %270 = vmatmul.mubr.bf16.gmra.mxu0 %v133
  %v271 = vpop.f32.mrf.mxu0
  %v272 = vadd.f32 %v126, %v271
  %v273 = vpop.f32.mrf.mxu0
  %v274 = vpop.f32.mrf.mxu0
  %v275 = vadd.f32 %v126, %v274
  %v276 = vpop.f32.mrf.mxu0
  %277 = vmatprep.mubr.bf16.mxu0 0
  %278 = vmatmul.mubr.bf16.gmra.mxu0 %v136
  %v279 = vpop.f32.mrf.mxu0
  %v280 = vadd.f32 %v126, %v279
  %v281 = vpop.f32.mrf.mxu0
  %v282 = vpop.f32.mrf.mxu0
  %v283 = vadd.f32 %v126, %v282
  %v284 = vpop.f32.mrf.mxu0
  %285 = vmatprep.mubr.bf16.mxu0 0
  %286 = vmatmul.mubr.bf16.gmra.mxu0 %v139
  %v287 = vpop.f32.mrf.mxu0
  %v288 = vadd.f32 %v126, %v287
  %v289 = vpop.f32.mrf.mxu0
  %v290 = vpop.f32.mrf.mxu0
  %v291 = vadd.f32 %v126, %v290
  %v292 = vpop.f32.mrf.mxu0
  %293 = vmatprep.mubr.bf16.mxu0 0
  %294 = vmatmul.mubr.bf16.gmra.mxu0 %v142
  %v295 = vpop.f32.mrf.mxu0
  %v296 = vadd.f32 %v126, %v295
  %v297 = vpop.f32.mrf.mxu0
  %v298 = vpop.f32.mrf.mxu0
  %v299 = vadd.f32 %v126, %v298
  %v300 = vpop.f32.mrf.mxu0
  %301 = vmatprep.mubr.bf16.mxu0 0
  %302 = vmatmul.mubr.bf16.gmra.mxu0 %v145
  %v303 = vpop.f32.mrf.mxu0
  %v304 = vadd.f32 %v126, %v303
  %v305 = vpop.f32.mrf.mxu0
  %v306 = vpop.f32.mrf.mxu0
  %v307 = vadd.f32 %v126, %v306
  %v308 = vpop.f32.mrf.mxu0
  %309 = vmatprep.mubr.bf16.mxu0 0
  %310 = vmatmul.mubr.bf16.gmra.mxu0 %v148
  %v311 = vpop.f32.mrf.mxu0
  %v312 = vadd.f32 %v126, %v311
  %v313 = vpop.f32.mrf.mxu0
  %v314 = vpop.f32.mrf.mxu0
  %v315 = vadd.f32 %v126, %v314
  %v316 = vpop.f32.mrf.mxu0
  %317 = vmatprep.mubr.bf16.mxu0 0
  %318 = vmatmul.mubr.bf16.gmra.mxu0 %v151
  %v319 = vpop.f32.mrf.mxu0
  %v320 = vadd.f32 %v126, %v319
  %v321 = vpop.f32.mrf.mxu0
  %v322 = vpop.f32.mrf.mxu0
  %v323 = vadd.f32 %v126, %v322
  %v324 = vpop.f32.mrf.mxu0
  %325 = vmatprep.mubr.bf16.mxu0 0
  %326 = vmatmul.mubr.bf16.gmra.mxu0 %v154
  %v327 = vpop.f32.mrf.mxu0
  %v328 = vadd.f32 %v126, %v327
  %v329 = vpop.f32.mrf.mxu0
  %v330 = vpop.f32.mrf.mxu0
  %v331 = vadd.f32 %v126, %v330
  %v332 = vpop.f32.mrf.mxu0
  %333 = vmatprep.mubr.bf16.mxu0 0
  %334 = vmatmul.mubr.bf16.gmra.mxu0 %v157
  %v335 = vpop.f32.mrf.mxu0
  %v336 = vadd.f32 %v126, %v335
  %v337 = vpop.f32.mrf.mxu0
  %v338 = vpop.f32.mrf.mxu0
  %v339 = vadd.f32 %v126, %v338
  %v340 = vpop.f32.mrf.mxu0
  %341 = vmatprep.mubr.bf16.mxu0 0
  %342 = vmatmul.mubr.bf16.gmra.mxu0 %v160
  %v343 = vpop.f32.mrf.mxu0
  %v344 = vadd.f32 %v126, %v343
  %v345 = vpop.f32.mrf.mxu0
  %v346 = vpop.f32.mrf.mxu0
  %v347 = vadd.f32 %v126, %v346
  %v348 = vpop.f32.mrf.mxu0
  %349 = vmatprep.mubr.bf16.mxu0 0
  %350 = vmatmul.mubr.bf16.gmra.mxu0 %v163
  %v351 = vpop.f32.mrf.mxu0
  %v352 = vadd.f32 %v126, %v351
  %v353 = vpop.f32.mrf.mxu0
  %v354 = vpop.f32.mrf.mxu0
  %v355 = vadd.f32 %v126, %v354
  %v356 = vpop.f32.mrf.mxu0
  %357 = vmatprep.mubr.bf16.mxu0 0
  %358 = vmatmul.mubr.bf16.gmra.mxu0 %v166
  %v359 = vpop.f32.mrf.mxu0
  %v360 = vadd.f32 %v126, %v359
  %v361 = vpop.f32.mrf.mxu0
  %v362 = vpop.f32.mrf.mxu0
  %v363 = vadd.f32 %v126, %v362
  %v364 = vpop.f32.mrf.mxu0
  %365 = vmatprep.mubr.bf16.mxu0 0
  %366 = vmatmul.mubr.bf16.gmra.mxu0 %v169
  %v367 = vpop.f32.mrf.mxu0
  %v368 = vadd.f32 %v126, %v367
  %v369 = vpop.f32.mrf.mxu0
  %v370 = vpop.f32.mrf.mxu0
  %v371 = vadd.f32 %v126, %v370
  %v372 = vpop.f32.mrf.mxu0
  %373 = vmatprep.mubr.bf16.mxu0 0
  %374 = vmatmul.mubr.bf16.gmra.mxu0 %v172
  %v375 = vpop.f32.mrf.mxu0
  %v376 = vadd.f32 %v126, %v375
  %v377 = vpop.f32.mrf.mxu0
  %v378 = vpop.f32.mrf.mxu0
  %v379 = vadd.f32 %v126, %v378
  %v380 = vpop.f32.mrf.mxu0
  %381 = vmatprep.mubr.bf16.mxu0 0
  %382 = vmatmul.mubr.bf16.gmra.mxu0 %v175
  %v383 = vpop.f32.mrf.mxu0
  %v384 = vadd.f32 %v126, %v383
  %v385 = vpop.f32.mrf.mxu0
  %v386 = vpop.f32.mrf.mxu0
  %v387 = vadd.f32 %v126, %v386
  %v388 = vpop.f32.mrf.mxu0
  %389 = vmatprep.mubr.bf16.mxu0 0
  %390 = vmatmul.mubr.bf16.gmra.mxu0 %v178
  %v391 = vpop.f32.mrf.mxu0
  %v392 = vadd.f32 %v126, %v391
  %v393 = vpop.f32.mrf.mxu0
  %v394 = vpop.f32.mrf.mxu0
  %v395 = vadd.f32 %v126, %v394
  %v396 = vpop.f32.mrf.mxu0
  %397 = vmatprep.mubr.bf16.mxu0 0
  %398 = vmatmul.mubr.bf16.gmra.mxu0 %v181
  %v399 = vpop.f32.mrf.mxu0
  %v400 = vadd.f32 %v126, %v399
  %v401 = vpop.f32.mrf.mxu0
  %v402 = vpop.f32.mrf.mxu0
  %v403 = vadd.f32 %v126, %v402
  %v404 = vpop.f32.mrf.mxu0
  %405 = vmatprep.mubr.bf16.mxu0 0
  %406 = vmatmul.mubr.bf16.gmra.mxu0 %v184
  %v407 = vpop.f32.mrf.mxu0
  %v408 = vadd.f32 %v126, %v407
  %v409 = vpop.f32.mrf.mxu0
  %v410 = vpop.f32.mrf.mxu0
  %v411 = vadd.f32 %v126, %v410
  %v412 = vpop.f32.mrf.mxu0
  %413 = vmatprep.mubr.bf16.mxu0 0
  %414 = vmatmul.mubr.bf16.gmra.mxu0 %v187
  %v415 = vpop.f32.mrf.mxu0
  %v416 = vadd.f32 %v126, %v415
  %v417 = vpop.f32.mrf.mxu0
  %v418 = vpop.f32.mrf.mxu0
  %v419 = vadd.f32 %v126, %v418
  %v420 = vpop.f32.mrf.mxu0
  %421 = vmatprep.mubr.bf16.mxu0 0
  %422 = vmatmul.mubr.bf16.gmra.mxu0 %v190
  %v423 = vpop.f32.mrf.mxu0
  %v424 = vadd.f32 %v126, %v423
  %v425 = vpop.f32.mrf.mxu0
  %v426 = vpop.f32.mrf.mxu0
  %v427 = vadd.f32 %v126, %v426
  %v428 = vpop.f32.mrf.mxu0
  %429 = vmatprep.mubr.bf16.mxu0 0
  %430 = vmatmul.mubr.bf16.gmra.mxu0 %v193
  %v431 = vpop.f32.mrf.mxu0
  %v432 = vadd.f32 %v126, %v431
  %v433 = vpop.f32.mrf.mxu0
  %v434 = vpop.f32.mrf.mxu0
  %v435 = vadd.f32 %v126, %v434
  %v436 = vpop.f32.mrf.mxu0
  %437 = vmatprep.mubr.bf16.mxu0 0
  %438 = vmatmul.mubr.bf16.gmra.mxu0 %v196
  %v439 = vpop.f32.mrf.mxu0
  %v440 = vadd.f32 %v126, %v439
  %v441 = vpop.f32.mrf.mxu0
  %v442 = vpop.f32.mrf.mxu0
  %v443 = vadd.f32 %v126, %v442
  %v444 = vpop.f32.mrf.mxu0
  %445 = vmatprep.mubr.bf16.mxu0 0
  %446 = vmatmul.mubr.bf16.gmra.mxu0 %v199
  %v447 = vpop.f32.mrf.mxu0
  %v448 = vadd.f32 %v126, %v447
  %v449 = vpop.f32.mrf.mxu0
  %v450 = vpop.f32.mrf.mxu0
  %v451 = vadd.f32 %v126, %v450
  %v452 = vpop.f32.mrf.mxu0
  %453 = vmatprep.mubr.bf16.mxu0 0
  %454 = vmatmul.mubr.bf16.gmra.mxu0 %v202
  %v455 = vpop.f32.mrf.mxu0
  %v456 = vadd.f32 %v126, %v455
  %v457 = vpop.f32.mrf.mxu0
  %v458 = vpop.f32.mrf.mxu0
  %v459 = vadd.f32 %v126, %v458
  %v460 = vpop.f32.mrf.mxu0
  %461 = vmatprep.mubr.bf16.mxu0 0
  %462 = vmatmul.mubr.bf16.gmra.mxu0 %v205
  %v463 = vpop.f32.mrf.mxu0
  %v464 = vadd.f32 %v126, %v463
  %v465 = vpop.f32.mrf.mxu0
  %v466 = vpop.f32.mrf.mxu0
  %v467 = vadd.f32 %v126, %v466
  %v468 = vpop.f32.mrf.mxu0
  %469 = vmatprep.mubr.bf16.mxu0 0
  %470 = vmatmul.mubr.bf16.gmra.mxu0 %v208
  %v471 = vpop.f32.mrf.mxu0
  %v472 = vadd.f32 %v126, %v471
  %v473 = vpop.f32.mrf.mxu0
  %v474 = vpop.f32.mrf.mxu0
  %v475 = vadd.f32 %v126, %v474
  %v476 = vpop.f32.mrf.mxu0
  %477 = vmatprep.mubr.bf16.mxu0 0
  %478 = vmatmul.mubr.bf16.gmra.mxu0 %v211
  %v479 = vpop.f32.mrf.mxu0
  %v480 = vadd.f32 %v126, %v479
  %v481 = vpop.f32.mrf.mxu0
  %v482 = vpop.f32.mrf.mxu0
  %v483 = vadd.f32 %v126, %v482
  %v484 = vpop.f32.mrf.mxu0
  %485 = vmatprep.mubr.bf16.mxu0 0
  %486 = vmatmul.mubr.bf16.gmra.mxu0 %v214
  %v487 = vpop.f32.mrf.mxu0
  %v488 = vadd.f32 %v126, %v487
  %v489 = vpop.f32.mrf.mxu0
  %v490 = vpop.f32.mrf.mxu0
  %v491 = vadd.f32 %v126, %v490
  %v492 = vpop.f32.mrf.mxu0
  %493 = vmatprep.mubr.bf16.mxu0 0
  %494 = vmatmul.mubr.bf16.gmra.mxu0 %v217
  %v495 = vpop.f32.mrf.mxu0
  %v496 = vadd.f32 %v126, %v495
  %v497 = vpop.f32.mrf.mxu0
  %v498 = vpop.f32.mrf.mxu0
  %v499 = vadd.f32 %v126, %v498
  %v500 = vpop.f32.mrf.mxu0
  %501 = vmatprep.mubr.bf16.mxu0 0
  %502 = vmatmul.mubr.bf16.gmra.mxu0 %v220
  %v503 = vpop.f32.mrf.mxu0
  %v504 = vadd.f32 %v126, %v503
  %v505 = vpop.f32.mrf.mxu0
  %v506 = vpop.f32.mrf.mxu0
  %v507 = vadd.f32 %v126, %v506
  %v508 = vpop.f32.mrf.mxu0
  %509 = vmatprep.mubr.bf16.mxu0 0
  %510 = vmatmul.mubr.bf16.gmra.mxu0 %v223
  %v511 = vpop.f32.mrf.mxu0
  %v512 = vadd.f32 %v126, %v511
  %v513 = vpop.f32.mrf.mxu0
  %v514 = vpop.f32.mrf.mxu0
  %v515 = vadd.f32 %v126, %v514
  %v516 = vpop.f32.mrf.mxu0
  %517 = vdwg.mxu0
  %v518 = vxor.u32 %v264, 2147483648
  %v519 = vxor.u32 %v267, 2147483648
  %v520 = vxor.u32 %v272, 2147483648
  %v521 = vxor.u32 %v275, 2147483648
  %v522 = vxor.u32 %v280, 2147483648
  %v523 = vxor.u32 %v283, 2147483648
  %v524 = vxor.u32 %v288, 2147483648
  %v525 = vxor.u32 %v291, 2147483648
  %v526 = vxor.u32 %v296, 2147483648
  %v527 = vxor.u32 %v299, 2147483648
  %v528 = vxor.u32 %v304, 2147483648
  %v529 = vxor.u32 %v307, 2147483648
  %v530 = vxor.u32 %v312, 2147483648
  %v531 = vxor.u32 %v315, 2147483648
  %v532 = vxor.u32 %v320, 2147483648
  %v533 = vxor.u32 %v323, 2147483648
  %v534 = vxor.u32 %v328, 2147483648
  %v535 = vxor.u32 %v331, 2147483648
  %v536 = vxor.u32 %v336, 2147483648
  %v537 = vxor.u32 %v339, 2147483648
  %v538 = vxor.u32 %v344, 2147483648
  %v539 = vxor.u32 %v347, 2147483648
  %v540 = vxor.u32 %v352, 2147483648
  %v541 = vxor.u32 %v355, 2147483648
  %v542 = vxor.u32 %v360, 2147483648
  %v543 = vxor.u32 %v363, 2147483648
  %v544 = vxor.u32 %v368, 2147483648
  %v545 = vxor.u32 %v371, 2147483648
  %v546 = vxor.u32 %v376, 2147483648
  %v547 = vxor.u32 %v379, 2147483648
  %v548 = vxor.u32 %v384, 2147483648
  %v549 = vxor.u32 %v387, 2147483648
  %v550 = vxor.u32 %v392, 2147483648
  %v551 = vxor.u32 %v395, 2147483648
  %v552 = vxor.u32 %v400, 2147483648
  %v553 = vxor.u32 %v403, 2147483648
  %v554 = vxor.u32 %v408, 2147483648
  %v555 = vxor.u32 %v411, 2147483648
  %v556 = vxor.u32 %v416, 2147483648
  %v557 = vxor.u32 %v419, 2147483648
  %v558 = vxor.u32 %v424, 2147483648
  %v559 = vxor.u32 %v427, 2147483648
  %v560 = vxor.u32 %v432, 2147483648
  %v561 = vxor.u32 %v435, 2147483648
  %v562 = vxor.u32 %v440, 2147483648
  %v563 = vxor.u32 %v443, 2147483648
  %v564 = vxor.u32 %v448, 2147483648
  %v565 = vxor.u32 %v451, 2147483648
  %v566 = vxor.u32 %v456, 2147483648
  %v567 = vxor.u32 %v459, 2147483648
  %v568 = vxor.u32 %v464, 2147483648
  %v569 = vxor.u32 %v467, 2147483648
  %v570 = vxor.u32 %v472, 2147483648
  %v571 = vxor.u32 %v475, 2147483648
  %v572 = vxor.u32 %v480, 2147483648
  %v573 = vxor.u32 %v483, 2147483648
  %v574 = vxor.u32 %v488, 2147483648
  %v575 = vxor.u32 %v491, 2147483648
  %v576 = vxor.u32 %v496, 2147483648
  %v577 = vxor.u32 %v499, 2147483648
  %v578 = vxor.u32 %v504, 2147483648
  %v579 = vxor.u32 %v507, 2147483648
  %v580 = vxor.u32 %v512, 2147483648
  %v581 = vxor.u32 %v515, 2147483648
  %v582 = vmul.f32 %v518, 1.442695
  %v583 = vpow.pop %v582
  %v584 = vmul.f32 %v519, 1.442695
  %v585 = vpow.pop %v584
  %v586 = vmul.f32 %v520, 1.442695
  %v587 = vpow.pop %v586
  %v588 = vmul.f32 %v521, 1.442695
  %v589 = vpow.pop %v588
  %v590 = vmul.f32 %v522, 1.442695
  %v591 = vpow.pop %v590
  %v592 = vmul.f32 %v523, 1.442695
  %v593 = vpow.pop %v592
  %v594 = vmul.f32 %v524, 1.442695
  %v595 = vpow.pop %v594
  %v596 = vmul.f32 %v525, 1.442695
  %v597 = vpow.pop %v596
  %v598 = vmul.f32 %v526, 1.442695
  %v599 = vpow.pop %v598
  %v600 = vmul.f32 %v527, 1.442695
  %v601 = vpow.pop %v600
  %v602 = vmul.f32 %v528, 1.442695
  %v603 = vpow.pop %v602
  %v604 = vmul.f32 %v529, 1.442695
  %v605 = vpow.pop %v604
  %v606 = vmul.f32 %v530, 1.442695
  %v607 = vpow.pop %v606
  %v608 = vmul.f32 %v531, 1.442695
  %v609 = vpow.pop %v608
  %v610 = vmul.f32 %v532, 1.442695
  %v611 = vpow.pop %v610
  %v612 = vmul.f32 %v533, 1.442695
  %v613 = vpow.pop %v612
  %v614 = vmul.f32 %v534, 1.442695
  %v615 = vpow.pop %v614
  %v616 = vmul.f32 %v535, 1.442695
  %v617 = vpow.pop %v616
  %v618 = vmul.f32 %v536, 1.442695
  %v619 = vpow.pop %v618
  %v620 = vmul.f32 %v537, 1.442695
  %v621 = vpow.pop %v620
  %v622 = vmul.f32 %v538, 1.442695
  %v623 = vpow.pop %v622
  %v624 = vmul.f32 %v539, 1.442695
  %v625 = vpow.pop %v624
  %v626 = vmul.f32 %v540, 1.442695
  %v627 = vpow.pop %v626
  %v628 = vmul.f32 %v541, 1.442695
  %v629 = vpow.pop %v628
  %v630 = vmul.f32 %v542, 1.442695
  %v631 = vpow.pop %v630
  %v632 = vmul.f32 %v543, 1.442695
  %v633 = vpow.pop %v632
  %v634 = vmul.f32 %v544, 1.442695
  %v635 = vpow.pop %v634
  %v636 = vmul.f32 %v545, 1.442695
  %v637 = vpow.pop %v636
  %v638 = vmul.f32 %v546, 1.442695
  %v639 = vpow.pop %v638
  %v640 = vmul.f32 %v547, 1.442695
  %v641 = vpow.pop %v640
  %v642 = vmul.f32 %v548, 1.442695
  %v643 = vpow.pop %v642
  %v644 = vmul.f32 %v549, 1.442695
  %v645 = vpow.pop %v644
  %v646 = vmul.f32 %v550, 1.442695
  %v647 = vpow.pop %v646
  %v648 = vmul.f32 %v551, 1.442695
  %v649 = vpow.pop %v648
  %v650 = vmul.f32 %v552, 1.442695
  %v651 = vpow.pop %v650
  %v652 = vmul.f32 %v553, 1.442695
  %v653 = vpow.pop %v652
  %v654 = vmul.f32 %v554, 1.442695
  %v655 = vpow.pop %v654
  %v656 = vmul.f32 %v555, 1.442695
  %v657 = vpow.pop %v656
  %v658 = vmul.f32 %v556, 1.442695
  %v659 = vpow.pop %v658
  %v660 = vmul.f32 %v557, 1.442695
  %v661 = vpow.pop %v660
  %v662 = vmul.f32 %v558, 1.442695
  %v663 = vpow.pop %v662
  %v664 = vmul.f32 %v559, 1.442695
  %v665 = vpow.pop %v664
  %v666 = vmul.f32 %v560, 1.442695
  %v667 = vpow.pop %v666
  %v668 = vmul.f32 %v561, 1.442695
  %v669 = vpow.pop %v668
  %v670 = vmul.f32 %v562, 1.442695
  %v671 = vpow.pop %v670
  %v672 = vmul.f32 %v563, 1.442695
  %v673 = vpow.pop %v672
  %v674 = vmul.f32 %v564, 1.442695
  %v675 = vpow.pop %v674
  %v676 = vmul.f32 %v565, 1.442695
  %v677 = vpow.pop %v676
  %v678 = vmul.f32 %v566, 1.442695
  %v679 = vpow.pop %v678
  %v680 = vmul.f32 %v567, 1.442695
  %v681 = vpow.pop %v680
  %v682 = vmul.f32 %v568, 1.442695
  %v683 = vpow.pop %v682
  %v684 = vmul.f32 %v569, 1.442695
  %v685 = vpow.pop %v684
  %v686 = vmul.f32 %v570, 1.442695
  %v687 = vpow.pop %v686
  %v688 = vmul.f32 %v571, 1.442695
  %v689 = vpow.pop %v688
  %v690 = vmul.f32 %v572, 1.442695
  %v691 = vpow.pop %v690
  %v692 = vmul.f32 %v573, 1.442695
  %v693 = vpow.pop %v692
  %v694 = vmul.f32 %v574, 1.442695
  %v695 = vpow.pop %v694
  %v696 = vmul.f32 %v575, 1.442695
  %v697 = vpow.pop %v696
  %v698 = vmul.f32 %v576, 1.442695
  %v699 = vpow.pop %v698
  %v700 = vmul.f32 %v577, 1.442695
  %v701 = vpow.pop %v700
  %v702 = vmul.f32 %v578, 1.442695
  %v703 = vpow.pop %v702
  %v704 = vmul.f32 %v579, 1.442695
  %v705 = vpow.pop %v704
  %v706 = vmul.f32 %v580, 1.442695
  %v707 = vpow.pop %v706
  %v708 = vmul.f32 %v581, 1.442695
  %v709 = vpow.pop %v708
  %v710 = vadd.f32 %v583, 1.0
  %v711 = vadd.f32 %v585, 1.0
  %v712 = vadd.f32 %v587, 1.0
  %v713 = vadd.f32 %v589, 1.0
  %v714 = vadd.f32 %v591, 1.0
  %v715 = vadd.f32 %v593, 1.0
  %v716 = vadd.f32 %v595, 1.0
  %v717 = vadd.f32 %v597, 1.0
  %v718 = vadd.f32 %v599, 1.0
  %v719 = vadd.f32 %v601, 1.0
  %v720 = vadd.f32 %v603, 1.0
  %v721 = vadd.f32 %v605, 1.0
  %v722 = vadd.f32 %v607, 1.0
  %v723 = vadd.f32 %v609, 1.0
  %v724 = vadd.f32 %v611, 1.0
  %v725 = vadd.f32 %v613, 1.0
  %v726 = vadd.f32 %v615, 1.0
  %v727 = vadd.f32 %v617, 1.0
  %v728 = vadd.f32 %v619, 1.0
  %v729 = vadd.f32 %v621, 1.0
  %v730 = vadd.f32 %v623, 1.0
  %v731 = vadd.f32 %v625, 1.0
  %v732 = vadd.f32 %v627, 1.0
  %v733 = vadd.f32 %v629, 1.0
  %v734 = vadd.f32 %v631, 1.0
  %v735 = vadd.f32 %v633, 1.0
  %v736 = vadd.f32 %v635, 1.0
  %v737 = vadd.f32 %v637, 1.0
  %v738 = vadd.f32 %v639, 1.0
  %v739 = vadd.f32 %v641, 1.0
  %v740 = vadd.f32 %v643, 1.0
  %v741 = vadd.f32 %v645, 1.0
  %v742 = vadd.f32 %v647, 1.0
  %v743 = vadd.f32 %v649, 1.0
  %v744 = vadd.f32 %v651, 1.0
  %v745 = vadd.f32 %v653, 1.0
  %v746 = vadd.f32 %v655, 1.0
  %v747 = vadd.f32 %v657, 1.0
  %v748 = vadd.f32 %v659, 1.0
  %v749 = vadd.f32 %v661, 1.0
  %v750 = vadd.f32 %v663, 1.0
  %v751 = vadd.f32 %v665, 1.0
  %v752 = vadd.f32 %v667, 1.0
  %v753 = vadd.f32 %v669, 1.0
  %v754 = vadd.f32 %v671, 1.0
  %v755 = vadd.f32 %v673, 1.0
  %v756 = vadd.f32 %v675, 1.0
  %v757 = vadd.f32 %v677, 1.0
  %v758 = vadd.f32 %v679, 1.0
  %v759 = vadd.f32 %v681, 1.0
  %v760 = vadd.f32 %v683, 1.0
  %v761 = vadd.f32 %v685, 1.0
  %v762 = vadd.f32 %v687, 1.0
  %v763 = vadd.f32 %v689, 1.0
  %v764 = vadd.f32 %v691, 1.0
  %v765 = vadd.f32 %v693, 1.0
  %v766 = vadd.f32 %v695, 1.0
  %v767 = vadd.f32 %v697, 1.0
  %v768 = vadd.f32 %v699, 1.0
  %v769 = vadd.f32 %v701, 1.0
  %v770 = vadd.f32 %v703, 1.0
  %v771 = vadd.f32 %v705, 1.0
  %v772 = vadd.f32 %v707, 1.0
  %v773 = vadd.f32 %v709, 1.0
  %v774 = vrcp.pop %v710
  %v775 = vmul.f32 1.0, %v774
  %v776 = vrcp.pop %v711
  %v777 = vmul.f32 1.0, %v776
  %v778 = vrcp.pop %v712
  %v779 = vmul.f32 1.0, %v778
  %v780 = vrcp.pop %v713
  %v781 = vmul.f32 1.0, %v780
  %v782 = vrcp.pop %v714
  %v783 = vmul.f32 1.0, %v782
  %v784 = vrcp.pop %v715
  %v785 = vmul.f32 1.0, %v784
  %v786 = vrcp.pop %v716
  %v787 = vmul.f32 1.0, %v786
  %v788 = vrcp.pop %v717
  %v789 = vmul.f32 1.0, %v788
  %v790 = vrcp.pop %v718
  %v791 = vmul.f32 1.0, %v790
  %v792 = vrcp.pop %v719
  %v793 = vmul.f32 1.0, %v792
  %v794 = vrcp.pop %v720
  %v795 = vmul.f32 1.0, %v794
  %v796 = vrcp.pop %v721
  %v797 = vmul.f32 1.0, %v796
  %v798 = vrcp.pop %v722
  %v799 = vmul.f32 1.0, %v798
  %v800 = vrcp.pop %v723
  %v801 = vmul.f32 1.0, %v800
  %v802 = vrcp.pop %v724
  %v803 = vmul.f32 1.0, %v802
  %v804 = vrcp.pop %v725
  %v805 = vmul.f32 1.0, %v804
  %v806 = vrcp.pop %v726
  %v807 = vmul.f32 1.0, %v806
  %v808 = vrcp.pop %v727
  %v809 = vmul.f32 1.0, %v808
  %v810 = vrcp.pop %v728
  %v811 = vmul.f32 1.0, %v810
  %v812 = vrcp.pop %v729
  %v813 = vmul.f32 1.0, %v812
  %v814 = vrcp.pop %v730
  %v815 = vmul.f32 1.0, %v814
  %v816 = vrcp.pop %v731
  %v817 = vmul.f32 1.0, %v816
  %v818 = vrcp.pop %v732
  %v819 = vmul.f32 1.0, %v818
  %v820 = vrcp.pop %v733
  %v821 = vmul.f32 1.0, %v820
  %v822 = vrcp.pop %v734
  %v823 = vmul.f32 1.0, %v822
  %v824 = vrcp.pop %v735
  %v825 = vmul.f32 1.0, %v824
  %v826 = vrcp.pop %v736
  %v827 = vmul.f32 1.0, %v826
  %v828 = vrcp.pop %v737
  %v829 = vmul.f32 1.0, %v828
  %v830 = vrcp.pop %v738
  %v831 = vmul.f32 1.0, %v830
  %v832 = vrcp.pop %v739
  %v833 = vmul.f32 1.0, %v832
  %v834 = vrcp.pop %v740
  %v835 = vmul.f32 1.0, %v834
  %v836 = vrcp.pop %v741
  %v837 = vmul.f32 1.0, %v836
  %v838 = vrcp.pop %v742
  %v839 = vmul.f32 1.0, %v838
  %v840 = vrcp.pop %v743
  %v841 = vmul.f32 1.0, %v840
  %v842 = vrcp.pop %v744
  %v843 = vmul.f32 1.0, %v842
  %v844 = vrcp.pop %v745
  %v845 = vmul.f32 1.0, %v844
  %v846 = vrcp.pop %v746
  %v847 = vmul.f32 1.0, %v846
  %v848 = vrcp.pop %v747
  %v849 = vmul.f32 1.0, %v848
  %v850 = vrcp.pop %v748
  %v851 = vmul.f32 1.0, %v850
  %v852 = vrcp.pop %v749
  %v853 = vmul.f32 1.0, %v852
  %v854 = vrcp.pop %v750
  %v855 = vmul.f32 1.0, %v854
  %v856 = vrcp.pop %v751
  %v857 = vmul.f32 1.0, %v856
  %v858 = vrcp.pop %v752
  %v859 = vmul.f32 1.0, %v858
  %v860 = vrcp.pop %v753
  %v861 = vmul.f32 1.0, %v860
  %v862 = vrcp.pop %v754
  %v863 = vmul.f32 1.0, %v862
  %v864 = vrcp.pop %v755
  %v865 = vmul.f32 1.0, %v864
  %v866 = vrcp.pop %v756
  %v867 = vmul.f32 1.0, %v866
  %v868 = vrcp.pop %v757
  %v869 = vmul.f32 1.0, %v868
  %v870 = vrcp.pop %v758
  %v871 = vmul.f32 1.0, %v870
  %v872 = vrcp.pop %v759
  %v873 = vmul.f32 1.0, %v872
  %v874 = vrcp.pop %v760
  %v875 = vmul.f32 1.0, %v874
  %v876 = vrcp.pop %v761
  %v877 = vmul.f32 1.0, %v876
  %v878 = vrcp.pop %v762
  %v879 = vmul.f32 1.0, %v878
  %v880 = vrcp.pop %v763
  %v881 = vmul.f32 1.0, %v880
  %v882 = vrcp.pop %v764
  %v883 = vmul.f32 1.0, %v882
  %v884 = vrcp.pop %v765
  %v885 = vmul.f32 1.0, %v884
  %v886 = vrcp.pop %v766
  %v887 = vmul.f32 1.0, %v886
  %v888 = vrcp.pop %v767
  %v889 = vmul.f32 1.0, %v888
  %v890 = vrcp.pop %v768
  %v891 = vmul.f32 1.0, %v890
  %v892 = vrcp.pop %v769
  %v893 = vmul.f32 1.0, %v892
  %v894 = vrcp.pop %v770
  %v895 = vmul.f32 1.0, %v894
  %v896 = vrcp.pop %v771
  %v897 = vmul.f32 1.0, %v896
  %v898 = vrcp.pop %v772
  %v899 = vmul.f32 1.0, %v898
  %v900 = vrcp.pop %v773
  %v901 = vmul.f32 1.0, %v900
  %v902 = vmul.f32 %v264, %v775
  %v903 = vmul.f32 %v267, %v777
  %v904 = vmul.f32 %v272, %v779
  %v905 = vmul.f32 %v275, %v781
  %v906 = vmul.f32 %v280, %v783
  %v907 = vmul.f32 %v283, %v785
  %v908 = vmul.f32 %v288, %v787
  %v909 = vmul.f32 %v291, %v789
  %v910 = vmul.f32 %v296, %v791
  %v911 = vmul.f32 %v299, %v793
  %v912 = vmul.f32 %v304, %v795
  %v913 = vmul.f32 %v307, %v797
  %v914 = vmul.f32 %v312, %v799
  %v915 = vmul.f32 %v315, %v801
  %v916 = vmul.f32 %v320, %v803
  %v917 = vmul.f32 %v323, %v805
  %v918 = vmul.f32 %v328, %v807
  %v919 = vmul.f32 %v331, %v809
  %v920 = vmul.f32 %v336, %v811
  %v921 = vmul.f32 %v339, %v813
  %v922 = vmul.f32 %v344, %v815
  %v923 = vmul.f32 %v347, %v817
  %v924 = vmul.f32 %v352, %v819
  %v925 = vmul.f32 %v355, %v821
  %v926 = vmul.f32 %v360, %v823
  %v927 = vmul.f32 %v363, %v825
  %v928 = vmul.f32 %v368, %v827
  %v929 = vmul.f32 %v371, %v829
  %v930 = vmul.f32 %v376, %v831
  %v931 = vmul.f32 %v379, %v833
  %v932 = vmul.f32 %v384, %v835
  %v933 = vmul.f32 %v387, %v837
  %v934 = vmul.f32 %v392, %v839
  %v935 = vmul.f32 %v395, %v841
  %v936 = vmul.f32 %v400, %v843
  %v937 = vmul.f32 %v403, %v845
  %v938 = vmul.f32 %v408, %v847
  %v939 = vmul.f32 %v411, %v849
  %v940 = vmul.f32 %v416, %v851
  %v941 = vmul.f32 %v419, %v853
  %v942 = vmul.f32 %v424, %v855
  %v943 = vmul.f32 %v427, %v857
  %v944 = vmul.f32 %v432, %v859
  %v945 = vmul.f32 %v435, %v861
  %v946 = vmul.f32 %v440, %v863
  %v947 = vmul.f32 %v443, %v865
  %v948 = vmul.f32 %v448, %v867
  %v949 = vmul.f32 %v451, %v869
  %v950 = vmul.f32 %v456, %v871
  %v951 = vmul.f32 %v459, %v873
  %v952 = vmul.f32 %v464, %v875
  %v953 = vmul.f32 %v467, %v877
  %v954 = vmul.f32 %v472, %v879
  %v955 = vmul.f32 %v475, %v881
  %v956 = vmul.f32 %v480, %v883
  %v957 = vmul.f32 %v483, %v885
  %v958 = vmul.f32 %v488, %v887
  %v959 = vmul.f32 %v491, %v889
  %v960 = vmul.f32 %v496, %v891
  %v961 = vmul.f32 %v499, %v893
  %v962 = vmul.f32 %v504, %v895
  %v963 = vmul.f32 %v507, %v897
  %v964 = vmul.f32 %v512, %v899
  %v965 = vmul.f32 %v515, %v901
  %v966 = vpack.c.bf16 %v903, %v902
  %v967 = vpack.c.bf16 %v905, %v904
  %v968 = vpack.c.bf16 %v907, %v906
  %v969 = vpack.c.bf16 %v909, %v908
  %v970 = vpack.c.bf16 %v911, %v910
  %v971 = vpack.c.bf16 %v913, %v912
  %v972 = vpack.c.bf16 %v915, %v914
  %v973 = vpack.c.bf16 %v917, %v916
  %v974 = vpack.c.bf16 %v919, %v918
  %v975 = vpack.c.bf16 %v921, %v920
  %v976 = vpack.c.bf16 %v923, %v922
  %v977 = vpack.c.bf16 %v925, %v924
  %v978 = vpack.c.bf16 %v927, %v926
  %v979 = vpack.c.bf16 %v929, %v928
  %v980 = vpack.c.bf16 %v931, %v930
  %v981 = vpack.c.bf16 %v933, %v932
  %v982 = vpack.c.bf16 %v935, %v934
  %v983 = vpack.c.bf16 %v937, %v936
  %v984 = vpack.c.bf16 %v939, %v938
  %v985 = vpack.c.bf16 %v941, %v940
  %v986 = vpack.c.bf16 %v943, %v942
  %v987 = vpack.c.bf16 %v945, %v944
  %v988 = vpack.c.bf16 %v947, %v946
  %v989 = vpack.c.bf16 %v949, %v948
  %v990 = vpack.c.bf16 %v951, %v950
  %v991 = vpack.c.bf16 %v953, %v952
  %v992 = vpack.c.bf16 %v955, %v954
  %v993 = vpack.c.bf16 %v957, %v956
  %v994 = vpack.c.bf16 %v959, %v958
  %v995 = vpack.c.bf16 %v961, %v960
  %v996 = vpack.c.bf16 %v963, %v962
  %v997 = vpack.c.bf16 %v965, %v964
  %v1030 = vunpack.c.l.b16 %v966
  %v1031 = vunpack.c.h.b16 %v966
  %v1032 = vunpack.c.l.b16 %v967
  %v1033 = vunpack.c.h.b16 %v967
  %v1034 = vunpack.c.l.b16 %v968
  %v1035 = vunpack.c.h.b16 %v968
  %v1036 = vunpack.c.l.b16 %v969
  %v1037 = vunpack.c.h.b16 %v969
  %v1038 = vunpack.c.l.b16 %v970
  %v1039 = vunpack.c.h.b16 %v970
  %v1040 = vunpack.c.l.b16 %v971
  %v1041 = vunpack.c.h.b16 %v971
  %v1042 = vunpack.c.l.b16 %v972
  %v1043 = vunpack.c.h.b16 %v972
  %v1044 = vunpack.c.l.b16 %v973
  %v1045 = vunpack.c.h.b16 %v973
  %v1046 = vunpack.c.l.b16 %v974
  %v1047 = vunpack.c.h.b16 %v974
  %v1048 = vunpack.c.l.b16 %v975
  %v1049 = vunpack.c.h.b16 %v975
  %v1050 = vunpack.c.l.b16 %v976
  %v1051 = vunpack.c.h.b16 %v976
  %v1052 = vunpack.c.l.b16 %v977
  %v1053 = vunpack.c.h.b16 %v977
  %v1054 = vunpack.c.l.b16 %v978
  %v1055 = vunpack.c.h.b16 %v978
  %v1056 = vunpack.c.l.b16 %v979
  %v1057 = vunpack.c.h.b16 %v979
  %v1058 = vunpack.c.l.b16 %v980
  %v1059 = vunpack.c.h.b16 %v980
  %v1060 = vunpack.c.l.b16 %v981
  %v1061 = vunpack.c.h.b16 %v981
  %v1062 = vunpack.c.l.b16 %v982
  %v1063 = vunpack.c.h.b16 %v982
  %v1064 = vunpack.c.l.b16 %v983
  %v1065 = vunpack.c.h.b16 %v983
  %v1066 = vunpack.c.l.b16 %v984
  %v1067 = vunpack.c.h.b16 %v984
  %v1068 = vunpack.c.l.b16 %v985
  %v1069 = vunpack.c.h.b16 %v985
  %v1070 = vunpack.c.l.b16 %v986
  %v1071 = vunpack.c.h.b16 %v986
  %v1072 = vunpack.c.l.b16 %v987
  %v1073 = vunpack.c.h.b16 %v987
  %v1074 = vunpack.c.l.b16 %v988
  %v1075 = vunpack.c.h.b16 %v988
  %v1076 = vunpack.c.l.b16 %v989
  %v1077 = vunpack.c.h.b16 %v989
  %v1078 = vunpack.c.l.b16 %v990
  %v1079 = vunpack.c.h.b16 %v990
  %v1080 = vunpack.c.l.b16 %v991
  %v1081 = vunpack.c.h.b16 %v991
  %v1082 = vunpack.c.l.b16 %v992
  %v1083 = vunpack.c.h.b16 %v992
  %v1084 = vunpack.c.l.b16 %v993
  %v1085 = vunpack.c.h.b16 %v993
  %v1086 = vunpack.c.l.b16 %v994
  %v1087 = vunpack.c.h.b16 %v994
  %v1088 = vunpack.c.l.b16 %v995
  %v1089 = vunpack.c.h.b16 %v995
  %v1090 = vunpack.c.l.b16 %v996
  %v1091 = vunpack.c.h.b16 %v996
  %v1092 = vunpack.c.l.b16 %v997
  %v1093 = vunpack.c.h.b16 %v997
  %v1094 = vpack.c.b16 %v1030, %v1030
  %v1095 = vpack.c.b16 %v1031, %v1031
  %v1096 = vpack.c.b16 %v1032, %v1032
  %v1097 = vpack.c.b16 %v1033, %v1033
  %v1098 = vpack.c.b16 %v1034, %v1034
  %v1099 = vpack.c.b16 %v1035, %v1035
  %v1100 = vpack.c.b16 %v1036, %v1036
  %v1101 = vpack.c.b16 %v1037, %v1037
  %v1102 = vpack.c.b16 %v1038, %v1038
  %v1103 = vpack.c.b16 %v1039, %v1039
  %v1104 = vpack.c.b16 %v1040, %v1040
  %v1105 = vpack.c.b16 %v1041, %v1041
  %v1106 = vpack.c.b16 %v1042, %v1042
  %v1107 = vpack.c.b16 %v1043, %v1043
  %v1108 = vpack.c.b16 %v1044, %v1044
  %v1109 = vpack.c.b16 %v1045, %v1045
  %v1110 = vpack.c.b16 %v1046, %v1046
  %v1111 = vpack.c.b16 %v1047, %v1047
  %v1112 = vpack.c.b16 %v1048, %v1048
  %v1113 = vpack.c.b16 %v1049, %v1049
  %v1114 = vpack.c.b16 %v1050, %v1050
  %v1115 = vpack.c.b16 %v1051, %v1051
  %v1116 = vpack.c.b16 %v1052, %v1052
  %v1117 = vpack.c.b16 %v1053, %v1053
  %v1118 = vpack.c.b16 %v1054, %v1054
  %v1119 = vpack.c.b16 %v1055, %v1055
  %v1120 = vpack.c.b16 %v1056, %v1056
  %v1121 = vpack.c.b16 %v1057, %v1057
  %v1122 = vpack.c.b16 %v1058, %v1058
  %v1123 = vpack.c.b16 %v1059, %v1059
  %v1124 = vpack.c.b16 %v1060, %v1060
  %v1125 = vpack.c.b16 %v1061, %v1061
  %v1126 = vpack.c.b16 %v1062, %v1062
  %v1127 = vpack.c.b16 %v1063, %v1063
  %v1128 = vpack.c.b16 %v1064, %v1064
  %v1129 = vpack.c.b16 %v1065, %v1065
  %v1130 = vpack.c.b16 %v1066, %v1066
  %v1131 = vpack.c.b16 %v1067, %v1067
  %v1132 = vpack.c.b16 %v1068, %v1068
  %v1133 = vpack.c.b16 %v1069, %v1069
  %v1134 = vpack.c.b16 %v1070, %v1070
  %v1135 = vpack.c.b16 %v1071, %v1071
  %v1136 = vpack.c.b16 %v1072, %v1072
  %v1137 = vpack.c.b16 %v1073, %v1073
  %v1138 = vpack.c.b16 %v1074, %v1074
  %v1139 = vpack.c.b16 %v1075, %v1075
  %v1140 = vpack.c.b16 %v1076, %v1076
  %v1141 = vpack.c.b16 %v1077, %v1077
  %v1142 = vpack.c.b16 %v1078, %v1078
  %v1143 = vpack.c.b16 %v1079, %v1079
  %v1144 = vpack.c.b16 %v1080, %v1080
  %v1145 = vpack.c.b16 %v1081, %v1081
  %v1146 = vpack.c.b16 %v1082, %v1082
  %v1147 = vpack.c.b16 %v1083, %v1083
  %v1148 = vpack.c.b16 %v1084, %v1084
  %v1149 = vpack.c.b16 %v1085, %v1085
  %v1150 = vpack.c.b16 %v1086, %v1086
  %v1151 = vpack.c.b16 %v1087, %v1087
  %v1152 = vpack.c.b16 %v1088, %v1088
  %v1153 = vpack.c.b16 %v1089, %v1089
  %v1154 = vpack.c.b16 %v1090, %v1090
  %v1155 = vpack.c.b16 %v1091, %v1091
  %v1156 = vpack.c.b16 %v1092, %v1092
  %v1157 = vpack.c.b16 %v1093, %v1093
  %vm1222 = vcmask 27648
  %1223 = vst.msk [vmem:[%s5] sm:$0xf] %vm1222, %v1094
  %1224 = vst.msk [vmem:[%s5 + $0x4] sm:$0xf] %vm1222, %v1095
  %1225 = vst.msk [vmem:[%s5 + $0x8] sm:$0xf] %vm1222, %v1096
  %1226 = vst.msk [vmem:[%s5 + $0xc] sm:$0xf] %vm1222, %v1097
  %1227 = vst.msk [vmem:[%s5 + $0x10] sm:$0xf] %vm1222, %v1098
  %1228 = vst.msk [vmem:[%s5 + $0x14] sm:$0xf] %vm1222, %v1099
  %1229 = vst.msk [vmem:[%s5 + $0x18] sm:$0xf] %vm1222, %v1100
  %1230 = vst.msk [vmem:[%s5 + $0x1c] sm:$0xf] %vm1222, %v1101
  %1231 = vst.msk [vmem:[%s5 + $0x20] sm:$0xf] %vm1222, %v1102
  %1232 = vst.msk [vmem:[%s5 + $0x24] sm:$0xf] %vm1222, %v1103
  %1233 = vst.msk [vmem:[%s5 + $0x28] sm:$0xf] %vm1222, %v1104
  %1234 = vst.msk [vmem:[%s5 + $0x2c] sm:$0xf] %vm1222, %v1105
  %1235 = vst.msk [vmem:[%s5 + $0x30] sm:$0xf] %vm1222, %v1106
  %1236 = vst.msk [vmem:[%s5 + $0x34] sm:$0xf] %vm1222, %v1107
  %1237 = vst.msk [vmem:[%s5 + $0x38] sm:$0xf] %vm1222, %v1108
  %1238 = vst.msk [vmem:[%s5 + $0x3c] sm:$0xf] %vm1222, %v1109
  %1239 = vst.msk [vmem:[%s5 + $0x40] sm:$0xf] %vm1222, %v1110
  %1240 = vst.msk [vmem:[%s5 + $0x44] sm:$0xf] %vm1222, %v1111
  %1241 = vst.msk [vmem:[%s5 + $0x48] sm:$0xf] %vm1222, %v1112
  %1242 = vst.msk [vmem:[%s5 + $0x4c] sm:$0xf] %vm1222, %v1113
  %1243 = vst.msk [vmem:[%s5 + $0x50] sm:$0xf] %vm1222, %v1114
  %1244 = vst.msk [vmem:[%s5 + $0x54] sm:$0xf] %vm1222, %v1115
  %1245 = vst.msk [vmem:[%s5 + $0x58] sm:$0xf] %vm1222, %v1116
  %1246 = vst.msk [vmem:[%s5 + $0x5c] sm:$0xf] %vm1222, %v1117
  %1247 = vst.msk [vmem:[%s5 + $0x60] sm:$0xf] %vm1222, %v1118
  %1248 = vst.msk [vmem:[%s5 + $0x64] sm:$0xf] %vm1222, %v1119
  %1249 = vst.msk [vmem:[%s5 + $0x68] sm:$0xf] %vm1222, %v1120
  %1250 = vst.msk [vmem:[%s5 + $0x6c] sm:$0xf] %vm1222, %v1121
  %1251 = vst.msk [vmem:[%s5 + $0x70] sm:$0xf] %vm1222, %v1122
  %1252 = vst.msk [vmem:[%s5 + $0x74] sm:$0xf] %vm1222, %v1123
  %1253 = vst.msk [vmem:[%s5 + $0x78] sm:$0xf] %vm1222, %v1124
  %1254 = vst.msk [vmem:[%s5 + $0x7c] sm:$0xf] %vm1222, %v1125
  %1255 = vst.msk [vmem:[%s5 + $0x80] sm:$0xf] %vm1222, %v1126
  %1256 = vst.msk [vmem:[%s5 + $0x84] sm:$0xf] %vm1222, %v1127
  %1257 = vst.msk [vmem:[%s5 + $0x88] sm:$0xf] %vm1222, %v1128
  %1258 = vst.msk [vmem:[%s5 + $0x8c] sm:$0xf] %vm1222, %v1129
  %1259 = vst.msk [vmem:[%s5 + $0x90] sm:$0xf] %vm1222, %v1130
  %1260 = vst.msk [vmem:[%s5 + $0x94] sm:$0xf] %vm1222, %v1131
  %1261 = vst.msk [vmem:[%s5 + $0x98] sm:$0xf] %vm1222, %v1132
  %1262 = vst.msk [vmem:[%s5 + $0x9c] sm:$0xf] %vm1222, %v1133
  %1263 = vst.msk [vmem:[%s5 + $0xa0] sm:$0xf] %vm1222, %v1134
  %1264 = vst.msk [vmem:[%s5 + $0xa4] sm:$0xf] %vm1222, %v1135
  %1265 = vst.msk [vmem:[%s5 + $0xa8] sm:$0xf] %vm1222, %v1136
  %1266 = vst.msk [vmem:[%s5 + $0xac] sm:$0xf] %vm1222, %v1137
  %1267 = vst.msk [vmem:[%s5 + $0xb0] sm:$0xf] %vm1222, %v1138
  %1268 = vst.msk [vmem:[%s5 + $0xb4] sm:$0xf] %vm1222, %v1139
  %1269 = vst.msk [vmem:[%s5 + $0xb8] sm:$0xf] %vm1222, %v1140
  %1270 = vst.msk [vmem:[%s5 + $0xbc] sm:$0xf] %vm1222, %v1141
  %1271 = vst.msk [vmem:[%s5 + $0xc0] sm:$0xf] %vm1222, %v1142
  %1272 = vst.msk [vmem:[%s5 + $0xc4] sm:$0xf] %vm1222, %v1143
  %1273 = vst.msk [vmem:[%s5 + $0xc8] sm:$0xf] %vm1222, %v1144
  %1274 = vst.msk [vmem:[%s5 + $0xcc] sm:$0xf] %vm1222, %v1145
  %1275 = vst.msk [vmem:[%s5 + $0xd0] sm:$0xf] %vm1222, %v1146
  %1276 = vst.msk [vmem:[%s5 + $0xd4] sm:$0xf] %vm1222, %v1147
  %1277 = vst.msk [vmem:[%s5 + $0xd8] sm:$0xf] %vm1222, %v1148
  %1278 = vst.msk [vmem:[%s5 + $0xdc] sm:$0xf] %vm1222, %v1149
  %1279 = vst.msk [vmem:[%s5 + $0xe0] sm:$0xf] %vm1222, %v1150
  %1280 = vst.msk [vmem:[%s5 + $0xe4] sm:$0xf] %vm1222, %v1151
  %1281 = vst.msk [vmem:[%s5 + $0xe8] sm:$0xf] %vm1222, %v1152
  %1282 = vst.msk [vmem:[%s5 + $0xec] sm:$0xf] %vm1222, %v1153
  %1283 = vst.msk [vmem:[%s5 + $0xf0] sm:$0xf] %vm1222, %v1154
  %1284 = vst.msk [vmem:[%s5 + $0xf4] sm:$0xf] %vm1222, %v1155
  %1285 = vst.msk [vmem:[%s5 + $0xf8] sm:$0xf] %vm1222, %v1156
  %1286 = vst.msk [vmem:[%s5 + $0xfc] sm:$0xf] %vm1222, %v1157
  %v1287 = vld [vmem:[%s4] sm:$0x1]
  %v1289 = vlaneseq
  %v1290 = vshrl.u32 %v1289, 7
  %v1291 = vsub.s32 0, %v1290
  %v1292 = vrot.slane %v1287, %v1291
  %v1295 = vsel %vm225, %v120, 0
  %1297 = vmatprep.subr.bf16.mxu0 0
  %1298 = vmatpush1.bf16.msra.mxu0 0
  %1299 = vmatprep.subr.bf16.mxu0 0
  %1300 = vmatpush1.bf16.msra.mxu0 0
  %1301 = vmatprep.subr.bf16.mxu0 0
  %1302 = vmatpush1.bf16.msra.mxu0 0
  %1303 = vmatprep.subr.bf16.mxu0 0
  %1304 = vmatpush1.bf16.msra.mxu0 0
  %1305 = vmatprep.subr.bf16.mxu0 0
  %1306 = vmatpush1.bf16.msra.mxu0 0
  %1307 = vmatprep.subr.bf16.mxu0 0
  %1308 = vmatpush1.bf16.msra.mxu0 0
  %1309 = vmatprep.subr.bf16.mxu0 0
  %1310 = vmatpush1.bf16.msra.mxu0 0
  %1311 = vmatprep.subr.bf16.mxu0 0
  %1312 = vmatpush1.bf16.msra.mxu0 %v1295
  %1313 = vmatprep.subr.bf16.mxu0 0
  %1314 = vmatpush2.bf16.msra.mxu0 0
  %1315 = vmatprep.subr.bf16.mxu0 0
  %1316 = vmatpush2.bf16.msra.mxu0 0
  %1317 = vmatprep.subr.bf16.mxu0 0
  %1318 = vmatpush2.bf16.msra.mxu0 0
  %1319 = vmatprep.subr.bf16.mxu0 0
  %1320 = vmatpush2.bf16.msra.mxu0 0
  %1321 = vmatprep.subr.bf16.mxu0 0
  %1322 = vmatpush2.bf16.msra.mxu0 0
  %1323 = vmatprep.subr.bf16.mxu0 0
  %1324 = vmatpush2.bf16.msra.mxu0 0
  %1325 = vmatprep.subr.bf16.mxu0 0
  %1326 = vmatpush2.bf16.msra.mxu0 0
  %1327 = vmatprep.subr.bf16.mxu0 0
  %1328 = vmatpush2.bf16.msra.mxu0 0
  %1329 = vmatprep.mubr.bf16.mxu0 0
  %1330 = vmatmul.mubr.bf16.gmra.mxu0 %v130
  %v1331 = vpop.f32.mrf.mxu0
  %v1332 = vadd.f32 %v1292, %v1331
  %v1333 = vpop.f32.mrf.mxu0
  %v1334 = vpop.f32.mrf.mxu0
  %v1335 = vadd.f32 %v1292, %v1334
  %v1336 = vpop.f32.mrf.mxu0
  %1337 = vmatprep.mubr.bf16.mxu0 0
  %1338 = vmatmul.mubr.bf16.gmra.mxu0 %v133
  %v1339 = vpop.f32.mrf.mxu0
  %v1340 = vadd.f32 %v1292, %v1339
  %v1341 = vpop.f32.mrf.mxu0
  %v1342 = vpop.f32.mrf.mxu0
  %v1343 = vadd.f32 %v1292, %v1342
  %v1344 = vpop.f32.mrf.mxu0
  %1345 = vmatprep.mubr.bf16.mxu0 0
  %1346 = vmatmul.mubr.bf16.gmra.mxu0 %v136
  %v1347 = vpop.f32.mrf.mxu0
  %v1348 = vadd.f32 %v1292, %v1347
  %v1349 = vpop.f32.mrf.mxu0
  %v1350 = vpop.f32.mrf.mxu0
  %v1351 = vadd.f32 %v1292, %v1350
  %v1352 = vpop.f32.mrf.mxu0
  %1353 = vmatprep.mubr.bf16.mxu0 0
  %1354 = vmatmul.mubr.bf16.gmra.mxu0 %v139
  %v1355 = vpop.f32.mrf.mxu0
  %v1356 = vadd.f32 %v1292, %v1355
  %v1357 = vpop.f32.mrf.mxu0
  %v1358 = vpop.f32.mrf.mxu0
  %v1359 = vadd.f32 %v1292, %v1358
  %v1360 = vpop.f32.mrf.mxu0
  %1361 = vmatprep.mubr.bf16.mxu0 0
  %1362 = vmatmul.mubr.bf16.gmra.mxu0 %v142
  %v1363 = vpop.f32.mrf.mxu0
  %v1364 = vadd.f32 %v1292, %v1363
  %v1365 = vpop.f32.mrf.mxu0
  %v1366 = vpop.f32.mrf.mxu0
  %v1367 = vadd.f32 %v1292, %v1366
  %v1368 = vpop.f32.mrf.mxu0
  %1369 = vmatprep.mubr.bf16.mxu0 0
  %1370 = vmatmul.mubr.bf16.gmra.mxu0 %v145
  %v1371 = vpop.f32.mrf.mxu0
  %v1372 = vadd.f32 %v1292, %v1371
  %v1373 = vpop.f32.mrf.mxu0
  %v1374 = vpop.f32.mrf.mxu0
  %v1375 = vadd.f32 %v1292, %v1374
  %v1376 = vpop.f32.mrf.mxu0
  %1377 = vmatprep.mubr.bf16.mxu0 0
  %1378 = vmatmul.mubr.bf16.gmra.mxu0 %v148
  %v1379 = vpop.f32.mrf.mxu0
  %v1380 = vadd.f32 %v1292, %v1379
  %v1381 = vpop.f32.mrf.mxu0
  %v1382 = vpop.f32.mrf.mxu0
  %v1383 = vadd.f32 %v1292, %v1382
  %v1384 = vpop.f32.mrf.mxu0
  %1385 = vmatprep.mubr.bf16.mxu0 0
  %1386 = vmatmul.mubr.bf16.gmra.mxu0 %v151
  %v1387 = vpop.f32.mrf.mxu0
  %v1388 = vadd.f32 %v1292, %v1387
  %v1389 = vpop.f32.mrf.mxu0
  %v1390 = vpop.f32.mrf.mxu0
  %v1391 = vadd.f32 %v1292, %v1390
  %v1392 = vpop.f32.mrf.mxu0
  %1393 = vmatprep.mubr.bf16.mxu0 0
  %1394 = vmatmul.mubr.bf16.gmra.mxu0 %v154
  %v1395 = vpop.f32.mrf.mxu0
  %v1396 = vadd.f32 %v1292, %v1395
  %v1397 = vpop.f32.mrf.mxu0
  %v1398 = vpop.f32.mrf.mxu0
  %v1399 = vadd.f32 %v1292, %v1398
  %v1400 = vpop.f32.mrf.mxu0
  %1401 = vmatprep.mubr.bf16.mxu0 0
  %1402 = vmatmul.mubr.bf16.gmra.mxu0 %v157
  %v1403 = vpop.f32.mrf.mxu0
  %v1404 = vadd.f32 %v1292, %v1403
  %v1405 = vpop.f32.mrf.mxu0
  %v1406 = vpop.f32.mrf.mxu0
  %v1407 = vadd.f32 %v1292, %v1406
  %v1408 = vpop.f32.mrf.mxu0
  %1409 = vmatprep.mubr.bf16.mxu0 0
  %1410 = vmatmul.mubr.bf16.gmra.mxu0 %v160
  %v1411 = vpop.f32.mrf.mxu0
  %v1412 = vadd.f32 %v1292, %v1411
  %v1413 = vpop.f32.mrf.mxu0
  %v1414 = vpop.f32.mrf.mxu0
  %v1415 = vadd.f32 %v1292, %v1414
  %v1416 = vpop.f32.mrf.mxu0
  %1417 = vmatprep.mubr.bf16.mxu0 0
  %1418 = vmatmul.mubr.bf16.gmra.mxu0 %v163
  %v1419 = vpop.f32.mrf.mxu0
  %v1420 = vadd.f32 %v1292, %v1419
  %v1421 = vpop.f32.mrf.mxu0
  %v1422 = vpop.f32.mrf.mxu0
  %v1423 = vadd.f32 %v1292, %v1422
  %v1424 = vpop.f32.mrf.mxu0
  %1425 = vmatprep.mubr.bf16.mxu0 0
  %1426 = vmatmul.mubr.bf16.gmra.mxu0 %v166
  %v1427 = vpop.f32.mrf.mxu0
  %v1428 = vadd.f32 %v1292, %v1427
  %v1429 = vpop.f32.mrf.mxu0
  %v1430 = vpop.f32.mrf.mxu0
  %v1431 = vadd.f32 %v1292, %v1430
  %v1432 = vpop.f32.mrf.mxu0
  %1433 = vmatprep.mubr.bf16.mxu0 0
  %1434 = vmatmul.mubr.bf16.gmra.mxu0 %v169
  %v1435 = vpop.f32.mrf.mxu0
  %v1436 = vadd.f32 %v1292, %v1435
  %v1437 = vpop.f32.mrf.mxu0
  %v1438 = vpop.f32.mrf.mxu0
  %v1439 = vadd.f32 %v1292, %v1438
  %v1440 = vpop.f32.mrf.mxu0
  %1441 = vmatprep.mubr.bf16.mxu0 0
  %1442 = vmatmul.mubr.bf16.gmra.mxu0 %v172
  %v1443 = vpop.f32.mrf.mxu0
  %v1444 = vadd.f32 %v1292, %v1443
  %v1445 = vpop.f32.mrf.mxu0
  %v1446 = vpop.f32.mrf.mxu0
  %v1447 = vadd.f32 %v1292, %v1446
  %v1448 = vpop.f32.mrf.mxu0
  %1449 = vmatprep.mubr.bf16.mxu0 0
  %1450 = vmatmul.mubr.bf16.gmra.mxu0 %v175
  %v1451 = vpop.f32.mrf.mxu0
  %v1452 = vadd.f32 %v1292, %v1451
  %v1453 = vpop.f32.mrf.mxu0
  %v1454 = vpop.f32.mrf.mxu0
  %v1455 = vadd.f32 %v1292, %v1454
  %v1456 = vpop.f32.mrf.mxu0
  %1457 = vmatprep.mubr.bf16.mxu0 0
  %1458 = vmatmul.mubr.bf16.gmra.mxu0 %v178
  %v1459 = vpop.f32.mrf.mxu0
  %v1460 = vadd.f32 %v1292, %v1459
  %v1461 = vpop.f32.mrf.mxu0
  %v1462 = vpop.f32.mrf.mxu0
  %v1463 = vadd.f32 %v1292, %v1462
  %v1464 = vpop.f32.mrf.mxu0
  %1465 = vmatprep.mubr.bf16.mxu0 0
  %1466 = vmatmul.mubr.bf16.gmra.mxu0 %v181
  %v1467 = vpop.f32.mrf.mxu0
  %v1468 = vadd.f32 %v1292, %v1467
  %v1469 = vpop.f32.mrf.mxu0
  %v1470 = vpop.f32.mrf.mxu0
  %v1471 = vadd.f32 %v1292, %v1470
  %v1472 = vpop.f32.mrf.mxu0
  %1473 = vmatprep.mubr.bf16.mxu0 0
  %1474 = vmatmul.mubr.bf16.gmra.mxu0 %v184
  %v1475 = vpop.f32.mrf.mxu0
  %v1476 = vadd.f32 %v1292, %v1475
  %v1477 = vpop.f32.mrf.mxu0
  %v1478 = vpop.f32.mrf.mxu0
  %v1479 = vadd.f32 %v1292, %v1478
  %v1480 = vpop.f32.mrf.mxu0
  %1481 = vmatprep.mubr.bf16.mxu0 0
  %1482 = vmatmul.mubr.bf16.gmra.mxu0 %v187
  %v1483 = vpop.f32.mrf.mxu0
  %v1484 = vadd.f32 %v1292, %v1483
  %v1485 = vpop.f32.mrf.mxu0
  %v1486 = vpop.f32.mrf.mxu0
  %v1487 = vadd.f32 %v1292, %v1486
  %v1488 = vpop.f32.mrf.mxu0
  %1489 = vmatprep.mubr.bf16.mxu0 0
  %1490 = vmatmul.mubr.bf16.gmra.mxu0 %v190
  %v1491 = vpop.f32.mrf.mxu0
  %v1492 = vadd.f32 %v1292, %v1491
  %v1493 = vpop.f32.mrf.mxu0
  %v1494 = vpop.f32.mrf.mxu0
  %v1495 = vadd.f32 %v1292, %v1494
  %v1496 = vpop.f32.mrf.mxu0
  %1497 = vmatprep.mubr.bf16.mxu0 0
  %1498 = vmatmul.mubr.bf16.gmra.mxu0 %v193
  %v1499 = vpop.f32.mrf.mxu0
  %v1500 = vadd.f32 %v1292, %v1499
  %v1501 = vpop.f32.mrf.mxu0
  %v1502 = vpop.f32.mrf.mxu0
  %v1503 = vadd.f32 %v1292, %v1502
  %v1504 = vpop.f32.mrf.mxu0
  %1505 = vmatprep.mubr.bf16.mxu0 0
  %1506 = vmatmul.mubr.bf16.gmra.mxu0 %v196
  %v1507 = vpop.f32.mrf.mxu0
  %v1508 = vadd.f32 %v1292, %v1507
  %v1509 = vpop.f32.mrf.mxu0
  %v1510 = vpop.f32.mrf.mxu0
  %v1511 = vadd.f32 %v1292, %v1510
  %v1512 = vpop.f32.mrf.mxu0
  %1513 = vmatprep.mubr.bf16.mxu0 0
  %1514 = vmatmul.mubr.bf16.gmra.mxu0 %v199
  %v1515 = vpop.f32.mrf.mxu0
  %v1516 = vadd.f32 %v1292, %v1515
  %v1517 = vpop.f32.mrf.mxu0
  %v1518 = vpop.f32.mrf.mxu0
  %v1519 = vadd.f32 %v1292, %v1518
  %v1520 = vpop.f32.mrf.mxu0
  %1521 = vmatprep.mubr.bf16.mxu0 0
  %1522 = vmatmul.mubr.bf16.gmra.mxu0 %v202
  %v1523 = vpop.f32.mrf.mxu0
  %v1524 = vadd.f32 %v1292, %v1523
  %v1525 = vpop.f32.mrf.mxu0
  %v1526 = vpop.f32.mrf.mxu0
  %v1527 = vadd.f32 %v1292, %v1526
  %v1528 = vpop.f32.mrf.mxu0
  %1529 = vmatprep.mubr.bf16.mxu0 0
  %1530 = vmatmul.mubr.bf16.gmra.mxu0 %v205
  %v1531 = vpop.f32.mrf.mxu0
  %v1532 = vadd.f32 %v1292, %v1531
  %v1533 = vpop.f32.mrf.mxu0
  %v1534 = vpop.f32.mrf.mxu0
  %v1535 = vadd.f32 %v1292, %v1534
  %v1536 = vpop.f32.mrf.mxu0
  %1537 = vmatprep.mubr.bf16.mxu0 0
  %1538 = vmatmul.mubr.bf16.gmra.mxu0 %v208
  %v1539 = vpop.f32.mrf.mxu0
  %v1540 = vadd.f32 %v1292, %v1539
  %v1541 = vpop.f32.mrf.mxu0
  %v1542 = vpop.f32.mrf.mxu0
  %v1543 = vadd.f32 %v1292, %v1542
  %v1544 = vpop.f32.mrf.mxu0
  %1545 = vmatprep.mubr.bf16.mxu0 0
  %1546 = vmatmul.mubr.bf16.gmra.mxu0 %v211
  %v1547 = vpop.f32.mrf.mxu0
  %v1548 = vadd.f32 %v1292, %v1547
  %v1549 = vpop.f32.mrf.mxu0
  %v1550 = vpop.f32.mrf.mxu0
  %v1551 = vadd.f32 %v1292, %v1550
  %v1552 = vpop.f32.mrf.mxu0
  %1553 = vmatprep.mubr.bf16.mxu0 0
  %1554 = vmatmul.mubr.bf16.gmra.mxu0 %v214
  %v1555 = vpop.f32.mrf.mxu0
  %v1556 = vadd.f32 %v1292, %v1555
  %v1557 = vpop.f32.mrf.mxu0
  %v1558 = vpop.f32.mrf.mxu0
  %v1559 = vadd.f32 %v1292, %v1558
  %v1560 = vpop.f32.mrf.mxu0
  %1561 = vmatprep.mubr.bf16.mxu0 0
  %1562 = vmatmul.mubr.bf16.gmra.mxu0 %v217
  %v1563 = vpop.f32.mrf.mxu0
  %v1564 = vadd.f32 %v1292, %v1563
  %v1565 = vpop.f32.mrf.mxu0
  %v1566 = vpop.f32.mrf.mxu0
  %v1567 = vadd.f32 %v1292, %v1566
  %v1568 = vpop.f32.mrf.mxu0
  %1569 = vmatprep.mubr.bf16.mxu0 0
  %1570 = vmatmul.mubr.bf16.gmra.mxu0 %v220
  %v1571 = vpop.f32.mrf.mxu0
  %v1572 = vadd.f32 %v1292, %v1571
  %v1573 = vpop.f32.mrf.mxu0
  %v1574 = vpop.f32.mrf.mxu0
  %v1575 = vadd.f32 %v1292, %v1574
  %v1576 = vpop.f32.mrf.mxu0
  %1577 = vmatprep.mubr.bf16.mxu0 0
  %1578 = vmatmul.mubr.bf16.gmra.mxu0 %v223
  %v1579 = vpop.f32.mrf.mxu0
  %v1580 = vadd.f32 %v1292, %v1579
  %v1581 = vpop.f32.mrf.mxu0
  %v1582 = vpop.f32.mrf.mxu0
  %v1583 = vadd.f32 %v1292, %v1582
  %v1584 = vpop.f32.mrf.mxu0
  %1585 = vdwg.mxu0
  %v1586 = vxor.u32 %v1332, 2147483648
  %v1587 = vxor.u32 %v1335, 2147483648
  %v1588 = vxor.u32 %v1340, 2147483648
  %v1589 = vxor.u32 %v1343, 2147483648
  %v1590 = vxor.u32 %v1348, 2147483648
  %v1591 = vxor.u32 %v1351, 2147483648
  %v1592 = vxor.u32 %v1356, 2147483648
  %v1593 = vxor.u32 %v1359, 2147483648
  %v1594 = vxor.u32 %v1364, 2147483648
  %v1595 = vxor.u32 %v1367, 2147483648
  %v1596 = vxor.u32 %v1372, 2147483648
  %v1597 = vxor.u32 %v1375, 2147483648
  %v1598 = vxor.u32 %v1380, 2147483648
  %v1599 = vxor.u32 %v1383, 2147483648
  %v1600 = vxor.u32 %v1388, 2147483648
  %v1601 = vxor.u32 %v1391, 2147483648
  %v1602 = vxor.u32 %v1396, 2147483648
  %v1603 = vxor.u32 %v1399, 2147483648
  %v1604 = vxor.u32 %v1404, 2147483648
  %v1605 = vxor.u32 %v1407, 2147483648
  %v1606 = vxor.u32 %v1412, 2147483648
  %v1607 = vxor.u32 %v1415, 2147483648
  %v1608 = vxor.u32 %v1420, 2147483648
  %v1609 = vxor.u32 %v1423, 2147483648
  %v1610 = vxor.u32 %v1428, 2147483648
  %v1611 = vxor.u32 %v1431, 2147483648
  %v1612 = vxor.u32 %v1436, 2147483648
  %v1613 = vxor.u32 %v1439, 2147483648
  %v1614 = vxor.u32 %v1444, 2147483648
  %v1615 = vxor.u32 %v1447, 2147483648
  %v1616 = vxor.u32 %v1452, 2147483648
  %v1617 = vxor.u32 %v1455, 2147483648
  %v1618 = vxor.u32 %v1460, 2147483648
  %v1619 = vxor.u32 %v1463, 2147483648
  %v1620 = vxor.u32 %v1468, 2147483648
  %v1621 = vxor.u32 %v1471, 2147483648
  %v1622 = vxor.u32 %v1476, 2147483648
  %v1623 = vxor.u32 %v1479, 2147483648
  %v1624 = vxor.u32 %v1484, 2147483648
  %v1625 = vxor.u32 %v1487, 2147483648
  %v1626 = vxor.u32 %v1492, 2147483648
  %v1627 = vxor.u32 %v1495, 2147483648
  %v1628 = vxor.u32 %v1500, 2147483648
  %v1629 = vxor.u32 %v1503, 2147483648
  %v1630 = vxor.u32 %v1508, 2147483648
  %v1631 = vxor.u32 %v1511, 2147483648
  %v1632 = vxor.u32 %v1516, 2147483648
  %v1633 = vxor.u32 %v1519, 2147483648
  %v1634 = vxor.u32 %v1524, 2147483648
  %v1635 = vxor.u32 %v1527, 2147483648
  %v1636 = vxor.u32 %v1532, 2147483648
  %v1637 = vxor.u32 %v1535, 2147483648
  %v1638 = vxor.u32 %v1540, 2147483648
  %v1639 = vxor.u32 %v1543, 2147483648
  %v1640 = vxor.u32 %v1548, 2147483648
  %v1641 = vxor.u32 %v1551, 2147483648
  %v1642 = vxor.u32 %v1556, 2147483648
  %v1643 = vxor.u32 %v1559, 2147483648
  %v1644 = vxor.u32 %v1564, 2147483648
  %v1645 = vxor.u32 %v1567, 2147483648
  %v1646 = vxor.u32 %v1572, 2147483648
  %v1647 = vxor.u32 %v1575, 2147483648
  %v1648 = vxor.u32 %v1580, 2147483648
  %v1649 = vxor.u32 %v1583, 2147483648
  %v1650 = vmul.f32 %v1586, 1.442695
  %v1651 = vpow.pop %v1650
  %v1652 = vmul.f32 %v1587, 1.442695
  %v1653 = vpow.pop %v1652
  %v1654 = vmul.f32 %v1588, 1.442695
  %v1655 = vpow.pop %v1654
  %v1656 = vmul.f32 %v1589, 1.442695
  %v1657 = vpow.pop %v1656
  %v1658 = vmul.f32 %v1590, 1.442695
  %v1659 = vpow.pop %v1658
  %v1660 = vmul.f32 %v1591, 1.442695
  %v1661 = vpow.pop %v1660
  %v1662 = vmul.f32 %v1592, 1.442695
  %v1663 = vpow.pop %v1662
  %v1664 = vmul.f32 %v1593, 1.442695
  %v1665 = vpow.pop %v1664
  %v1666 = vmul.f32 %v1594, 1.442695
  %v1667 = vpow.pop %v1666
  %v1668 = vmul.f32 %v1595, 1.442695
  %v1669 = vpow.pop %v1668
  %v1670 = vmul.f32 %v1596, 1.442695
  %v1671 = vpow.pop %v1670
  %v1672 = vmul.f32 %v1597, 1.442695
  %v1673 = vpow.pop %v1672
  %v1674 = vmul.f32 %v1598, 1.442695
  %v1675 = vpow.pop %v1674
  %v1676 = vmul.f32 %v1599, 1.442695
  %v1677 = vpow.pop %v1676
  %v1678 = vmul.f32 %v1600, 1.442695
  %v1679 = vpow.pop %v1678
  %v1680 = vmul.f32 %v1601, 1.442695
  %v1681 = vpow.pop %v1680
  %v1682 = vmul.f32 %v1602, 1.442695
  %v1683 = vpow.pop %v1682
  %v1684 = vmul.f32 %v1603, 1.442695
  %v1685 = vpow.pop %v1684
  %v1686 = vmul.f32 %v1604, 1.442695
  %v1687 = vpow.pop %v1686
  %v1688 = vmul.f32 %v1605, 1.442695
  %v1689 = vpow.pop %v1688
  %v1690 = vmul.f32 %v1606, 1.442695
  %v1691 = vpow.pop %v1690
  %v1692 = vmul.f32 %v1607, 1.442695
  %v1693 = vpow.pop %v1692
  %v1694 = vmul.f32 %v1608, 1.442695
  %v1695 = vpow.pop %v1694
  %v1696 = vmul.f32 %v1609, 1.442695
  %v1697 = vpow.pop %v1696
  %v1698 = vmul.f32 %v1610, 1.442695
  %v1699 = vpow.pop %v1698
  %v1700 = vmul.f32 %v1611, 1.442695
  %v1701 = vpow.pop %v1700
  %v1702 = vmul.f32 %v1612, 1.442695
  %v1703 = vpow.pop %v1702
  %v1704 = vmul.f32 %v1613, 1.442695
  %v1705 = vpow.pop %v1704
  %v1706 = vmul.f32 %v1614, 1.442695
  %v1707 = vpow.pop %v1706
  %v1708 = vmul.f32 %v1615, 1.442695
  %v1709 = vpow.pop %v1708
  %v1710 = vmul.f32 %v1616, 1.442695
  %v1711 = vpow.pop %v1710
  %v1712 = vmul.f32 %v1617, 1.442695
  %v1713 = vpow.pop %v1712
  %v1714 = vmul.f32 %v1618, 1.442695
  %v1715 = vpow.pop %v1714
  %v1716 = vmul.f32 %v1619, 1.442695
  %v1717 = vpow.pop %v1716
  %v1718 = vmul.f32 %v1620, 1.442695
  %v1719 = vpow.pop %v1718
  %v1720 = vmul.f32 %v1621, 1.442695
  %v1721 = vpow.pop %v1720
  %v1722 = vmul.f32 %v1622, 1.442695
  %v1723 = vpow.pop %v1722
  %v1724 = vmul.f32 %v1623, 1.442695
  %v1725 = vpow.pop %v1724
  %v1726 = vmul.f32 %v1624, 1.442695
  %v1727 = vpow.pop %v1726
  %v1728 = vmul.f32 %v1625, 1.442695
  %v1729 = vpow.pop %v1728
  %v1730 = vmul.f32 %v1626, 1.442695
  %v1731 = vpow.pop %v1730
  %v1732 = vmul.f32 %v1627, 1.442695
  %v1733 = vpow.pop %v1732
  %v1734 = vmul.f32 %v1628, 1.442695
  %v1735 = vpow.pop %v1734
  %v1736 = vmul.f32 %v1629, 1.442695
  %v1737 = vpow.pop %v1736
  %v1738 = vmul.f32 %v1630, 1.442695
  %v1739 = vpow.pop %v1738
  %v1740 = vmul.f32 %v1631, 1.442695
  %v1741 = vpow.pop %v1740
  %v1742 = vmul.f32 %v1632, 1.442695
  %v1743 = vpow.pop %v1742
  %v1744 = vmul.f32 %v1633, 1.442695
  %v1745 = vpow.pop %v1744
  %v1746 = vmul.f32 %v1634, 1.442695
  %v1747 = vpow.pop %v1746
  %v1748 = vmul.f32 %v1635, 1.442695
  %v1749 = vpow.pop %v1748
  %v1750 = vmul.f32 %v1636, 1.442695
  %v1751 = vpow.pop %v1750
  %v1752 = vmul.f32 %v1637, 1.442695
  %v1753 = vpow.pop %v1752
  %v1754 = vmul.f32 %v1638, 1.442695
  %v1755 = vpow.pop %v1754
  %v1756 = vmul.f32 %v1639, 1.442695
  %v1757 = vpow.pop %v1756
  %v1758 = vmul.f32 %v1640, 1.442695
  %v1759 = vpow.pop %v1758
  %v1760 = vmul.f32 %v1641, 1.442695
  %v1761 = vpow.pop %v1760
  %v1762 = vmul.f32 %v1642, 1.442695
  %v1763 = vpow.pop %v1762
  %v1764 = vmul.f32 %v1643, 1.442695
  %v1765 = vpow.pop %v1764
  %v1766 = vmul.f32 %v1644, 1.442695
  %v1767 = vpow.pop %v1766
  %v1768 = vmul.f32 %v1645, 1.442695
  %v1769 = vpow.pop %v1768
  %v1770 = vmul.f32 %v1646, 1.442695
  %v1771 = vpow.pop %v1770
  %v1772 = vmul.f32 %v1647, 1.442695
  %v1773 = vpow.pop %v1772
  %v1774 = vmul.f32 %v1648, 1.442695
  %v1775 = vpow.pop %v1774
  %v1776 = vmul.f32 %v1649, 1.442695
  %v1777 = vpow.pop %v1776
  %v1778 = vadd.f32 %v1651, 1.0
  %v1779 = vadd.f32 %v1653, 1.0
  %v1780 = vadd.f32 %v1655, 1.0
  %v1781 = vadd.f32 %v1657, 1.0
  %v1782 = vadd.f32 %v1659, 1.0
  %v1783 = vadd.f32 %v1661, 1.0
  %v1784 = vadd.f32 %v1663, 1.0
  %v1785 = vadd.f32 %v1665, 1.0
  %v1786 = vadd.f32 %v1667, 1.0
  %v1787 = vadd.f32 %v1669, 1.0
  %v1788 = vadd.f32 %v1671, 1.0
  %v1789 = vadd.f32 %v1673, 1.0
  %v1790 = vadd.f32 %v1675, 1.0
  %v1791 = vadd.f32 %v1677, 1.0
  %v1792 = vadd.f32 %v1679, 1.0
  %v1793 = vadd.f32 %v1681, 1.0
  %v1794 = vadd.f32 %v1683, 1.0
  %v1795 = vadd.f32 %v1685, 1.0
  %v1796 = vadd.f32 %v1687, 1.0
  %v1797 = vadd.f32 %v1689, 1.0
  %v1798 = vadd.f32 %v1691, 1.0
  %v1799 = vadd.f32 %v1693, 1.0
  %v1800 = vadd.f32 %v1695, 1.0
  %v1801 = vadd.f32 %v1697, 1.0
  %v1802 = vadd.f32 %v1699, 1.0
  %v1803 = vadd.f32 %v1701, 1.0
  %v1804 = vadd.f32 %v1703, 1.0
  %v1805 = vadd.f32 %v1705, 1.0
  %v1806 = vadd.f32 %v1707, 1.0
  %v1807 = vadd.f32 %v1709, 1.0
  %v1808 = vadd.f32 %v1711, 1.0
  %v1809 = vadd.f32 %v1713, 1.0
  %v1810 = vadd.f32 %v1715, 1.0
  %v1811 = vadd.f32 %v1717, 1.0
  %v1812 = vadd.f32 %v1719, 1.0
  %v1813 = vadd.f32 %v1721, 1.0
  %v1814 = vadd.f32 %v1723, 1.0
  %v1815 = vadd.f32 %v1725, 1.0
  %v1816 = vadd.f32 %v1727, 1.0
  %v1817 = vadd.f32 %v1729, 1.0
  %v1818 = vadd.f32 %v1731, 1.0
  %v1819 = vadd.f32 %v1733, 1.0
  %v1820 = vadd.f32 %v1735, 1.0
  %v1821 = vadd.f32 %v1737, 1.0
  %v1822 = vadd.f32 %v1739, 1.0
  %v1823 = vadd.f32 %v1741, 1.0
  %v1824 = vadd.f32 %v1743, 1.0
  %v1825 = vadd.f32 %v1745, 1.0
  %v1826 = vadd.f32 %v1747, 1.0
  %v1827 = vadd.f32 %v1749, 1.0
  %v1828 = vadd.f32 %v1751, 1.0
  %v1829 = vadd.f32 %v1753, 1.0
  %v1830 = vadd.f32 %v1755, 1.0
  %v1831 = vadd.f32 %v1757, 1.0
  %v1832 = vadd.f32 %v1759, 1.0
  %v1833 = vadd.f32 %v1761, 1.0
  %v1834 = vadd.f32 %v1763, 1.0
  %v1835 = vadd.f32 %v1765, 1.0
  %v1836 = vadd.f32 %v1767, 1.0
  %v1837 = vadd.f32 %v1769, 1.0
  %v1838 = vadd.f32 %v1771, 1.0
  %v1839 = vadd.f32 %v1773, 1.0
  %v1840 = vadd.f32 %v1775, 1.0
  %v1841 = vadd.f32 %v1777, 1.0
  %v1842 = vrcp.pop %v1778
  %v1843 = vmul.f32 1.0, %v1842
  %v1844 = vrcp.pop %v1779
  %v1845 = vmul.f32 1.0, %v1844
  %v1846 = vrcp.pop %v1780
  %v1847 = vmul.f32 1.0, %v1846
  %v1848 = vrcp.pop %v1781
  %v1849 = vmul.f32 1.0, %v1848
  %v1850 = vrcp.pop %v1782
  %v1851 = vmul.f32 1.0, %v1850
  %v1852 = vrcp.pop %v1783
  %v1853 = vmul.f32 1.0, %v1852
  %v1854 = vrcp.pop %v1784
  %v1855 = vmul.f32 1.0, %v1854
  %v1856 = vrcp.pop %v1785
  %v1857 = vmul.f32 1.0, %v1856
  %v1858 = vrcp.pop %v1786
  %v1859 = vmul.f32 1.0, %v1858
  %v1860 = vrcp.pop %v1787
  %v1861 = vmul.f32 1.0, %v1860
  %v1862 = vrcp.pop %v1788
  %v1863 = vmul.f32 1.0, %v1862
  %v1864 = vrcp.pop %v1789
  %v1865 = vmul.f32 1.0, %v1864
  %v1866 = vrcp.pop %v1790
  %v1867 = vmul.f32 1.0, %v1866
  %v1868 = vrcp.pop %v1791
  %v1869 = vmul.f32 1.0, %v1868
  %v1870 = vrcp.pop %v1792
  %v1871 = vmul.f32 1.0, %v1870
  %v1872 = vrcp.pop %v1793
  %v1873 = vmul.f32 1.0, %v1872
  %v1874 = vrcp.pop %v1794
  %v1875 = vmul.f32 1.0, %v1874
  %v1876 = vrcp.pop %v1795
  %v1877 = vmul.f32 1.0, %v1876
  %v1878 = vrcp.pop %v1796
  %v1879 = vmul.f32 1.0, %v1878
  %v1880 = vrcp.pop %v1797
  %v1881 = vmul.f32 1.0, %v1880
  %v1882 = vrcp.pop %v1798
  %v1883 = vmul.f32 1.0, %v1882
  %v1884 = vrcp.pop %v1799
  %v1885 = vmul.f32 1.0, %v1884
  %v1886 = vrcp.pop %v1800
  %v1887 = vmul.f32 1.0, %v1886
  %v1888 = vrcp.pop %v1801
  %v1889 = vmul.f32 1.0, %v1888
  %v1890 = vrcp.pop %v1802
  %v1891 = vmul.f32 1.0, %v1890
  %v1892 = vrcp.pop %v1803
  %v1893 = vmul.f32 1.0, %v1892
  %v1894 = vrcp.pop %v1804
  %v1895 = vmul.f32 1.0, %v1894
  %v1896 = vrcp.pop %v1805
  %v1897 = vmul.f32 1.0, %v1896
  %v1898 = vrcp.pop %v1806
  %v1899 = vmul.f32 1.0, %v1898
  %v1900 = vrcp.pop %v1807
  %v1901 = vmul.f32 1.0, %v1900
  %v1902 = vrcp.pop %v1808
  %v1903 = vmul.f32 1.0, %v1902
  %v1904 = vrcp.pop %v1809
  %v1905 = vmul.f32 1.0, %v1904
  %v1906 = vrcp.pop %v1810
  %v1907 = vmul.f32 1.0, %v1906
  %v1908 = vrcp.pop %v1811
  %v1909 = vmul.f32 1.0, %v1908
  %v1910 = vrcp.pop %v1812
  %v1911 = vmul.f32 1.0, %v1910
  %v1912 = vrcp.pop %v1813
  %v1913 = vmul.f32 1.0, %v1912
  %v1914 = vrcp.pop %v1814
  %v1915 = vmul.f32 1.0, %v1914
  %v1916 = vrcp.pop %v1815
  %v1917 = vmul.f32 1.0, %v1916
  %v1918 = vrcp.pop %v1816
  %v1919 = vmul.f32 1.0, %v1918
  %v1920 = vrcp.pop %v1817
  %v1921 = vmul.f32 1.0, %v1920
  %v1922 = vrcp.pop %v1818
  %v1923 = vmul.f32 1.0, %v1922
  %v1924 = vrcp.pop %v1819
  %v1925 = vmul.f32 1.0, %v1924
  %v1926 = vrcp.pop %v1820
  %v1927 = vmul.f32 1.0, %v1926
  %v1928 = vrcp.pop %v1821
  %v1929 = vmul.f32 1.0, %v1928
  %v1930 = vrcp.pop %v1822
  %v1931 = vmul.f32 1.0, %v1930
  %v1932 = vrcp.pop %v1823
  %v1933 = vmul.f32 1.0, %v1932
  %v1934 = vrcp.pop %v1824
  %v1935 = vmul.f32 1.0, %v1934
  %v1936 = vrcp.pop %v1825
  %v1937 = vmul.f32 1.0, %v1936
  %v1938 = vrcp.pop %v1826
  %v1939 = vmul.f32 1.0, %v1938
  %v1940 = vrcp.pop %v1827
  %v1941 = vmul.f32 1.0, %v1940
  %v1942 = vrcp.pop %v1828
  %v1943 = vmul.f32 1.0, %v1942
  %v1944 = vrcp.pop %v1829
  %v1945 = vmul.f32 1.0, %v1944
  %v1946 = vrcp.pop %v1830
  %v1947 = vmul.f32 1.0, %v1946
  %v1948 = vrcp.pop %v1831
  %v1949 = vmul.f32 1.0, %v1948
  %v1950 = vrcp.pop %v1832
  %v1951 = vmul.f32 1.0, %v1950
  %v1952 = vrcp.pop %v1833
  %v1953 = vmul.f32 1.0, %v1952
  %v1954 = vrcp.pop %v1834
  %v1955 = vmul.f32 1.0, %v1954
  %v1956 = vrcp.pop %v1835
  %v1957 = vmul.f32 1.0, %v1956
  %v1958 = vrcp.pop %v1836
  %v1959 = vmul.f32 1.0, %v1958
  %v1960 = vrcp.pop %v1837
  %v1961 = vmul.f32 1.0, %v1960
  %v1962 = vrcp.pop %v1838
  %v1963 = vmul.f32 1.0, %v1962
  %v1964 = vrcp.pop %v1839
  %v1965 = vmul.f32 1.0, %v1964
  %v1966 = vrcp.pop %v1840
  %v1967 = vmul.f32 1.0, %v1966
  %v1968 = vrcp.pop %v1841
  %v1969 = vmul.f32 1.0, %v1968
  %v1970 = vmul.f32 %v1332, %v1843
  %v1971 = vmul.f32 %v1335, %v1845
  %v1972 = vmul.f32 %v1340, %v1847
  %v1973 = vmul.f32 %v1343, %v1849
  %v1974 = vmul.f32 %v1348, %v1851
  %v1975 = vmul.f32 %v1351, %v1853
  %v1976 = vmul.f32 %v1356, %v1855
  %v1977 = vmul.f32 %v1359, %v1857
  %v1978 = vmul.f32 %v1364, %v1859
  %v1979 = vmul.f32 %v1367, %v1861
  %v1980 = vmul.f32 %v1372, %v1863
  %v1981 = vmul.f32 %v1375, %v1865
  %v1982 = vmul.f32 %v1380, %v1867
  %v1983 = vmul.f32 %v1383, %v1869
  %v1984 = vmul.f32 %v1388, %v1871
  %v1985 = vmul.f32 %v1391, %v1873
  %v1986 = vmul.f32 %v1396, %v1875
  %v1987 = vmul.f32 %v1399, %v1877
  %v1988 = vmul.f32 %v1404, %v1879
  %v1989 = vmul.f32 %v1407, %v1881
  %v1990 = vmul.f32 %v1412, %v1883
  %v1991 = vmul.f32 %v1415, %v1885
  %v1992 = vmul.f32 %v1420, %v1887
  %v1993 = vmul.f32 %v1423, %v1889
  %v1994 = vmul.f32 %v1428, %v1891
  %v1995 = vmul.f32 %v1431, %v1893
  %v1996 = vmul.f32 %v1436, %v1895
  %v1997 = vmul.f32 %v1439, %v1897
  %v1998 = vmul.f32 %v1444, %v1899
  %v1999 = vmul.f32 %v1447, %v1901
  %v2000 = vmul.f32 %v1452, %v1903
  %v2001 = vmul.f32 %v1455, %v1905
  %v2002 = vmul.f32 %v1460, %v1907
  %v2003 = vmul.f32 %v1463, %v1909
  %v2004 = vmul.f32 %v1468, %v1911
  %v2005 = vmul.f32 %v1471, %v1913
  %v2006 = vmul.f32 %v1476, %v1915
  %v2007 = vmul.f32 %v1479, %v1917
  %v2008 = vmul.f32 %v1484, %v1919
  %v2009 = vmul.f32 %v1487, %v1921
  %v2010 = vmul.f32 %v1492, %v1923
  %v2011 = vmul.f32 %v1495, %v1925
  %v2012 = vmul.f32 %v1500, %v1927
  %v2013 = vmul.f32 %v1503, %v1929
  %v2014 = vmul.f32 %v1508, %v1931
  %v2015 = vmul.f32 %v1511, %v1933
  %v2016 = vmul.f32 %v1516, %v1935
  %v2017 = vmul.f32 %v1519, %v1937
  %v2018 = vmul.f32 %v1524, %v1939
  %v2019 = vmul.f32 %v1527, %v1941
  %v2020 = vmul.f32 %v1532, %v1943
  %v2021 = vmul.f32 %v1535, %v1945
  %v2022 = vmul.f32 %v1540, %v1947
  %v2023 = vmul.f32 %v1543, %v1949
  %v2024 = vmul.f32 %v1548, %v1951
  %v2025 = vmul.f32 %v1551, %v1953
  %v2026 = vmul.f32 %v1556, %v1955
  %v2027 = vmul.f32 %v1559, %v1957
  %v2028 = vmul.f32 %v1564, %v1959
  %v2029 = vmul.f32 %v1567, %v1961
  %v2030 = vmul.f32 %v1572, %v1963
  %v2031 = vmul.f32 %v1575, %v1965
  %v2032 = vmul.f32 %v1580, %v1967
  %v2033 = vmul.f32 %v1583, %v1969
  %v2034 = vpack.c.bf16 %v1971, %v1970
  %v2035 = vpack.c.bf16 %v1973, %v1972
  %v2036 = vpack.c.bf16 %v1975, %v1974
  %v2037 = vpack.c.bf16 %v1977, %v1976
  %v2038 = vpack.c.bf16 %v1979, %v1978
  %v2039 = vpack.c.bf16 %v1981, %v1980
  %v2040 = vpack.c.bf16 %v1983, %v1982
  %v2041 = vpack.c.bf16 %v1985, %v1984
  %v2042 = vpack.c.bf16 %v1987, %v1986
  %v2043 = vpack.c.bf16 %v1989, %v1988
  %v2044 = vpack.c.bf16 %v1991, %v1990
  %v2045 = vpack.c.bf16 %v1993, %v1992
  %v2046 = vpack.c.bf16 %v1995, %v1994
  %v2047 = vpack.c.bf16 %v1997, %v1996
  %v2048 = vpack.c.bf16 %v1999, %v1998
  %v2049 = vpack.c.bf16 %v2001, %v2000
  %v2050 = vpack.c.bf16 %v2003, %v2002
  %v2051 = vpack.c.bf16 %v2005, %v2004
  %v2052 = vpack.c.bf16 %v2007, %v2006
  %v2053 = vpack.c.bf16 %v2009, %v2008
  %v2054 = vpack.c.bf16 %v2011, %v2010
  %v2055 = vpack.c.bf16 %v2013, %v2012
  %v2056 = vpack.c.bf16 %v2015, %v2014
  %v2057 = vpack.c.bf16 %v2017, %v2016
  %v2058 = vpack.c.bf16 %v2019, %v2018
  %v2059 = vpack.c.bf16 %v2021, %v2020
  %v2060 = vpack.c.bf16 %v2023, %v2022
  %v2061 = vpack.c.bf16 %v2025, %v2024
  %v2062 = vpack.c.bf16 %v2027, %v2026
  %v2063 = vpack.c.bf16 %v2029, %v2028
  %v2064 = vpack.c.bf16 %v2031, %v2030
  %v2065 = vpack.c.bf16 %v2033, %v2032
  %v2098 = vunpack.c.l.b16 %v2034
  %v2099 = vunpack.c.h.b16 %v2034
  %v2100 = vunpack.c.l.b16 %v2035
  %v2101 = vunpack.c.h.b16 %v2035
  %v2102 = vunpack.c.l.b16 %v2036
  %v2103 = vunpack.c.h.b16 %v2036
  %v2104 = vunpack.c.l.b16 %v2037
  %v2105 = vunpack.c.h.b16 %v2037
  %v2106 = vunpack.c.l.b16 %v2038
  %v2107 = vunpack.c.h.b16 %v2038
  %v2108 = vunpack.c.l.b16 %v2039
  %v2109 = vunpack.c.h.b16 %v2039
  %v2110 = vunpack.c.l.b16 %v2040
  %v2111 = vunpack.c.h.b16 %v2040
  %v2112 = vunpack.c.l.b16 %v2041
  %v2113 = vunpack.c.h.b16 %v2041
  %v2114 = vunpack.c.l.b16 %v2042
  %v2115 = vunpack.c.h.b16 %v2042
  %v2116 = vunpack.c.l.b16 %v2043
  %v2117 = vunpack.c.h.b16 %v2043
  %v2118 = vunpack.c.l.b16 %v2044
  %v2119 = vunpack.c.h.b16 %v2044
  %v2120 = vunpack.c.l.b16 %v2045
  %v2121 = vunpack.c.h.b16 %v2045
  %v2122 = vunpack.c.l.b16 %v2046
  %v2123 = vunpack.c.h.b16 %v2046
  %v2124 = vunpack.c.l.b16 %v2047
  %v2125 = vunpack.c.h.b16 %v2047
  %v2126 = vunpack.c.l.b16 %v2048
  %v2127 = vunpack.c.h.b16 %v2048
  %v2128 = vunpack.c.l.b16 %v2049
  %v2129 = vunpack.c.h.b16 %v2049
  %v2130 = vunpack.c.l.b16 %v2050
  %v2131 = vunpack.c.h.b16 %v2050
  %v2132 = vunpack.c.l.b16 %v2051
  %v2133 = vunpack.c.h.b16 %v2051
  %v2134 = vunpack.c.l.b16 %v2052
  %v2135 = vunpack.c.h.b16 %v2052
  %v2136 = vunpack.c.l.b16 %v2053
  %v2137 = vunpack.c.h.b16 %v2053
  %v2138 = vunpack.c.l.b16 %v2054
  %v2139 = vunpack.c.h.b16 %v2054
  %v2140 = vunpack.c.l.b16 %v2055
  %v2141 = vunpack.c.h.b16 %v2055
  %v2142 = vunpack.c.l.b16 %v2056
  %v2143 = vunpack.c.h.b16 %v2056
  %v2144 = vunpack.c.l.b16 %v2057
  %v2145 = vunpack.c.h.b16 %v2057
  %v2146 = vunpack.c.l.b16 %v2058
  %v2147 = vunpack.c.h.b16 %v2058
  %v2148 = vunpack.c.l.b16 %v2059
  %v2149 = vunpack.c.h.b16 %v2059
  %v2150 = vunpack.c.l.b16 %v2060
  %v2151 = vunpack.c.h.b16 %v2060
  %v2152 = vunpack.c.l.b16 %v2061
  %v2153 = vunpack.c.h.b16 %v2061
  %v2154 = vunpack.c.l.b16 %v2062
  %v2155 = vunpack.c.h.b16 %v2062
  %v2156 = vunpack.c.l.b16 %v2063
  %v2157 = vunpack.c.h.b16 %v2063
  %v2158 = vunpack.c.l.b16 %v2064
  %v2159 = vunpack.c.h.b16 %v2064
  %v2160 = vunpack.c.l.b16 %v2065
  %v2161 = vunpack.c.h.b16 %v2065
  %v2162 = vpack.c.b16 %v2098, %v2098
  %v2163 = vpack.c.b16 %v2099, %v2099
  %v2164 = vpack.c.b16 %v2100, %v2100
  %v2165 = vpack.c.b16 %v2101, %v2101
  %v2166 = vpack.c.b16 %v2102, %v2102
  %v2167 = vpack.c.b16 %v2103, %v2103
  %v2168 = vpack.c.b16 %v2104, %v2104
  %v2169 = vpack.c.b16 %v2105, %v2105
  %v2170 = vpack.c.b16 %v2106, %v2106
  %v2171 = vpack.c.b16 %v2107, %v2107
  %v2172 = vpack.c.b16 %v2108, %v2108
  %v2173 = vpack.c.b16 %v2109, %v2109
  %v2174 = vpack.c.b16 %v2110, %v2110
  %v2175 = vpack.c.b16 %v2111, %v2111
  %v2176 = vpack.c.b16 %v2112, %v2112
  %v2177 = vpack.c.b16 %v2113, %v2113
  %v2178 = vpack.c.b16 %v2114, %v2114
  %v2179 = vpack.c.b16 %v2115, %v2115
  %v2180 = vpack.c.b16 %v2116, %v2116
  %v2181 = vpack.c.b16 %v2117, %v2117
  %v2182 = vpack.c.b16 %v2118, %v2118
  %v2183 = vpack.c.b16 %v2119, %v2119
  %v2184 = vpack.c.b16 %v2120, %v2120
  %v2185 = vpack.c.b16 %v2121, %v2121
  %v2186 = vpack.c.b16 %v2122, %v2122
  %v2187 = vpack.c.b16 %v2123, %v2123
  %v2188 = vpack.c.b16 %v2124, %v2124
  %v2189 = vpack.c.b16 %v2125, %v2125
  %v2190 = vpack.c.b16 %v2126, %v2126
  %v2191 = vpack.c.b16 %v2127, %v2127
  %v2192 = vpack.c.b16 %v2128, %v2128
  %v2193 = vpack.c.b16 %v2129, %v2129
  %v2194 = vpack.c.b16 %v2130, %v2130
  %v2195 = vpack.c.b16 %v2131, %v2131
  %v2196 = vpack.c.b16 %v2132, %v2132
  %v2197 = vpack.c.b16 %v2133, %v2133
  %v2198 = vpack.c.b16 %v2134, %v2134
  %v2199 = vpack.c.b16 %v2135, %v2135
  %v2200 = vpack.c.b16 %v2136, %v2136
  %v2201 = vpack.c.b16 %v2137, %v2137
  %v2202 = vpack.c.b16 %v2138, %v2138
  %v2203 = vpack.c.b16 %v2139, %v2139
  %v2204 = vpack.c.b16 %v2140, %v2140
  %v2205 = vpack.c.b16 %v2141, %v2141
  %v2206 = vpack.c.b16 %v2142, %v2142
  %v2207 = vpack.c.b16 %v2143, %v2143
  %v2208 = vpack.c.b16 %v2144, %v2144
  %v2209 = vpack.c.b16 %v2145, %v2145
  %v2210 = vpack.c.b16 %v2146, %v2146
  %v2211 = vpack.c.b16 %v2147, %v2147
  %v2212 = vpack.c.b16 %v2148, %v2148
  %v2213 = vpack.c.b16 %v2149, %v2149
  %v2214 = vpack.c.b16 %v2150, %v2150
  %v2215 = vpack.c.b16 %v2151, %v2151
  %v2216 = vpack.c.b16 %v2152, %v2152
  %v2217 = vpack.c.b16 %v2153, %v2153
  %v2218 = vpack.c.b16 %v2154, %v2154
  %v2219 = vpack.c.b16 %v2155, %v2155
  %v2220 = vpack.c.b16 %v2156, %v2156
  %v2221 = vpack.c.b16 %v2157, %v2157
  %v2222 = vpack.c.b16 %v2158, %v2158
  %v2223 = vpack.c.b16 %v2159, %v2159
  %v2224 = vpack.c.b16 %v2160, %v2160
  %v2225 = vpack.c.b16 %v2161, %v2161
  %2290 = vst.msk [vmem:[%s6] sm:$0xf] %vm1222, %v2162
  %2291 = vst.msk [vmem:[%s6 + $0x4] sm:$0xf] %vm1222, %v2163
  %2292 = vst.msk [vmem:[%s6 + $0x8] sm:$0xf] %vm1222, %v2164
  %2293 = vst.msk [vmem:[%s6 + $0xc] sm:$0xf] %vm1222, %v2165
  %2294 = vst.msk [vmem:[%s6 + $0x10] sm:$0xf] %vm1222, %v2166
  %2295 = vst.msk [vmem:[%s6 + $0x14] sm:$0xf] %vm1222, %v2167
  %2296 = vst.msk [vmem:[%s6 + $0x18] sm:$0xf] %vm1222, %v2168
  %2297 = vst.msk [vmem:[%s6 + $0x1c] sm:$0xf] %vm1222, %v2169
  %2298 = vst.msk [vmem:[%s6 + $0x20] sm:$0xf] %vm1222, %v2170
  %2299 = vst.msk [vmem:[%s6 + $0x24] sm:$0xf] %vm1222, %v2171
  %2300 = vst.msk [vmem:[%s6 + $0x28] sm:$0xf] %vm1222, %v2172
  %2301 = vst.msk [vmem:[%s6 + $0x2c] sm:$0xf] %vm1222, %v2173
  %2302 = vst.msk [vmem:[%s6 + $0x30] sm:$0xf] %vm1222, %v2174
  %2303 = vst.msk [vmem:[%s6 + $0x34] sm:$0xf] %vm1222, %v2175
  %2304 = vst.msk [vmem:[%s6 + $0x38] sm:$0xf] %vm1222, %v2176
  %2305 = vst.msk [vmem:[%s6 + $0x3c] sm:$0xf] %vm1222, %v2177
  %2306 = vst.msk [vmem:[%s6 + $0x40] sm:$0xf] %vm1222, %v2178
  %2307 = vst.msk [vmem:[%s6 + $0x44] sm:$0xf] %vm1222, %v2179
  %2308 = vst.msk [vmem:[%s6 + $0x48] sm:$0xf] %vm1222, %v2180
  %2309 = vst.msk [vmem:[%s6 + $0x4c] sm:$0xf] %vm1222, %v2181
  %2310 = vst.msk [vmem:[%s6 + $0x50] sm:$0xf] %vm1222, %v2182
  %2311 = vst.msk [vmem:[%s6 + $0x54] sm:$0xf] %vm1222, %v2183
  %2312 = vst.msk [vmem:[%s6 + $0x58] sm:$0xf] %vm1222, %v2184
  %2313 = vst.msk [vmem:[%s6 + $0x5c] sm:$0xf] %vm1222, %v2185
  %2314 = vst.msk [vmem:[%s6 + $0x60] sm:$0xf] %vm1222, %v2186
  %2315 = vst.msk [vmem:[%s6 + $0x64] sm:$0xf] %vm1222, %v2187
  %2316 = vst.msk [vmem:[%s6 + $0x68] sm:$0xf] %vm1222, %v2188
  %2317 = vst.msk [vmem:[%s6 + $0x6c] sm:$0xf] %vm1222, %v2189
  %2318 = vst.msk [vmem:[%s6 + $0x70] sm:$0xf] %vm1222, %v2190
  %2319 = vst.msk [vmem:[%s6 + $0x74] sm:$0xf] %vm1222, %v2191
  %2320 = vst.msk [vmem:[%s6 + $0x78] sm:$0xf] %vm1222, %v2192
  %2321 = vst.msk [vmem:[%s6 + $0x7c] sm:$0xf] %vm1222, %v2193
  %2322 = vst.msk [vmem:[%s6 + $0x80] sm:$0xf] %vm1222, %v2194
  %2323 = vst.msk [vmem:[%s6 + $0x84] sm:$0xf] %vm1222, %v2195
  %2324 = vst.msk [vmem:[%s6 + $0x88] sm:$0xf] %vm1222, %v2196
  %2325 = vst.msk [vmem:[%s6 + $0x8c] sm:$0xf] %vm1222, %v2197
  %2326 = vst.msk [vmem:[%s6 + $0x90] sm:$0xf] %vm1222, %v2198
  %2327 = vst.msk [vmem:[%s6 + $0x94] sm:$0xf] %vm1222, %v2199
  %2328 = vst.msk [vmem:[%s6 + $0x98] sm:$0xf] %vm1222, %v2200
  %2329 = vst.msk [vmem:[%s6 + $0x9c] sm:$0xf] %vm1222, %v2201
  %2330 = vst.msk [vmem:[%s6 + $0xa0] sm:$0xf] %vm1222, %v2202
  %2331 = vst.msk [vmem:[%s6 + $0xa4] sm:$0xf] %vm1222, %v2203
  %2332 = vst.msk [vmem:[%s6 + $0xa8] sm:$0xf] %vm1222, %v2204
  %2333 = vst.msk [vmem:[%s6 + $0xac] sm:$0xf] %vm1222, %v2205
  %2334 = vst.msk [vmem:[%s6 + $0xb0] sm:$0xf] %vm1222, %v2206
  %2335 = vst.msk [vmem:[%s6 + $0xb4] sm:$0xf] %vm1222, %v2207
  %2336 = vst.msk [vmem:[%s6 + $0xb8] sm:$0xf] %vm1222, %v2208
  %2337 = vst.msk [vmem:[%s6 + $0xbc] sm:$0xf] %vm1222, %v2209
  %2338 = vst.msk [vmem:[%s6 + $0xc0] sm:$0xf] %vm1222, %v2210
  %2339 = vst.msk [vmem:[%s6 + $0xc4] sm:$0xf] %vm1222, %v2211
  %2340 = vst.msk [vmem:[%s6 + $0xc8] sm:$0xf] %vm1222, %v2212
  %2341 = vst.msk [vmem:[%s6 + $0xcc] sm:$0xf] %vm1222, %v2213
  %2342 = vst.msk [vmem:[%s6 + $0xd0] sm:$0xf] %vm1222, %v2214
  %2343 = vst.msk [vmem:[%s6 + $0xd4] sm:$0xf] %vm1222, %v2215
  %2344 = vst.msk [vmem:[%s6 + $0xd8] sm:$0xf] %vm1222, %v2216
  %2345 = vst.msk [vmem:[%s6 + $0xdc] sm:$0xf] %vm1222, %v2217
  %2346 = vst.msk [vmem:[%s6 + $0xe0] sm:$0xf] %vm1222, %v2218
  %2347 = vst.msk [vmem:[%s6 + $0xe4] sm:$0xf] %vm1222, %v2219
  %2348 = vst.msk [vmem:[%s6 + $0xe8] sm:$0xf] %vm1222, %v2220
  %2349 = vst.msk [vmem:[%s6 + $0xec] sm:$0xf] %vm1222, %v2221
  %2350 = vst.msk [vmem:[%s6 + $0xf0] sm:$0xf] %vm1222, %v2222
  %2351 = vst.msk [vmem:[%s6 + $0xf4] sm:$0xf] %vm1222, %v2223
  %2352 = vst.msk [vmem:[%s6 + $0xf8] sm:$0xf] %vm1222, %v2224
  %2353 = vst.msk [vmem:[%s6 + $0xfc] sm:$0xf] %vm1222, %v2225
  // Predicated region
  $region22: #{_lambda_.3} parent=0 // pred_check
    _
  $region23: #{_lambda_.3} parent=0 // pred_check_branch
    %2355 = sbr.rel (0) target = $region25
  $region24: #{_lambda_.3} parent=0 // pred_region
    _
  $region25: #{_lambda_.3} parent=0 // pred_fallthru
    _
  // Predicated region
  $region26: #{_lambda_.3} parent=0 // pred_check
    _
  $region27: #{_lambda_.3} parent=0 // pred_check_branch
    %2357 = sbr.rel (0) target = $region29
  $region28: #{_lambda_.3} parent=0 // pred_region
    _
  $region29: #{_lambda_.3} parent=0 // pred_fallthru
    _
  // Predicated region
  $region30: #{_lambda_.3} parent=0 // pred_check
    _
  $region31: #{_lambda_.3} parent=0 // pred_check_branch
    %2359 = sbr.rel (0) target = $region33
  $region32: #{_lambda_.3} parent=0 // pred_region
    _
  $region33: #{_lambda_.3} parent=0 // pred_fallthru
    _
  // Predicated region
  $region34: #{_lambda_.3} parent=0 // pred_check
    _
  $region35: #{_lambda_.3} parent=0 // pred_check_branch
    %2361 = sbr.rel (0) target = $region37
  $region36: #{_lambda_.3} parent=0 // pred_region
    _
  $region37: #{_lambda_.3} parent=0 // pred_fallthru
    _

</llo_original>
